<compile_context>
chip_gen: v5e
topology: v5e:2x2
jax: 0.10.0
libtpu: 0.0.40
codegen_flags: <defaults>
</compile_context>

<pallas_src>
import jax
import jax.numpy as jnp
from jax.experimental import pallas as pl
from jax.experimental.pallas import tpu as pltpu

INPUT_SIZE = 28
HIDDEN = 64
NUM_CLASSES = 10


def lstm_last_step_kernel(x_ref, w_xh_ref, w_hh_ref, b_ref, w_out_ref, b_out_ref,
                          o_ref, gx_ref):
    """Whole sequence resident in VMEM; hoisted x-projection; unrolled recurrence.

    x_ref:    (T*B, I) time-major flattened input (row t*B + b), f32
    w_xh_ref: (I, 4H) bf16   (W_ih^T, PyTorch gate order [i, f, g, o])
    w_hh_ref: (H, 4H) bf16   (W_hh^T)
    b_ref:    (1, 4H) f32    (b_ih + b_hh)
    gx_ref:   (T*B, 4H) f32 VMEM scratch holding the hoisted input projection
    """
    TB = x_ref.shape[0]
    B = o_ref.shape[0]
    T = TB // B

    # --- Hoisted, off-chain input projection (one big MXU call) + folded bias. ---
    gx_ref[...] = (
        jnp.dot(x_ref[...].astype(jnp.bfloat16), w_xh_ref[...],
                preferred_element_type=jnp.float32)
        + b_ref[...])

    w_hh = w_hh_ref[...]                      # (H, 4H) bf16, reused every step (8 vregs)

    h = jnp.zeros((B, HIDDEN), jnp.float32)
    c = jnp.zeros((B, HIDDEN), jnp.float32)

    for t in range(T):                        # static, fully unrolled
        # Serial chain per step: one (B,H)@(H,4H) matmul + add + activations.
        gates = gx_ref[pl.ds(t * B, B), :] + jnp.dot(
            h.astype(jnp.bfloat16), w_hh, preferred_element_type=jnp.float32)

        # Whole-block EUP pushes (no masked mid-vreg activation splits).
        sg = jax.nn.sigmoid(gates)            # (B, 4H)
        tg = jnp.tanh(gates)                  # (B, 4H)

        i_g = sg[:, 0 * HIDDEN:1 * HIDDEN]    # PyTorch gate order [i, f, g, o]
        f_g = sg[:, 1 * HIDDEN:2 * HIDDEN]
        g_g = tg[:, 2 * HIDDEN:3 * HIDDEN]
        o_g = sg[:, 3 * HIDDEN:4 * HIDDEN]

        c = f_g * c + i_g * g_g
        h = o_g * jnp.tanh(c)

    # out = Linear(h_T): (B, H) @ (H, 10) + (1, 10)   (tiny, one-time, kept f32)
    o_ref[...] = (jnp.dot(h, w_out_ref[...], preferred_element_type=jnp.float32)
                  + b_out_ref[...]).astype(o_ref.dtype)


def rnn_forward(x, params):
    """x: (B, T, I) float32, batch_first like PyTorch; returns (B, 10) f32 logits."""
    B, T, I = x.shape
    assert I == INPUT_SIZE

    # One-time parameter prep. PyTorch gate order [i, f, g, o] is kept (full-block
    # activations in the kernel make a gate reorder unnecessary). Weights pre-cast
    # to bf16 for single-pass MXU; biases stay f32 (added after f32 accumulation).
    w_xh = params["w_ih"].T.astype(jnp.bfloat16)                       # (I, 4H)
    w_hh = params["w_hh"].T.astype(jnp.bfloat16)                       # (H, 4H)
    b = (params["b_ih"] + params["b_hh"]).reshape(1, 4 * HIDDEN)       # (1, 4H) f32
    w_out = params["w_out"].T                                          # (H, 10)
    b_out = params["b_out"].reshape(1, NUM_CLASSES)                    # (1, 10)

    # Layout plumbing only (one cheap XLA transpose/reshape outside the kernel):
    # time-major (T*B, I) so step t's projection rows are a contiguous (B, 4H) slab.
    x_tm = jnp.transpose(x, (1, 0, 2)).reshape(T * B, I)

    return pl.pallas_call(
        lstm_last_step_kernel,
        out_shape=jax.ShapeDtypeStruct((B, NUM_CLASSES), jnp.float32),
        grid_spec=pltpu.PrefetchScalarGridSpec(
            num_scalar_prefetch=0,
            grid=(1,),
            in_specs=[
                pl.BlockSpec((T * B, I), lambda i: (0, 0)),                # x (time-major)
                pl.BlockSpec((I, 4 * HIDDEN), lambda i: (0, 0)),           # W_ih^T (bf16)
                pl.BlockSpec((HIDDEN, 4 * HIDDEN), lambda i: (0, 0)),      # W_hh^T (bf16)
                pl.BlockSpec((1, 4 * HIDDEN), lambda i: (0, 0)),           # b_ih + b_hh
                pl.BlockSpec((HIDDEN, NUM_CLASSES), lambda i: (0, 0)),     # W_out^T
                pl.BlockSpec((1, NUM_CLASSES), lambda i: (0, 0)),          # b_out
            ],
            out_specs=pl.BlockSpec((B, NUM_CLASSES), lambda i: (0, 0)),
            scratch_shapes=[
                pltpu.VMEM((T * B, 4 * HIDDEN), jnp.float32),              # hoisted x-proj
            ],
        ),
        compiler_params=pltpu.CompilerParams(
            dimension_semantics=("arbitrary",)),
    )(x_tm, w_xh, w_hh, b, w_out, b_out)


def init_params(key):
    """Deterministic init with the same shapes as the PyTorch module."""
    ks = jax.random.split(key, 6)
    bound = 1.0 / jnp.sqrt(HIDDEN)
    u = lambda k, shape: jax.random.uniform(k, shape, jnp.float32, -bound, bound)
    return {
        "w_ih": u(ks[0], (4 * HIDDEN, INPUT_SIZE)),   # weight_ih_l0 (i,f,g,o rows)
        "w_hh": u(ks[1], (4 * HIDDEN, HIDDEN)),       # weight_hh_l0
        "b_ih": u(ks[2], (4 * HIDDEN,)),              # bias_ih_l0
        "b_hh": u(ks[3], (4 * HIDDEN,)),              # bias_hh_l0
        "w_out": u(ks[4], (NUM_CLASSES, HIDDEN)),     # out.weight
        "b_out": u(ks[5], (NUM_CLASSES,)),            # out.bias
    }


def rnn_reference(x, params):
    """Pure-JAX f32 reference (lax.scan LSTM, PyTorch gate order)."""
    B = x.shape[0]
    wih_t, whh_t = params["w_ih"].T, params["w_hh"].T
    b = params["b_ih"] + params["b_hh"]

    def step(carry, x_t):
        h, c = carry
        gates = x_t @ wih_t + h @ whh_t + b
        i_g = jax.nn.sigmoid(gates[:, 0 * HIDDEN:1 * HIDDEN])
        f_g = jax.nn.sigmoid(gates[:, 1 * HIDDEN:2 * HIDDEN])
        g_g = jnp.tanh(gates[:, 2 * HIDDEN:3 * HIDDEN])
        o_g = jax.nn.sigmoid(gates[:, 3 * HIDDEN:4 * HIDDEN])
        c_new = f_g * c + i_g * g_g
        h_new = o_g * jnp.tanh(c_new)
        return (h_new, c_new), None

    h0 = jnp.zeros((B, HIDDEN), jnp.float32)
    c0 = jnp.zeros((B, HIDDEN), jnp.float32)
    (h_T, _), _ = jax.lax.scan(step, (h0, c0), jnp.transpose(x, (1, 0, 2)))
    return h_T @ params["w_out"].T + params["b_out"]


if __name__ == "__main__":
    key = jax.random.PRNGKey(0)
    k_x, k_p = jax.random.split(key)

    # MNIST-style: each image is a sequence of 28 rows of 28 pixels.
    # B=8 fills all 8 vreg sublanes (still a small demo shape).
    B, T, I = 8, 28, 28
    x = jax.random.normal(k_x, (B, T, I), jnp.float32)
    params = init_params(k_p)

    out = rnn_forward(x, params)
    out = jax.block_until_ready(out)

    ref = rnn_reference(x, params)
    assert out.shape == (B, NUM_CLASSES)
    # bf16 matmul inputs (f32 accumulation) vs. the pure-f32 reference: tolerance is
    # widened accordingly; any structural/gate-order bug still produces O(1) errors.
    assert jnp.allclose(out, ref, atol=1e-1, rtol=1e-1), (out, ref)

    print("KERNEL_OK")
</pallas_src>

<mosaic_0001>
module attributes {stable_mosaic.version = 11 : i64} {
  func.func @lstm_last_step_kernel(%arg0: i32, %arg1: memref<224x28xf32, #tpu.memory_space<vmem>>, %arg2: memref<28x256xbf16, #tpu.memory_space<vmem>>, %arg3: memref<64x256xbf16, #tpu.memory_space<vmem>>, %arg4: memref<1x256xf32, #tpu.memory_space<vmem>>, %arg5: memref<64x10xf32, #tpu.memory_space<vmem>>, %arg6: memref<1x10xf32, #tpu.memory_space<vmem>>, %arg7: memref<8x10xf32, #tpu.memory_space<vmem>>, %arg8: memref<224x256xf32, #tpu.memory_space<vmem>>) attributes {dimension_semantics = [#tpu.dimension_semantics<arbitrary>], iteration_bounds = array<i64: 1>, scalar_prefetch = 0 : i64, scratch_operands = 1 : i64, tpu.core_type = #tpu.core_type<tc>, window_params = [{pipeline_mode = #tpu.pipeline_mode<synchronous>, transform_indices = @transform_0, window_bounds = array<i64: 224, 28>}, {pipeline_mode = #tpu.pipeline_mode<synchronous>, transform_indices = @transform_1, window_bounds = array<i64: 28, 256>}, {pipeline_mode = #tpu.pipeline_mode<synchronous>, transform_indices = @transform_2, window_bounds = array<i64: 64, 256>}, {pipeline_mode = #tpu.pipeline_mode<synchronous>, transform_indices = @transform_3, window_bounds = array<i64: 1, 256>}, {pipeline_mode = #tpu.pipeline_mode<synchronous>, transform_indices = @transform_4, window_bounds = array<i64: 64, 10>}, {pipeline_mode = #tpu.pipeline_mode<synchronous>, transform_indices = @transform_5, window_bounds = array<i64: 1, 10>}, {pipeline_mode = #tpu.pipeline_mode<synchronous>, transform_indices = @transform_6, window_bounds = array<i64: 8, 10>}]} {
    %c0 = arith.constant 0 : index
    %c0_0 = arith.constant 0 : index
    %0 = vector.load %arg1[%c0, %c0_0] : memref<224x28xf32, #tpu.memory_space<vmem>>, vector<224x28xf32>
    %1 = arith.truncf %0 : vector<224x28xf32> to vector<224x28xbf16>
    %c0_1 = arith.constant 0 : index
    %c0_2 = arith.constant 0 : index
    %2 = vector.load %arg2[%c0_1, %c0_2] : memref<28x256xbf16, #tpu.memory_space<vmem>>, vector<28x256xbf16>
    %cst = arith.constant dense<0.000000e+00> : vector<224x256xf32>
    %3 = tpu.matmul %1, %2, %cst {dimension_numbers = #tpu.dot_dimension_numbers<[1], [0], [0], [1], [0, 0, 1, 1], [], []>} : vector<224x28xbf16>, vector<28x256xbf16>, vector<224x256xf32> -> vector<224x256xf32>
    %c0_3 = arith.constant 0 : index
    %c0_4 = arith.constant 0 : index
    %4 = vector.load %arg4[%c0_3, %c0_4] : memref<1x256xf32, #tpu.memory_space<vmem>>, vector<1x256xf32>
    %5 = vector.broadcast %4 : vector<1x256xf32> to vector<224x256xf32>
    %6 = arith.addf %3, %5 : vector<224x256xf32>
    %c0_5 = arith.constant 0 : index
    %c0_6 = arith.constant 0 : index
    %7 = vector.load %arg8[%c0_5, %c0_6] : memref<224x256xf32, #tpu.memory_space<vmem>>, vector<224x256xf32>
    tpu.vector_store %arg8[%c0_5, %c0_6], %6 {strides = array<i32>} : memref<224x256xf32, #tpu.memory_space<vmem>>, vector<224x256xf32>,
    %c0_7 = arith.constant 0 : index
    %c0_8 = arith.constant 0 : index
    %8 = vector.load %arg3[%c0_7, %c0_8] : memref<64x256xbf16, #tpu.memory_space<vmem>>, vector<64x256xbf16>
    %cst_9 = arith.constant 0.000000e+00 : f32
    %9 = vector.broadcast %cst_9 : f32 to vector<8x64xf32>
    %cst_10 = arith.constant 0.000000e+00 : f32
    %10 = vector.broadcast %cst_10 : f32 to vector<8x64xf32>
    %c0_11 = arith.constant 0 : index
    %c0_12 = arith.constant 0 : index
    %11 = vector.load %arg8[%c0_11, %c0_12] : memref<224x256xf32, #tpu.memory_space<vmem>>, vector<8x256xf32>
    %12 = arith.truncf %9 : vector<8x64xf32> to vector<8x64xbf16>
    %cst_13 = arith.constant dense<0.000000e+00> : vector<8x256xf32>
    %13 = tpu.matmul %12, %8, %cst_13 {dimension_numbers = #tpu.dot_dimension_numbers<[1], [0], [0], [1], [0, 0, 1, 1], [], []>} : vector<8x64xbf16>, vector<64x256xbf16>, vector<8x256xf32> -> vector<8x256xf32>
    %14 = arith.addf %11, %13 : vector<8x256xf32>
    %15 = arith.negf %14 : vector<8x256xf32>
    %16 = math.exp %15 : vector<8x256xf32>
    %cst_14 = arith.constant 1.000000e+00 : f32
    %17 = vector.broadcast %cst_14 : f32 to vector<8x256xf32>
    %18 = arith.addf %17, %16 : vector<8x256xf32>
    %19 = arith.divf %17, %18 : vector<8x256xf32>
    %20 = math.tanh %14 : vector<8x256xf32>
    %21 = vector.extract_strided_slice %19 {offsets = [0, 0], sizes = [8, 64], strides = [1, 1]} : vector<8x256xf32> to vector<8x64xf32>
    %22 = vector.extract_strided_slice %19 {offsets = [0, 64], sizes = [8, 64], strides = [1, 1]} : vector<8x256xf32> to vector<8x64xf32>
    %23 = vector.extract_strided_slice %20 {offsets = [0, 128], sizes = [8, 64], strides = [1, 1]} : vector<8x256xf32> to vector<8x64xf32>
    %24 = vector.extract_strided_slice %19 {offsets = [0, 192], sizes = [8, 64], strides = [1, 1]} : vector<8x256xf32> to vector<8x64xf32>
    %25 = arith.mulf %22, %10 : vector<8x64xf32>
    %26 = arith.mulf %21, %23 : vector<8x64xf32>
    %27 = arith.addf %25, %26 : vector<8x64xf32>
    %28 = math.tanh %27 : vector<8x64xf32>
    %29 = arith.mulf %24, %28 : vector<8x64xf32>
    %c8 = arith.constant 8 : index
    %c0_15 = arith.constant 0 : index
    %30 = vector.load %arg8[%c8, %c0_15] : memref<224x256xf32, #tpu.memory_space<vmem>>, vector<8x256xf32>
    %31 = arith.truncf %29 : vector<8x64xf32> to vector<8x64xbf16>
    %cst_16 = arith.constant dense<0.000000e+00> : vector<8x256xf32>
    %32 = tpu.matmul %31, %8, %cst_16 {dimension_numbers = #tpu.dot_dimension_numbers<[1], [0], [0], [1], [0, 0, 1, 1], [], []>} : vector<8x64xbf16>, vector<64x256xbf16>, vector<8x256xf32> -> vector<8x256xf32>
    %33 = arith.addf %30, %32 : vector<8x256xf32>
    %34 = arith.negf %33 : vector<8x256xf32>
    %35 = math.exp %34 : vector<8x256xf32>
    %cst_17 = arith.constant 1.000000e+00 : f32
    %36 = vector.broadcast %cst_17 : f32 to vector<8x256xf32>
    %37 = arith.addf %36, %35 : vector<8x256xf32>
    %38 = arith.divf %36, %37 : vector<8x256xf32>
    %39 = math.tanh %33 : vector<8x256xf32>
    %40 = vector.extract_strided_slice %38 {offsets = [0, 0], sizes = [8, 64], strides = [1, 1]} : vector<8x256xf32> to vector<8x64xf32>
    %41 = vector.extract_strided_slice %38 {offsets = [0, 64], sizes = [8, 64], strides = [1, 1]} : vector<8x256xf32> to vector<8x64xf32>
    %42 = vector.extract_strided_slice %39 {offsets = [0, 128], sizes = [8, 64], strides = [1, 1]} : vector<8x256xf32> to vector<8x64xf32>
    %43 = vector.extract_strided_slice %38 {offsets = [0, 192], sizes = [8, 64], strides = [1, 1]} : vector<8x256xf32> to vector<8x64xf32>
    %44 = arith.mulf %41, %27 : vector<8x64xf32>
    %45 = arith.mulf %40, %42 : vector<8x64xf32>
    %46 = arith.addf %44, %45 : vector<8x64xf32>
    %47 = math.tanh %46 : vector<8x64xf32>
    %48 = arith.mulf %43, %47 : vector<8x64xf32>
    %c16 = arith.constant 16 : index
    %c0_18 = arith.constant 0 : index
    %49 = vector.load %arg8[%c16, %c0_18] : memref<224x256xf32, #tpu.memory_space<vmem>>, vector<8x256xf32>
    %50 = arith.truncf %48 : vector<8x64xf32> to vector<8x64xbf16>
    %cst_19 = arith.constant dense<0.000000e+00> : vector<8x256xf32>
    %51 = tpu.matmul %50, %8, %cst_19 {dimension_numbers = #tpu.dot_dimension_numbers<[1], [0], [0], [1], [0, 0, 1, 1], [], []>} : vector<8x64xbf16>, vector<64x256xbf16>, vector<8x256xf32> -> vector<8x256xf32>
    %52 = arith.addf %49, %51 : vector<8x256xf32>
    %53 = arith.negf %52 : vector<8x256xf32>
    %54 = math.exp %53 : vector<8x256xf32>
    %cst_20 = arith.constant 1.000000e+00 : f32
    %55 = vector.broadcast %cst_20 : f32 to vector<8x256xf32>
    %56 = arith.addf %55, %54 : vector<8x256xf32>
    %57 = arith.divf %55, %56 : vector<8x256xf32>
    %58 = math.tanh %52 : vector<8x256xf32>
    %59 = vector.extract_strided_slice %57 {offsets = [0, 0], sizes = [8, 64], strides = [1, 1]} : vector<8x256xf32> to vector<8x64xf32>
    %60 = vector.extract_strided_slice %57 {offsets = [0, 64], sizes = [8, 64], strides = [1, 1]} : vector<8x256xf32> to vector<8x64xf32>
    %61 = vector.extract_strided_slice %58 {offsets = [0, 128], sizes = [8, 64], strides = [1, 1]} : vector<8x256xf32> to vector<8x64xf32>
    %62 = vector.extract_strided_slice %57 {offsets = [0, 192], sizes = [8, 64], strides = [1, 1]} : vector<8x256xf32> to vector<8x64xf32>
    %63 = arith.mulf %60, %46 : vector<8x64xf32>
    %64 = arith.mulf %59, %61 : vector<8x64xf32>
    %65 = arith.addf %63, %64 : vector<8x64xf32>
    %66 = math.tanh %65 : vector<8x64xf32>
    %67 = arith.mulf %62, %66 : vector<8x64xf32>
    %c24 = arith.constant 24 : index
    %c0_21 = arith.constant 0 : index
    %68 = vector.load %arg8[%c24, %c0_21] : memref<224x256xf32, #tpu.memory_space<vmem>>, vector<8x256xf32>
    %69 = arith.truncf %67 : vector<8x64xf32> to vector<8x64xbf16>
    %cst_22 = arith.constant dense<0.000000e+00> : vector<8x256xf32>
    %70 = tpu.matmul %69, %8, %cst_22 {dimension_numbers = #tpu.dot_dimension_numbers<[1], [0], [0], [1], [0, 0, 1, 1], [], []>} : vector<8x64xbf16>, vector<64x256xbf16>, vector<8x256xf32> -> vector<8x256xf32>
    %71 = arith.addf %68, %70 : vector<8x256xf32>
    %72 = arith.negf %71 : vector<8x256xf32>
    %73 = math.exp %72 : vector<8x256xf32>
    %cst_23 = arith.constant 1.000000e+00 : f32
    %74 = vector.broadcast %cst_23 : f32 to vector<8x256xf32>
    %75 = arith.addf %74, %73 : vector<8x256xf32>
    %76 = arith.divf %74, %75 : vector<8x256xf32>
    %77 = math.tanh %71 : vector<8x256xf32>
    %78 = vector.extract_strided_slice %76 {offsets = [0, 0], sizes = [8, 64], strides = [1, 1]} : vector<8x256xf32> to vector<8x64xf32>
    %79 = vector.extract_strided_slice %76 {offsets = [0, 64], sizes = [8, 64], strides = [1, 1]} : vector<8x256xf32> to vector<8x64xf32>
    %80 = vector.extract_strided_slice %77 {offsets = [0, 128], sizes = [8, 64], strides = [1, 1]} : vector<8x256xf32> to vector<8x64xf32>
    %81 = vector.extract_strided_slice %76 {offsets = [0, 192], sizes = [8, 64], strides = [1, 1]} : vector<8x256xf32> to vector<8x64xf32>
    %82 = arith.mulf %79, %65 : vector<8x64xf32>
    %83 = arith.mulf %78, %80 : vector<8x64xf32>
    %84 = arith.addf %82, %83 : vector<8x64xf32>
    %85 = math.tanh %84 : vector<8x64xf32>
    %86 = arith.mulf %81, %85 : vector<8x64xf32>
    %c32 = arith.constant 32 : index
    %c0_24 = arith.constant 0 : index
    %87 = vector.load %arg8[%c32, %c0_24] : memref<224x256xf32, #tpu.memory_space<vmem>>, vector<8x256xf32>
    %88 = arith.truncf %86 : vector<8x64xf32> to vector<8x64xbf16>
    %cst_25 = arith.constant dense<0.000000e+00> : vector<8x256xf32>
    %89 = tpu.matmul %88, %8, %cst_25 {dimension_numbers = #tpu.dot_dimension_numbers<[1], [0], [0], [1], [0, 0, 1, 1], [], []>} : vector<8x64xbf16>, vector<64x256xbf16>, vector<8x256xf32> -> vector<8x256xf32>
    %90 = arith.addf %87, %89 : vector<8x256xf32>
    %91 = arith.negf %90 : vector<8x256xf32>
    %92 = math.exp %91 : vector<8x256xf32>
    %cst_26 = arith.constant 1.000000e+00 : f32
    %93 = vector.broadcast %cst_26 : f32 to vector<8x256xf32>
    %94 = arith.addf %93, %92 : vector<8x256xf32>
    %95 = arith.divf %93, %94 : vector<8x256xf32>
    %96 = math.tanh %90 : vector<8x256xf32>
    %97 = vector.extract_strided_slice %95 {offsets = [0, 0], sizes = [8, 64], strides = [1, 1]} : vector<8x256xf32> to vector<8x64xf32>
    %98 = vector.extract_strided_slice %95 {offsets = [0, 64], sizes = [8, 64], strides = [1, 1]} : vector<8x256xf32> to vector<8x64xf32>
    %99 = vector.extract_strided_slice %96 {offsets = [0, 128], sizes = [8, 64], strides = [1, 1]} : vector<8x256xf32> to vector<8x64xf32>
    %100 = vector.extract_strided_slice %95 {offsets = [0, 192], sizes = [8, 64], strides = [1, 1]} : vector<8x256xf32> to vector<8x64xf32>
    %101 = arith.mulf %98, %84 : vector<8x64xf32>
    %102 = arith.mulf %97, %99 : vector<8x64xf32>
    %103 = arith.addf %101, %102 : vector<8x64xf32>
    %104 = math.tanh %103 : vector<8x64xf32>
    %105 = arith.mulf %100, %104 : vector<8x64xf32>
    %c40 = arith.constant 40 : index
    %c0_27 = arith.constant 0 : index
    %106 = vector.load %arg8[%c40, %c0_27] : memref<224x256xf32, #tpu.memory_space<vmem>>, vector<8x256xf32>
    %107 = arith.truncf %105 : vector<8x64xf32> to vector<8x64xbf16>
    %cst_28 = arith.constant dense<0.000000e+00> : vector<8x256xf32>
    %108 = tpu.matmul %107, %8, %cst_28 {dimension_numbers = #tpu.dot_dimension_numbers<[1], [0], [0], [1], [0, 0, 1, 1], [], []>} : vector<8x64xbf16>, vector<64x256xbf16>, vector<8x256xf32> -> vector<8x256xf32>
    %109 = arith.addf %106, %108 : vector<8x256xf32>
    %110 = arith.negf %109 : vector<8x256xf32>
    %111 = math.exp %110 : vector<8x256xf32>
    %cst_29 = arith.constant 1.000000e+00 : f32
    %112 = vector.broadcast %cst_29 : f32 to vector<8x256xf32>
    %113 = arith.addf %112, %111 : vector<8x256xf32>
    %114 = arith.divf %112, %113 : vector<8x256xf32>
    %115 = math.tanh %109 : vector<8x256xf32>
    %116 = vector.extract_strided_slice %114 {offsets = [0, 0], sizes = [8, 64], strides = [1, 1]} : vector<8x256xf32> to vector<8x64xf32>
    %117 = vector.extract_strided_slice %114 {offsets = [0, 64], sizes = [8, 64], strides = [1, 1]} : vector<8x256xf32> to vector<8x64xf32>
    %118 = vector.extract_strided_slice %115 {offsets = [0, 128], sizes = [8, 64], strides = [1, 1]} : vector<8x256xf32> to vector<8x64xf32>
    %119 = vector.extract_strided_slice %114 {offsets = [0, 192], sizes = [8, 64], strides = [1, 1]} : vector<8x256xf32> to vector<8x64xf32>
    %120 = arith.mulf %117, %103 : vector<8x64xf32>
    %121 = arith.mulf %116, %118 : vector<8x64xf32>
    %122 = arith.addf %120, %121 : vector<8x64xf32>
    %123 = math.tanh %122 : vector<8x64xf32>
    %124 = arith.mulf %119, %123 : vector<8x64xf32>
    %c48 = arith.constant 48 : index
    %c0_30 = arith.constant 0 : index
    %125 = vector.load %arg8[%c48, %c0_30] : memref<224x256xf32, #tpu.memory_space<vmem>>, vector<8x256xf32>
    %126 = arith.truncf %124 : vector<8x64xf32> to vector<8x64xbf16>
    %cst_31 = arith.constant dense<0.000000e+00> : vector<8x256xf32>
    %127 = tpu.matmul %126, %8, %cst_31 {dimension_numbers = #tpu.dot_dimension_numbers<[1], [0], [0], [1], [0, 0, 1, 1], [], []>} : vector<8x64xbf16>, vector<64x256xbf16>, vector<8x256xf32> -> vector<8x256xf32>
    %128 = arith.addf %125, %127 : vector<8x256xf32>
    %129 = arith.negf %128 : vector<8x256xf32>
    %130 = math.exp %129 : vector<8x256xf32>
    %cst_32 = arith.constant 1.000000e+00 : f32
    %131 = vector.broadcast %cst_32 : f32 to vector<8x256xf32>
    %132 = arith.addf %131, %130 : vector<8x256xf32>
    %133 = arith.divf %131, %132 : vector<8x256xf32>
    %134 = math.tanh %128 : vector<8x256xf32>
    %135 = vector.extract_strided_slice %133 {offsets = [0, 0], sizes = [8, 64], strides = [1, 1]} : vector<8x256xf32> to vector<8x64xf32>
    %136 = vector.extract_strided_slice %133 {offsets = [0, 64], sizes = [8, 64], strides = [1, 1]} : vector<8x256xf32> to vector<8x64xf32>
    %137 = vector.extract_strided_slice %134 {offsets = [0, 128], sizes = [8, 64], strides = [1, 1]} : vector<8x256xf32> to vector<8x64xf32>
    %138 = vector.extract_strided_slice %133 {offsets = [0, 192], sizes = [8, 64], strides = [1, 1]} : vector<8x256xf32> to vector<8x64xf32>
    %139 = arith.mulf %136, %122 : vector<8x64xf32>
    %140 = arith.mulf %135, %137 : vector<8x64xf32>
    %141 = arith.addf %139, %140 : vector<8x64xf32>
    %142 = math.tanh %141 : vector<8x64xf32>
    %143 = arith.mulf %138, %142 : vector<8x64xf32>
    %c56 = arith.constant 56 : index
    %c0_33 = arith.constant 0 : index
    %144 = vector.load %arg8[%c56, %c0_33] : memref<224x256xf32, #tpu.memory_space<vmem>>, vector<8x256xf32>
    %145 = arith.truncf %143 : vector<8x64xf32> to vector<8x64xbf16>
    %cst_34 = arith.constant dense<0.000000e+00> : vector<8x256xf32>
    %146 = tpu.matmul %145, %8, %cst_34 {dimension_numbers = #tpu.dot_dimension_numbers<[1], [0], [0], [1], [0, 0, 1, 1], [], []>} : vector<8x64xbf16>, vector<64x256xbf16>, vector<8x256xf32> -> vector<8x256xf32>
    %147 = arith.addf %144, %146 : vector<8x256xf32>
    %148 = arith.negf %147 : vector<8x256xf32>
    %149 = math.exp %148 : vector<8x256xf32>
    %cst_35 = arith.constant 1.000000e+00 : f32
    %150 = vector.broadcast %cst_35 : f32 to vector<8x256xf32>
    %151 = arith.addf %150, %149 : vector<8x256xf32>
    %152 = arith.divf %150, %151 : vector<8x256xf32>
    %153 = math.tanh %147 : vector<8x256xf32>
    %154 = vector.extract_strided_slice %152 {offsets = [0, 0], sizes = [8, 64], strides = [1, 1]} : vector<8x256xf32> to vector<8x64xf32>
    %155 = vector.extract_strided_slice %152 {offsets = [0, 64], sizes = [8, 64], strides = [1, 1]} : vector<8x256xf32> to vector<8x64xf32>
    %156 = vector.extract_strided_slice %153 {offsets = [0, 128], sizes = [8, 64], strides = [1, 1]} : vector<8x256xf32> to vector<8x64xf32>
    %157 = vector.extract_strided_slice %152 {offsets = [0, 192], sizes = [8, 64], strides = [1, 1]} : vector<8x256xf32> to vector<8x64xf32>
    %158 = arith.mulf %155, %141 : vector<8x64xf32>
    %159 = arith.mulf %154, %156 : vector<8x64xf32>
    %160 = arith.addf %158, %159 : vector<8x64xf32>
    %161 = math.tanh %160 : vector<8x64xf32>
    %162 = arith.mulf %157, %161 : vector<8x64xf32>
    %c64 = arith.constant 64 : index
    %c0_36 = arith.constant 0 : index
    %163 = vector.load %arg8[%c64, %c0_36] : memref<224x256xf32, #tpu.memory_space<vmem>>, vector<8x256xf32>
    %164 = arith.truncf %162 : vector<8x64xf32> to vector<8x64xbf16>
    %cst_37 = arith.constant dense<0.000000e+00> : vector<8x256xf32>
    %165 = tpu.matmul %164, %8, %cst_37 {dimension_numbers = #tpu.dot_dimension_numbers<[1], [0], [0], [1], [0, 0, 1, 1], [], []>} : vector<8x64xbf16>, vector<64x256xbf16>, vector<8x256xf32> -> vector<8x256xf32>
    %166 = arith.addf %163, %165 : vector<8x256xf32>
    %167 = arith.negf %166 : vector<8x256xf32>
    %168 = math.exp %167 : vector<8x256xf32>
    %cst_38 = arith.constant 1.000000e+00 : f32
    %169 = vector.broadcast %cst_38 : f32 to vector<8x256xf32>
    %170 = arith.addf %169, %168 : vector<8x256xf32>
    %171 = arith.divf %169, %170 : vector<8x256xf32>
    %172 = math.tanh %166 : vector<8x256xf32>
    %173 = vector.extract_strided_slice %171 {offsets = [0, 0], sizes = [8, 64], strides = [1, 1]} : vector<8x256xf32> to vector<8x64xf32>
    %174 = vector.extract_strided_slice %171 {offsets = [0, 64], sizes = [8, 64], strides = [1, 1]} : vector<8x256xf32> to vector<8x64xf32>
    %175 = vector.extract_strided_slice %172 {offsets = [0, 128], sizes = [8, 64], strides = [1, 1]} : vector<8x256xf32> to vector<8x64xf32>
    %176 = vector.extract_strided_slice %171 {offsets = [0, 192], sizes = [8, 64], strides = [1, 1]} : vector<8x256xf32> to vector<8x64xf32>
    %177 = arith.mulf %174, %160 : vector<8x64xf32>
    %178 = arith.mulf %173, %175 : vector<8x64xf32>
    %179 = arith.addf %177, %178 : vector<8x64xf32>
    %180 = math.tanh %179 : vector<8x64xf32>
    %181 = arith.mulf %176, %180 : vector<8x64xf32>
    %c72 = arith.constant 72 : index
    %c0_39 = arith.constant 0 : index
    %182 = vector.load %arg8[%c72, %c0_39] : memref<224x256xf32, #tpu.memory_space<vmem>>, vector<8x256xf32>
    %183 = arith.truncf %181 : vector<8x64xf32> to vector<8x64xbf16>
    %cst_40 = arith.constant dense<0.000000e+00> : vector<8x256xf32>
    %184 = tpu.matmul %183, %8, %cst_40 {dimension_numbers = #tpu.dot_dimension_numbers<[1], [0], [0], [1], [0, 0, 1, 1], [], []>} : vector<8x64xbf16>, vector<64x256xbf16>, vector<8x256xf32> -> vector<8x256xf32>
    %185 = arith.addf %182, %184 : vector<8x256xf32>
    %186 = arith.negf %185 : vector<8x256xf32>
    %187 = math.exp %186 : vector<8x256xf32>
    %cst_41 = arith.constant 1.000000e+00 : f32
    %188 = vector.broadcast %cst_41 : f32 to vector<8x256xf32>
    %189 = arith.addf %188, %187 : vector<8x256xf32>
    %190 = arith.divf %188, %189 : vector<8x256xf32>
    %191 = math.tanh %185 : vector<8x256xf32>
    %192 = vector.extract_strided_slice %190 {offsets = [0, 0], sizes = [8, 64], strides = [1, 1]} : vector<8x256xf32> to vector<8x64xf32>
    %193 = vector.extract_strided_slice %190 {offsets = [0, 64], sizes = [8, 64], strides = [1, 1]} : vector<8x256xf32> to vector<8x64xf32>
    %194 = vector.extract_strided_slice %191 {offsets = [0, 128], sizes = [8, 64], strides = [1, 1]} : vector<8x256xf32> to vector<8x64xf32>
    %195 = vector.extract_strided_slice %190 {offsets = [0, 192], sizes = [8, 64], strides = [1, 1]} : vector<8x256xf32> to vector<8x64xf32>
    %196 = arith.mulf %193, %179 : vector<8x64xf32>
    %197 = arith.mulf %192, %194 : vector<8x64xf32>
    %198 = arith.addf %196, %197 : vector<8x64xf32>
    %199 = math.tanh %198 : vector<8x64xf32>
    %200 = arith.mulf %195, %199 : vector<8x64xf32>
    %c80 = arith.constant 80 : index
    %c0_42 = arith.constant 0 : index
    %201 = vector.load %arg8[%c80, %c0_42] : memref<224x256xf32, #tpu.memory_space<vmem>>, vector<8x256xf32>
    %202 = arith.truncf %200 : vector<8x64xf32> to vector<8x64xbf16>
    %cst_43 = arith.constant dense<0.000000e+00> : vector<8x256xf32>
    %203 = tpu.matmul %202, %8, %cst_43 {dimension_numbers = #tpu.dot_dimension_numbers<[1], [0], [0], [1], [0, 0, 1, 1], [], []>} : vector<8x64xbf16>, vector<64x256xbf16>, vector<8x256xf32> -> vector<8x256xf32>
    %204 = arith.addf %201, %203 : vector<8x256xf32>
    %205 = arith.negf %204 : vector<8x256xf32>
    %206 = math.exp %205 : vector<8x256xf32>
    %cst_44 = arith.constant 1.000000e+00 : f32
    %207 = vector.broadcast %cst_44 : f32 to vector<8x256xf32>
    %208 = arith.addf %207, %206 : vector<8x256xf32>
    %209 = arith.divf %207, %208 : vector<8x256xf32>
    %210 = math.tanh %204 : vector<8x256xf32>
    %211 = vector.extract_strided_slice %209 {offsets = [0, 0], sizes = [8, 64], strides = [1, 1]} : vector<8x256xf32> to vector<8x64xf32>
    %212 = vector.extract_strided_slice %209 {offsets = [0, 64], sizes = [8, 64], strides = [1, 1]} : vector<8x256xf32> to vector<8x64xf32>
    %213 = vector.extract_strided_slice %210 {offsets = [0, 128], sizes = [8, 64], strides = [1, 1]} : vector<8x256xf32> to vector<8x64xf32>
    %214 = vector.extract_strided_slice %209 {offsets = [0, 192], sizes = [8, 64], strides = [1, 1]} : vector<8x256xf32> to vector<8x64xf32>
    %215 = arith.mulf %212, %198 : vector<8x64xf32>
    %216 = arith.mulf %211, %213 : vector<8x64xf32>
    %217 = arith.addf %215, %216 : vector<8x64xf32>
    %218 = math.tanh %217 : vector<8x64xf32>
    %219 = arith.mulf %214, %218 : vector<8x64xf32>
    %c88 = arith.constant 88 : index
    %c0_45 = arith.constant 0 : index
    %220 = vector.load %arg8[%c88, %c0_45] : memref<224x256xf32, #tpu.memory_space<vmem>>, vector<8x256xf32>
    %221 = arith.truncf %219 : vector<8x64xf32> to vector<8x64xbf16>
    %cst_46 = arith.constant dense<0.000000e+00> : vector<8x256xf32>
    %222 = tpu.matmul %221, %8, %cst_46 {dimension_numbers = #tpu.dot_dimension_numbers<[1], [0], [0], [1], [0, 0, 1, 1], [], []>} : vector<8x64xbf16>, vector<64x256xbf16>, vector<8x256xf32> -> vector<8x256xf32>
    %223 = arith.addf %220, %222 : vector<8x256xf32>
    %224 = arith.negf %223 : vector<8x256xf32>
    %225 = math.exp %224 : vector<8x256xf32>
    %cst_47 = arith.constant 1.000000e+00 : f32
    %226 = vector.broadcast %cst_47 : f32 to vector<8x256xf32>
    %227 = arith.addf %226, %225 : vector<8x256xf32>
    %228 = arith.divf %226, %227 : vector<8x256xf32>
    %229 = math.tanh %223 : vector<8x256xf32>
    %230 = vector.extract_strided_slice %228 {offsets = [0, 0], sizes = [8, 64], strides = [1, 1]} : vector<8x256xf32> to vector<8x64xf32>
    %231 = vector.extract_strided_slice %228 {offsets = [0, 64], sizes = [8, 64], strides = [1, 1]} : vector<8x256xf32> to vector<8x64xf32>
    %232 = vector.extract_strided_slice %229 {offsets = [0, 128], sizes = [8, 64], strides = [1, 1]} : vector<8x256xf32> to vector<8x64xf32>
    %233 = vector.extract_strided_slice %228 {offsets = [0, 192], sizes = [8, 64], strides = [1, 1]} : vector<8x256xf32> to vector<8x64xf32>
    %234 = arith.mulf %231, %217 : vector<8x64xf32>
    %235 = arith.mulf %230, %232 : vector<8x64xf32>
    %236 = arith.addf %234, %235 : vector<8x64xf32>
    %237 = math.tanh %236 : vector<8x64xf32>
    %238 = arith.mulf %233, %237 : vector<8x64xf32>
    %c96 = arith.constant 96 : index
    %c0_48 = arith.constant 0 : index
    %239 = vector.load %arg8[%c96, %c0_48] : memref<224x256xf32, #tpu.memory_space<vmem>>, vector<8x256xf32>
    %240 = arith.truncf %238 : vector<8x64xf32> to vector<8x64xbf16>
    %cst_49 = arith.constant dense<0.000000e+00> : vector<8x256xf32>
    %241 = tpu.matmul %240, %8, %cst_49 {dimension_numbers = #tpu.dot_dimension_numbers<[1], [0], [0], [1], [0, 0, 1, 1], [], []>} : vector<8x64xbf16>, vector<64x256xbf16>, vector<8x256xf32> -> vector<8x256xf32>
    %242 = arith.addf %239, %241 : vector<8x256xf32>
    %243 = arith.negf %242 : vector<8x256xf32>
    %244 = math.exp %243 : vector<8x256xf32>
    %cst_50 = arith.constant 1.000000e+00 : f32
    %245 = vector.broadcast %cst_50 : f32 to vector<8x256xf32>
    %246 = arith.addf %245, %244 : vector<8x256xf32>
    %247 = arith.divf %245, %246 : vector<8x256xf32>
    %248 = math.tanh %242 : vector<8x256xf32>
    %249 = vector.extract_strided_slice %247 {offsets = [0, 0], sizes = [8, 64], strides = [1, 1]} : vector<8x256xf32> to vector<8x64xf32>
    %250 = vector.extract_strided_slice %247 {offsets = [0, 64], sizes = [8, 64], strides = [1, 1]} : vector<8x256xf32> to vector<8x64xf32>
    %251 = vector.extract_strided_slice %248 {offsets = [0, 128], sizes = [8, 64], strides = [1, 1]} : vector<8x256xf32> to vector<8x64xf32>
    %252 = vector.extract_strided_slice %247 {offsets = [0, 192], sizes = [8, 64], strides = [1, 1]} : vector<8x256xf32> to vector<8x64xf32>
    %253 = arith.mulf %250, %236 : vector<8x64xf32>
    %254 = arith.mulf %249, %251 : vector<8x64xf32>
    %255 = arith.addf %253, %254 : vector<8x64xf32>
    %256 = math.tanh %255 : vector<8x64xf32>
    %257 = arith.mulf %252, %256 : vector<8x64xf32>
    %c104 = arith.constant 104 : index
    %c0_51 = arith.constant 0 : index
    %258 = vector.load %arg8[%c104, %c0_51] : memref<224x256xf32, #tpu.memory_space<vmem>>, vector<8x256xf32>
    %259 = arith.truncf %257 : vector<8x64xf32> to vector<8x64xbf16>
    %cst_52 = arith.constant dense<0.000000e+00> : vector<8x256xf32>
    %260 = tpu.matmul %259, %8, %cst_52 {dimension_numbers = #tpu.dot_dimension_numbers<[1], [0], [0], [1], [0, 0, 1, 1], [], []>} : vector<8x64xbf16>, vector<64x256xbf16>, vector<8x256xf32> -> vector<8x256xf32>
    %261 = arith.addf %258, %260 : vector<8x256xf32>
    %262 = arith.negf %261 : vector<8x256xf32>
    %263 = math.exp %262 : vector<8x256xf32>
    %cst_53 = arith.constant 1.000000e+00 : f32
    %264 = vector.broadcast %cst_53 : f32 to vector<8x256xf32>
    %265 = arith.addf %264, %263 : vector<8x256xf32>
    %266 = arith.divf %264, %265 : vector<8x256xf32>
    %267 = math.tanh %261 : vector<8x256xf32>
    %268 = vector.extract_strided_slice %266 {offsets = [0, 0], sizes = [8, 64], strides = [1, 1]} : vector<8x256xf32> to vector<8x64xf32>
    %269 = vector.extract_strided_slice %266 {offsets = [0, 64], sizes = [8, 64], strides = [1, 1]} : vector<8x256xf32> to vector<8x64xf32>
    %270 = vector.extract_strided_slice %267 {offsets = [0, 128], sizes = [8, 64], strides = [1, 1]} : vector<8x256xf32> to vector<8x64xf32>
    %271 = vector.extract_strided_slice %266 {offsets = [0, 192], sizes = [8, 64], strides = [1, 1]} : vector<8x256xf32> to vector<8x64xf32>
    %272 = arith.mulf %269, %255 : vector<8x64xf32>
    %273 = arith.mulf %268, %270 : vector<8x64xf32>
    %274 = arith.addf %272, %273 : vector<8x64xf32>
    %275 = math.tanh %274 : vector<8x64xf32>
    %276 = arith.mulf %271, %275 : vector<8x64xf32>
    %c112 = arith.constant 112 : index
    %c0_54 = arith.constant 0 : index
    %277 = vector.load %arg8[%c112, %c0_54] : memref<224x256xf32, #tpu.memory_space<vmem>>, vector<8x256xf32>
    %278 = arith.truncf %276 : vector<8x64xf32> to vector<8x64xbf16>
    %cst_55 = arith.constant dense<0.000000e+00> : vector<8x256xf32>
    %279 = tpu.matmul %278, %8, %cst_55 {dimension_numbers = #tpu.dot_dimension_numbers<[1], [0], [0], [1], [0, 0, 1, 1], [], []>} : vector<8x64xbf16>, vector<64x256xbf16>, vector<8x256xf32> -> vector<8x256xf32>
    %280 = arith.addf %277, %279 : vector<8x256xf32>
    %281 = arith.negf %280 : vector<8x256xf32>
    %282 = math.exp %281 : vector<8x256xf32>
    %cst_56 = arith.constant 1.000000e+00 : f32
    %283 = vector.broadcast %cst_56 : f32 to vector<8x256xf32>
    %284 = arith.addf %283, %282 : vector<8x256xf32>
    %285 = arith.divf %283, %284 : vector<8x256xf32>
    %286 = math.tanh %280 : vector<8x256xf32>
    %287 = vector.extract_strided_slice %285 {offsets = [0, 0], sizes = [8, 64], strides = [1, 1]} : vector<8x256xf32> to vector<8x64xf32>
    %288 = vector.extract_strided_slice %285 {offsets = [0, 64], sizes = [8, 64], strides = [1, 1]} : vector<8x256xf32> to vector<8x64xf32>
    %289 = vector.extract_strided_slice %286 {offsets = [0, 128], sizes = [8, 64], strides = [1, 1]} : vector<8x256xf32> to vector<8x64xf32>
    %290 = vector.extract_strided_slice %285 {offsets = [0, 192], sizes = [8, 64], strides = [1, 1]} : vector<8x256xf32> to vector<8x64xf32>
    %291 = arith.mulf %288, %274 : vector<8x64xf32>
    %292 = arith.mulf %287, %289 : vector<8x64xf32>
    %293 = arith.addf %291, %292 : vector<8x64xf32>
    %294 = math.tanh %293 : vector<8x64xf32>
    %295 = arith.mulf %290, %294 : vector<8x64xf32>
    %c120 = arith.constant 120 : index
    %c0_57 = arith.constant 0 : index
    %296 = vector.load %arg8[%c120, %c0_57] : memref<224x256xf32, #tpu.memory_space<vmem>>, vector<8x256xf32>
    %297 = arith.truncf %295 : vector<8x64xf32> to vector<8x64xbf16>
    %cst_58 = arith.constant dense<0.000000e+00> : vector<8x256xf32>
    %298 = tpu.matmul %297, %8, %cst_58 {dimension_numbers = #tpu.dot_dimension_numbers<[1], [0], [0], [1], [0, 0, 1, 1], [], []>} : vector<8x64xbf16>, vector<64x256xbf16>, vector<8x256xf32> -> vector<8x256xf32>
    %299 = arith.addf %296, %298 : vector<8x256xf32>
    %300 = arith.negf %299 : vector<8x256xf32>
    %301 = math.exp %300 : vector<8x256xf32>
    %cst_59 = arith.constant 1.000000e+00 : f32
    %302 = vector.broadcast %cst_59 : f32 to vector<8x256xf32>
    %303 = arith.addf %302, %301 : vector<8x256xf32>
    %304 = arith.divf %302, %303 : vector<8x256xf32>
    %305 = math.tanh %299 : vector<8x256xf32>
    %306 = vector.extract_strided_slice %304 {offsets = [0, 0], sizes = [8, 64], strides = [1, 1]} : vector<8x256xf32> to vector<8x64xf32>
    %307 = vector.extract_strided_slice %304 {offsets = [0, 64], sizes = [8, 64], strides = [1, 1]} : vector<8x256xf32> to vector<8x64xf32>
    %308 = vector.extract_strided_slice %305 {offsets = [0, 128], sizes = [8, 64], strides = [1, 1]} : vector<8x256xf32> to vector<8x64xf32>
    %309 = vector.extract_strided_slice %304 {offsets = [0, 192], sizes = [8, 64], strides = [1, 1]} : vector<8x256xf32> to vector<8x64xf32>
    %310 = arith.mulf %307, %293 : vector<8x64xf32>
    %311 = arith.mulf %306, %308 : vector<8x64xf32>
    %312 = arith.addf %310, %311 : vector<8x64xf32>
    %313 = math.tanh %312 : vector<8x64xf32>
    %314 = arith.mulf %309, %313 : vector<8x64xf32>
    %c128 = arith.constant 128 : index
    %c0_60 = arith.constant 0 : index
    %315 = vector.load %arg8[%c128, %c0_60] : memref<224x256xf32, #tpu.memory_space<vmem>>, vector<8x256xf32>
    %316 = arith.truncf %314 : vector<8x64xf32> to vector<8x64xbf16>
    %cst_61 = arith.constant dense<0.000000e+00> : vector<8x256xf32>
    %317 = tpu.matmul %316, %8, %cst_61 {dimension_numbers = #tpu.dot_dimension_numbers<[1], [0], [0], [1], [0, 0, 1, 1], [], []>} : vector<8x64xbf16>, vector<64x256xbf16>, vector<8x256xf32> -> vector<8x256xf32>
    %318 = arith.addf %315, %317 : vector<8x256xf32>
    %319 = arith.negf %318 : vector<8x256xf32>
    %320 = math.exp %319 : vector<8x256xf32>
    %cst_62 = arith.constant 1.000000e+00 : f32
    %321 = vector.broadcast %cst_62 : f32 to vector<8x256xf32>
    %322 = arith.addf %321, %320 : vector<8x256xf32>
    %323 = arith.divf %321, %322 : vector<8x256xf32>
    %324 = math.tanh %318 : vector<8x256xf32>
    %325 = vector.extract_strided_slice %323 {offsets = [0, 0], sizes = [8, 64], strides = [1, 1]} : vector<8x256xf32> to vector<8x64xf32>
    %326 = vector.extract_strided_slice %323 {offsets = [0, 64], sizes = [8, 64], strides = [1, 1]} : vector<8x256xf32> to vector<8x64xf32>
    %327 = vector.extract_strided_slice %324 {offsets = [0, 128], sizes = [8, 64], strides = [1, 1]} : vector<8x256xf32> to vector<8x64xf32>
    %328 = vector.extract_strided_slice %323 {offsets = [0, 192], sizes = [8, 64], strides = [1, 1]} : vector<8x256xf32> to vector<8x64xf32>
    %329 = arith.mulf %326, %312 : vector<8x64xf32>
    %330 = arith.mulf %325, %327 : vector<8x64xf32>
    %331 = arith.addf %329, %330 : vector<8x64xf32>
    %332 = math.tanh %331 : vector<8x64xf32>
    %333 = arith.mulf %328, %332 : vector<8x64xf32>
    %c136 = arith.constant 136 : index
    %c0_63 = arith.constant 0 : index
    %334 = vector.load %arg8[%c136, %c0_63] : memref<224x256xf32, #tpu.memory_space<vmem>>, vector<8x256xf32>
    %335 = arith.truncf %333 : vector<8x64xf32> to vector<8x64xbf16>
    %cst_64 = arith.constant dense<0.000000e+00> : vector<8x256xf32>
    %336 = tpu.matmul %335, %8, %cst_64 {dimension_numbers = #tpu.dot_dimension_numbers<[1], [0], [0], [1], [0, 0, 1, 1], [], []>} : vector<8x64xbf16>, vector<64x256xbf16>, vector<8x256xf32> -> vector<8x256xf32>
    %337 = arith.addf %334, %336 : vector<8x256xf32>
    %338 = arith.negf %337 : vector<8x256xf32>
    %339 = math.exp %338 : vector<8x256xf32>
    %cst_65 = arith.constant 1.000000e+00 : f32
    %340 = vector.broadcast %cst_65 : f32 to vector<8x256xf32>
    %341 = arith.addf %340, %339 : vector<8x256xf32>
    %342 = arith.divf %340, %341 : vector<8x256xf32>
    %343 = math.tanh %337 : vector<8x256xf32>
    %344 = vector.extract_strided_slice %342 {offsets = [0, 0], sizes = [8, 64], strides = [1, 1]} : vector<8x256xf32> to vector<8x64xf32>
    %345 = vector.extract_strided_slice %342 {offsets = [0, 64], sizes = [8, 64], strides = [1, 1]} : vector<8x256xf32> to vector<8x64xf32>
    %346 = vector.extract_strided_slice %343 {offsets = [0, 128], sizes = [8, 64], strides = [1, 1]} : vector<8x256xf32> to vector<8x64xf32>
    %347 = vector.extract_strided_slice %342 {offsets = [0, 192], sizes = [8, 64], strides = [1, 1]} : vector<8x256xf32> to vector<8x64xf32>
    %348 = arith.mulf %345, %331 : vector<8x64xf32>
    %349 = arith.mulf %344, %346 : vector<8x64xf32>
    %350 = arith.addf %348, %349 : vector<8x64xf32>
    %351 = math.tanh %350 : vector<8x64xf32>
    %352 = arith.mulf %347, %351 : vector<8x64xf32>
    %c144 = arith.constant 144 : index
    %c0_66 = arith.constant 0 : index
    %353 = vector.load %arg8[%c144, %c0_66] : memref<224x256xf32, #tpu.memory_space<vmem>>, vector<8x256xf32>
    %354 = arith.truncf %352 : vector<8x64xf32> to vector<8x64xbf16>
    %cst_67 = arith.constant dense<0.000000e+00> : vector<8x256xf32>
    %355 = tpu.matmul %354, %8, %cst_67 {dimension_numbers = #tpu.dot_dimension_numbers<[1], [0], [0], [1], [0, 0, 1, 1], [], []>} : vector<8x64xbf16>, vector<64x256xbf16>, vector<8x256xf32> -> vector<8x256xf32>
    %356 = arith.addf %353, %355 : vector<8x256xf32>
    %357 = arith.negf %356 : vector<8x256xf32>
    %358 = math.exp %357 : vector<8x256xf32>
    %cst_68 = arith.constant 1.000000e+00 : f32
    %359 = vector.broadcast %cst_68 : f32 to vector<8x256xf32>
    %360 = arith.addf %359, %358 : vector<8x256xf32>
    %361 = arith.divf %359, %360 : vector<8x256xf32>
    %362 = math.tanh %356 : vector<8x256xf32>
    %363 = vector.extract_strided_slice %361 {offsets = [0, 0], sizes = [8, 64], strides = [1, 1]} : vector<8x256xf32> to vector<8x64xf32>
    %364 = vector.extract_strided_slice %361 {offsets = [0, 64], sizes = [8, 64], strides = [1, 1]} : vector<8x256xf32> to vector<8x64xf32>
    %365 = vector.extract_strided_slice %362 {offsets = [0, 128], sizes = [8, 64], strides = [1, 1]} : vector<8x256xf32> to vector<8x64xf32>
    %366 = vector.extract_strided_slice %361 {offsets = [0, 192], sizes = [8, 64], strides = [1, 1]} : vector<8x256xf32> to vector<8x64xf32>
    %367 = arith.mulf %364, %350 : vector<8x64xf32>
    %368 = arith.mulf %363, %365 : vector<8x64xf32>
    %369 = arith.addf %367, %368 : vector<8x64xf32>
    %370 = math.tanh %369 : vector<8x64xf32>
    %371 = arith.mulf %366, %370 : vector<8x64xf32>
    %c152 = arith.constant 152 : index
    %c0_69 = arith.constant 0 : index
    %372 = vector.load %arg8[%c152, %c0_69] : memref<224x256xf32, #tpu.memory_space<vmem>>, vector<8x256xf32>
    %373 = arith.truncf %371 : vector<8x64xf32> to vector<8x64xbf16>
    %cst_70 = arith.constant dense<0.000000e+00> : vector<8x256xf32>
    %374 = tpu.matmul %373, %8, %cst_70 {dimension_numbers = #tpu.dot_dimension_numbers<[1], [0], [0], [1], [0, 0, 1, 1], [], []>} : vector<8x64xbf16>, vector<64x256xbf16>, vector<8x256xf32> -> vector<8x256xf32>
    %375 = arith.addf %372, %374 : vector<8x256xf32>
    %376 = arith.negf %375 : vector<8x256xf32>
    %377 = math.exp %376 : vector<8x256xf32>
    %cst_71 = arith.constant 1.000000e+00 : f32
    %378 = vector.broadcast %cst_71 : f32 to vector<8x256xf32>
    %379 = arith.addf %378, %377 : vector<8x256xf32>
    %380 = arith.divf %378, %379 : vector<8x256xf32>
    %381 = math.tanh %375 : vector<8x256xf32>
    %382 = vector.extract_strided_slice %380 {offsets = [0, 0], sizes = [8, 64], strides = [1, 1]} : vector<8x256xf32> to vector<8x64xf32>
    %383 = vector.extract_strided_slice %380 {offsets = [0, 64], sizes = [8, 64], strides = [1, 1]} : vector<8x256xf32> to vector<8x64xf32>
    %384 = vector.extract_strided_slice %381 {offsets = [0, 128], sizes = [8, 64], strides = [1, 1]} : vector<8x256xf32> to vector<8x64xf32>
    %385 = vector.extract_strided_slice %380 {offsets = [0, 192], sizes = [8, 64], strides = [1, 1]} : vector<8x256xf32> to vector<8x64xf32>
    %386 = arith.mulf %383, %369 : vector<8x64xf32>
    %387 = arith.mulf %382, %384 : vector<8x64xf32>
    %388 = arith.addf %386, %387 : vector<8x64xf32>
    %389 = math.tanh %388 : vector<8x64xf32>
    %390 = arith.mulf %385, %389 : vector<8x64xf32>
    %c160 = arith.constant 160 : index
    %c0_72 = arith.constant 0 : index
    %391 = vector.load %arg8[%c160, %c0_72] : memref<224x256xf32, #tpu.memory_space<vmem>>, vector<8x256xf32>
    %392 = arith.truncf %390 : vector<8x64xf32> to vector<8x64xbf16>
    %cst_73 = arith.constant dense<0.000000e+00> : vector<8x256xf32>
    %393 = tpu.matmul %392, %8, %cst_73 {dimension_numbers = #tpu.dot_dimension_numbers<[1], [0], [0], [1], [0, 0, 1, 1], [], []>} : vector<8x64xbf16>, vector<64x256xbf16>, vector<8x256xf32> -> vector<8x256xf32>
    %394 = arith.addf %391, %393 : vector<8x256xf32>
    %395 = arith.negf %394 : vector<8x256xf32>
    %396 = math.exp %395 : vector<8x256xf32>
    %cst_74 = arith.constant 1.000000e+00 : f32
    %397 = vector.broadcast %cst_74 : f32 to vector<8x256xf32>
    %398 = arith.addf %397, %396 : vector<8x256xf32>
    %399 = arith.divf %397, %398 : vector<8x256xf32>
    %400 = math.tanh %394 : vector<8x256xf32>
    %401 = vector.extract_strided_slice %399 {offsets = [0, 0], sizes = [8, 64], strides = [1, 1]} : vector<8x256xf32> to vector<8x64xf32>
    %402 = vector.extract_strided_slice %399 {offsets = [0, 64], sizes = [8, 64], strides = [1, 1]} : vector<8x256xf32> to vector<8x64xf32>
    %403 = vector.extract_strided_slice %400 {offsets = [0, 128], sizes = [8, 64], strides = [1, 1]} : vector<8x256xf32> to vector<8x64xf32>
    %404 = vector.extract_strided_slice %399 {offsets = [0, 192], sizes = [8, 64], strides = [1, 1]} : vector<8x256xf32> to vector<8x64xf32>
    %405 = arith.mulf %402, %388 : vector<8x64xf32>
    %406 = arith.mulf %401, %403 : vector<8x64xf32>
    %407 = arith.addf %405, %406 : vector<8x64xf32>
    %408 = math.tanh %407 : vector<8x64xf32>
    %409 = arith.mulf %404, %408 : vector<8x64xf32>
    %c168 = arith.constant 168 : index
    %c0_75 = arith.constant 0 : index
    %410 = vector.load %arg8[%c168, %c0_75] : memref<224x256xf32, #tpu.memory_space<vmem>>, vector<8x256xf32>
    %411 = arith.truncf %409 : vector<8x64xf32> to vector<8x64xbf16>
    %cst_76 = arith.constant dense<0.000000e+00> : vector<8x256xf32>
    %412 = tpu.matmul %411, %8, %cst_76 {dimension_numbers = #tpu.dot_dimension_numbers<[1], [0], [0], [1], [0, 0, 1, 1], [], []>} : vector<8x64xbf16>, vector<64x256xbf16>, vector<8x256xf32> -> vector<8x256xf32>
    %413 = arith.addf %410, %412 : vector<8x256xf32>
    %414 = arith.negf %413 : vector<8x256xf32>
    %415 = math.exp %414 : vector<8x256xf32>
    %cst_77 = arith.constant 1.000000e+00 : f32
    %416 = vector.broadcast %cst_77 : f32 to vector<8x256xf32>
    %417 = arith.addf %416, %415 : vector<8x256xf32>
    %418 = arith.divf %416, %417 : vector<8x256xf32>
    %419 = math.tanh %413 : vector<8x256xf32>
    %420 = vector.extract_strided_slice %418 {offsets = [0, 0], sizes = [8, 64], strides = [1, 1]} : vector<8x256xf32> to vector<8x64xf32>
    %421 = vector.extract_strided_slice %418 {offsets = [0, 64], sizes = [8, 64], strides = [1, 1]} : vector<8x256xf32> to vector<8x64xf32>
    %422 = vector.extract_strided_slice %419 {offsets = [0, 128], sizes = [8, 64], strides = [1, 1]} : vector<8x256xf32> to vector<8x64xf32>
    %423 = vector.extract_strided_slice %418 {offsets = [0, 192], sizes = [8, 64], strides = [1, 1]} : vector<8x256xf32> to vector<8x64xf32>
    %424 = arith.mulf %421, %407 : vector<8x64xf32>
    %425 = arith.mulf %420, %422 : vector<8x64xf32>
    %426 = arith.addf %424, %425 : vector<8x64xf32>
    %427 = math.tanh %426 : vector<8x64xf32>
    %428 = arith.mulf %423, %427 : vector<8x64xf32>
    %c176 = arith.constant 176 : index
    %c0_78 = arith.constant 0 : index
    %429 = vector.load %arg8[%c176, %c0_78] : memref<224x256xf32, #tpu.memory_space<vmem>>, vector<8x256xf32>
    %430 = arith.truncf %428 : vector<8x64xf32> to vector<8x64xbf16>
    %cst_79 = arith.constant dense<0.000000e+00> : vector<8x256xf32>
    %431 = tpu.matmul %430, %8, %cst_79 {dimension_numbers = #tpu.dot_dimension_numbers<[1], [0], [0], [1], [0, 0, 1, 1], [], []>} : vector<8x64xbf16>, vector<64x256xbf16>, vector<8x256xf32> -> vector<8x256xf32>
    %432 = arith.addf %429, %431 : vector<8x256xf32>
    %433 = arith.negf %432 : vector<8x256xf32>
    %434 = math.exp %433 : vector<8x256xf32>
    %cst_80 = arith.constant 1.000000e+00 : f32
    %435 = vector.broadcast %cst_80 : f32 to vector<8x256xf32>
    %436 = arith.addf %435, %434 : vector<8x256xf32>
    %437 = arith.divf %435, %436 : vector<8x256xf32>
    %438 = math.tanh %432 : vector<8x256xf32>
    %439 = vector.extract_strided_slice %437 {offsets = [0, 0], sizes = [8, 64], strides = [1, 1]} : vector<8x256xf32> to vector<8x64xf32>
    %440 = vector.extract_strided_slice %437 {offsets = [0, 64], sizes = [8, 64], strides = [1, 1]} : vector<8x256xf32> to vector<8x64xf32>
    %441 = vector.extract_strided_slice %438 {offsets = [0, 128], sizes = [8, 64], strides = [1, 1]} : vector<8x256xf32> to vector<8x64xf32>
    %442 = vector.extract_strided_slice %437 {offsets = [0, 192], sizes = [8, 64], strides = [1, 1]} : vector<8x256xf32> to vector<8x64xf32>
    %443 = arith.mulf %440, %426 : vector<8x64xf32>
    %444 = arith.mulf %439, %441 : vector<8x64xf32>
    %445 = arith.addf %443, %444 : vector<8x64xf32>
    %446 = math.tanh %445 : vector<8x64xf32>
    %447 = arith.mulf %442, %446 : vector<8x64xf32>
    %c184 = arith.constant 184 : index
    %c0_81 = arith.constant 0 : index
    %448 = vector.load %arg8[%c184, %c0_81] : memref<224x256xf32, #tpu.memory_space<vmem>>, vector<8x256xf32>
    %449 = arith.truncf %447 : vector<8x64xf32> to vector<8x64xbf16>
    %cst_82 = arith.constant dense<0.000000e+00> : vector<8x256xf32>
    %450 = tpu.matmul %449, %8, %cst_82 {dimension_numbers = #tpu.dot_dimension_numbers<[1], [0], [0], [1], [0, 0, 1, 1], [], []>} : vector<8x64xbf16>, vector<64x256xbf16>, vector<8x256xf32> -> vector<8x256xf32>
    %451 = arith.addf %448, %450 : vector<8x256xf32>
    %452 = arith.negf %451 : vector<8x256xf32>
    %453 = math.exp %452 : vector<8x256xf32>
    %cst_83 = arith.constant 1.000000e+00 : f32
    %454 = vector.broadcast %cst_83 : f32 to vector<8x256xf32>
    %455 = arith.addf %454, %453 : vector<8x256xf32>
    %456 = arith.divf %454, %455 : vector<8x256xf32>
    %457 = math.tanh %451 : vector<8x256xf32>
    %458 = vector.extract_strided_slice %456 {offsets = [0, 0], sizes = [8, 64], strides = [1, 1]} : vector<8x256xf32> to vector<8x64xf32>
    %459 = vector.extract_strided_slice %456 {offsets = [0, 64], sizes = [8, 64], strides = [1, 1]} : vector<8x256xf32> to vector<8x64xf32>
    %460 = vector.extract_strided_slice %457 {offsets = [0, 128], sizes = [8, 64], strides = [1, 1]} : vector<8x256xf32> to vector<8x64xf32>
    %461 = vector.extract_strided_slice %456 {offsets = [0, 192], sizes = [8, 64], strides = [1, 1]} : vector<8x256xf32> to vector<8x64xf32>
    %462 = arith.mulf %459, %445 : vector<8x64xf32>
    %463 = arith.mulf %458, %460 : vector<8x64xf32>
    %464 = arith.addf %462, %463 : vector<8x64xf32>
    %465 = math.tanh %464 : vector<8x64xf32>
    %466 = arith.mulf %461, %465 : vector<8x64xf32>
    %c192 = arith.constant 192 : index
    %c0_84 = arith.constant 0 : index
    %467 = vector.load %arg8[%c192, %c0_84] : memref<224x256xf32, #tpu.memory_space<vmem>>, vector<8x256xf32>
    %468 = arith.truncf %466 : vector<8x64xf32> to vector<8x64xbf16>
    %cst_85 = arith.constant dense<0.000000e+00> : vector<8x256xf32>
    %469 = tpu.matmul %468, %8, %cst_85 {dimension_numbers = #tpu.dot_dimension_numbers<[1], [0], [0], [1], [0, 0, 1, 1], [], []>} : vector<8x64xbf16>, vector<64x256xbf16>, vector<8x256xf32> -> vector<8x256xf32>
    %470 = arith.addf %467, %469 : vector<8x256xf32>
    %471 = arith.negf %470 : vector<8x256xf32>
    %472 = math.exp %471 : vector<8x256xf32>
    %cst_86 = arith.constant 1.000000e+00 : f32
    %473 = vector.broadcast %cst_86 : f32 to vector<8x256xf32>
    %474 = arith.addf %473, %472 : vector<8x256xf32>
    %475 = arith.divf %473, %474 : vector<8x256xf32>
    %476 = math.tanh %470 : vector<8x256xf32>
    %477 = vector.extract_strided_slice %475 {offsets = [0, 0], sizes = [8, 64], strides = [1, 1]} : vector<8x256xf32> to vector<8x64xf32>
    %478 = vector.extract_strided_slice %475 {offsets = [0, 64], sizes = [8, 64], strides = [1, 1]} : vector<8x256xf32> to vector<8x64xf32>
    %479 = vector.extract_strided_slice %476 {offsets = [0, 128], sizes = [8, 64], strides = [1, 1]} : vector<8x256xf32> to vector<8x64xf32>
    %480 = vector.extract_strided_slice %475 {offsets = [0, 192], sizes = [8, 64], strides = [1, 1]} : vector<8x256xf32> to vector<8x64xf32>
    %481 = arith.mulf %478, %464 : vector<8x64xf32>
    %482 = arith.mulf %477, %479 : vector<8x64xf32>
    %483 = arith.addf %481, %482 : vector<8x64xf32>
    %484 = math.tanh %483 : vector<8x64xf32>
    %485 = arith.mulf %480, %484 : vector<8x64xf32>
    %c200 = arith.constant 200 : index
    %c0_87 = arith.constant 0 : index
    %486 = vector.load %arg8[%c200, %c0_87] : memref<224x256xf32, #tpu.memory_space<vmem>>, vector<8x256xf32>
    %487 = arith.truncf %485 : vector<8x64xf32> to vector<8x64xbf16>
    %cst_88 = arith.constant dense<0.000000e+00> : vector<8x256xf32>
    %488 = tpu.matmul %487, %8, %cst_88 {dimension_numbers = #tpu.dot_dimension_numbers<[1], [0], [0], [1], [0, 0, 1, 1], [], []>} : vector<8x64xbf16>, vector<64x256xbf16>, vector<8x256xf32> -> vector<8x256xf32>
    %489 = arith.addf %486, %488 : vector<8x256xf32>
    %490 = arith.negf %489 : vector<8x256xf32>
    %491 = math.exp %490 : vector<8x256xf32>
    %cst_89 = arith.constant 1.000000e+00 : f32
    %492 = vector.broadcast %cst_89 : f32 to vector<8x256xf32>
    %493 = arith.addf %492, %491 : vector<8x256xf32>
    %494 = arith.divf %492, %493 : vector<8x256xf32>
    %495 = math.tanh %489 : vector<8x256xf32>
    %496 = vector.extract_strided_slice %494 {offsets = [0, 0], sizes = [8, 64], strides = [1, 1]} : vector<8x256xf32> to vector<8x64xf32>
    %497 = vector.extract_strided_slice %494 {offsets = [0, 64], sizes = [8, 64], strides = [1, 1]} : vector<8x256xf32> to vector<8x64xf32>
    %498 = vector.extract_strided_slice %495 {offsets = [0, 128], sizes = [8, 64], strides = [1, 1]} : vector<8x256xf32> to vector<8x64xf32>
    %499 = vector.extract_strided_slice %494 {offsets = [0, 192], sizes = [8, 64], strides = [1, 1]} : vector<8x256xf32> to vector<8x64xf32>
    %500 = arith.mulf %497, %483 : vector<8x64xf32>
    %501 = arith.mulf %496, %498 : vector<8x64xf32>
    %502 = arith.addf %500, %501 : vector<8x64xf32>
    %503 = math.tanh %502 : vector<8x64xf32>
    %504 = arith.mulf %499, %503 : vector<8x64xf32>
    %c208 = arith.constant 208 : index
    %c0_90 = arith.constant 0 : index
    %505 = vector.load %arg8[%c208, %c0_90] : memref<224x256xf32, #tpu.memory_space<vmem>>, vector<8x256xf32>
    %506 = arith.truncf %504 : vector<8x64xf32> to vector<8x64xbf16>
    %cst_91 = arith.constant dense<0.000000e+00> : vector<8x256xf32>
    %507 = tpu.matmul %506, %8, %cst_91 {dimension_numbers = #tpu.dot_dimension_numbers<[1], [0], [0], [1], [0, 0, 1, 1], [], []>} : vector<8x64xbf16>, vector<64x256xbf16>, vector<8x256xf32> -> vector<8x256xf32>
    %508 = arith.addf %505, %507 : vector<8x256xf32>
    %509 = arith.negf %508 : vector<8x256xf32>
    %510 = math.exp %509 : vector<8x256xf32>
    %cst_92 = arith.constant 1.000000e+00 : f32
    %511 = vector.broadcast %cst_92 : f32 to vector<8x256xf32>
    %512 = arith.addf %511, %510 : vector<8x256xf32>
    %513 = arith.divf %511, %512 : vector<8x256xf32>
    %514 = math.tanh %508 : vector<8x256xf32>
    %515 = vector.extract_strided_slice %513 {offsets = [0, 0], sizes = [8, 64], strides = [1, 1]} : vector<8x256xf32> to vector<8x64xf32>
    %516 = vector.extract_strided_slice %513 {offsets = [0, 64], sizes = [8, 64], strides = [1, 1]} : vector<8x256xf32> to vector<8x64xf32>
    %517 = vector.extract_strided_slice %514 {offsets = [0, 128], sizes = [8, 64], strides = [1, 1]} : vector<8x256xf32> to vector<8x64xf32>
    %518 = vector.extract_strided_slice %513 {offsets = [0, 192], sizes = [8, 64], strides = [1, 1]} : vector<8x256xf32> to vector<8x64xf32>
    %519 = arith.mulf %516, %502 : vector<8x64xf32>
    %520 = arith.mulf %515, %517 : vector<8x64xf32>
    %521 = arith.addf %519, %520 : vector<8x64xf32>
    %522 = math.tanh %521 : vector<8x64xf32>
    %523 = arith.mulf %518, %522 : vector<8x64xf32>
    %c216 = arith.constant 216 : index
    %c0_93 = arith.constant 0 : index
    %524 = vector.load %arg8[%c216, %c0_93] : memref<224x256xf32, #tpu.memory_space<vmem>>, vector<8x256xf32>
    %525 = arith.truncf %523 : vector<8x64xf32> to vector<8x64xbf16>
    %cst_94 = arith.constant dense<0.000000e+00> : vector<8x256xf32>
    %526 = tpu.matmul %525, %8, %cst_94 {dimension_numbers = #tpu.dot_dimension_numbers<[1], [0], [0], [1], [0, 0, 1, 1], [], []>} : vector<8x64xbf16>, vector<64x256xbf16>, vector<8x256xf32> -> vector<8x256xf32>
    %527 = arith.addf %524, %526 : vector<8x256xf32>
    %528 = arith.negf %527 : vector<8x256xf32>
    %529 = math.exp %528 : vector<8x256xf32>
    %cst_95 = arith.constant 1.000000e+00 : f32
    %530 = vector.broadcast %cst_95 : f32 to vector<8x256xf32>
    %531 = arith.addf %530, %529 : vector<8x256xf32>
    %532 = arith.divf %530, %531 : vector<8x256xf32>
    %533 = math.tanh %527 : vector<8x256xf32>
    %534 = vector.extract_strided_slice %532 {offsets = [0, 0], sizes = [8, 64], strides = [1, 1]} : vector<8x256xf32> to vector<8x64xf32>
    %535 = vector.extract_strided_slice %532 {offsets = [0, 64], sizes = [8, 64], strides = [1, 1]} : vector<8x256xf32> to vector<8x64xf32>
    %536 = vector.extract_strided_slice %533 {offsets = [0, 128], sizes = [8, 64], strides = [1, 1]} : vector<8x256xf32> to vector<8x64xf32>
    %537 = vector.extract_strided_slice %532 {offsets = [0, 192], sizes = [8, 64], strides = [1, 1]} : vector<8x256xf32> to vector<8x64xf32>
    %538 = arith.mulf %535, %521 : vector<8x64xf32>
    %539 = arith.mulf %534, %536 : vector<8x64xf32>
    %540 = arith.addf %538, %539 : vector<8x64xf32>
    %541 = math.tanh %540 : vector<8x64xf32>
    %542 = arith.mulf %537, %541 : vector<8x64xf32>
    %c0_96 = arith.constant 0 : index
    %c0_97 = arith.constant 0 : index
    %543 = vector.load %arg5[%c0_96, %c0_97] : memref<64x10xf32, #tpu.memory_space<vmem>>, vector<64x10xf32>
    %cst_98 = arith.constant dense<0.000000e+00> : vector<8x10xf32>
    %544 = tpu.matmul %542, %543, %cst_98 {dimension_numbers = #tpu.dot_dimension_numbers<[1], [0], [0], [1], [0, 0, 1, 1], [], []>} : vector<8x64xf32>, vector<64x10xf32>, vector<8x10xf32> -> vector<8x10xf32>
    %c0_99 = arith.constant 0 : index
    %c0_100 = arith.constant 0 : index
    %545 = vector.load %arg6[%c0_99, %c0_100] : memref<1x10xf32, #tpu.memory_space<vmem>>, vector<1x10xf32>
    %546 = vector.broadcast %545 : vector<1x10xf32> to vector<8x10xf32>
    %547 = arith.addf %544, %546 : vector<8x10xf32>
    %c0_101 = arith.constant 0 : index
    %c0_102 = arith.constant 0 : index
    %548 = vector.load %arg7[%c0_101, %c0_102] : memref<8x10xf32, #tpu.memory_space<vmem>>, vector<8x10xf32>
    tpu.vector_store %arg7[%c0_101, %c0_102], %547 {strides = array<i32>} : memref<8x10xf32, #tpu.memory_space<vmem>>, vector<8x10xf32>,
    return
  }
  func.func @transform_0(%arg0: i32) -> (i32, i32) {
    %c0_i32 = arith.constant 0 : i32
    %c0_i32_0 = arith.constant 0 : i32
    %c0_i32_1 = arith.constant 0 : i32
    return %c0_i32, %c0_i32_0 : i32, i32
  }
  func.func @transform_1(%arg0: i32) -> (i32, i32) {
    %c0_i32 = arith.constant 0 : i32
    %c0_i32_0 = arith.constant 0 : i32
    %c0_i32_1 = arith.constant 0 : i32
    return %c0_i32, %c0_i32_0 : i32, i32
  }
  func.func @transform_2(%arg0: i32) -> (i32, i32) {
    %c0_i32 = arith.constant 0 : i32
    %c0_i32_0 = arith.constant 0 : i32
    %c0_i32_1 = arith.constant 0 : i32
    return %c0_i32, %c0_i32_0 : i32, i32
  }
  func.func @transform_3(%arg0: i32) -> (i32, i32) {
    %c0_i32 = arith.constant 0 : i32
    %c0_i32_0 = arith.constant 0 : i32
    %c0_i32_1 = arith.constant 0 : i32
    return %c0_i32, %c0_i32_0 : i32, i32
  }
  func.func @transform_4(%arg0: i32) -> (i32, i32) {
    %c0_i32 = arith.constant 0 : i32
    %c0_i32_0 = arith.constant 0 : i32
    %c0_i32_1 = arith.constant 0 : i32
    return %c0_i32, %c0_i32_0 : i32, i32
  }
  func.func @transform_5(%arg0: i32) -> (i32, i32) {
    %c0_i32 = arith.constant 0 : i32
    %c0_i32_0 = arith.constant 0 : i32
    %c0_i32_1 = arith.constant 0 : i32
    return %c0_i32, %c0_i32_0 : i32, i32
  }
  func.func @transform_6(%arg0: i32) -> (i32, i32) {
    %c0_i32 = arith.constant 0 : i32
    %c0_i32_0 = arith.constant 0 : i32
    %c0_i32_1 = arith.constant 0 : i32
    return %c0_i32, %c0_i32_0 : i32, i32
  }
}

</mosaic_0001>

<llo_original>
// kernel: tpu_custom_call.1
$region0: #{tpu_custom_call.1}
  #allocation0 [shape = 'u32[]', space=smem, size = 0x4, offset = 0x4, fixed_abs, tag = 'smem constant byte address 0x4 - core index']
  #allocation1 [shape = 'u32[72,128]{1,0:T(1,128)}', space=vmem, size = 0x9000, scoped, tag = 'internal scratch']
  #allocation2 [shape = 'f32[224,256]{1,0:T(8,128)}', space=vmem, size = 0x38000, scoped, tag = 'scratch operand']
  %s0 = inlined_call_operand.vmem [shape: f32[224,28], index: 0, kind: input, shape index: {}]
  %s1 = inlined_call_operand.vmem [shape: bf16[28,256], index: 1, kind: input, shape index: {}]
  %s2 = inlined_call_operand.vmem [shape: bf16[64,256], index: 2, kind: input, shape index: {}]
  %s3 = inlined_call_operand.vmem [shape: f32[1,256], index: 3, kind: input, shape index: {}]
  %s4 = inlined_call_operand.vmem [shape: f32[64,10], index: 4, kind: input, shape index: {}]
  %s5 = inlined_call_operand.vmem [shape: f32[1,10], index: 5, kind: input, shape index: {}]
  %s6 = inlined_call_operand.hbm [shape: f32[8,10], index: 6, kind: output, shape index: {}]
  %s7 = sld [smem:[#allocation0]]
  $region34: #{tpu_custom_call.1} parent=0
    _
  %s9 = ssub.s32 1, %s7
  %s10 = scalar_select 0, %s9, %s7
  $region1: #{tpu_custom_call.1} parent=0
    #allocation3 [shape = 'u8[4096]{0}', space=vmem, size = 0x1000, scoped, tag = 'output window, operand 0, single buffered']
    #allocation4 [shape = 's32[1]{0}', space=sflag, size = 0x4, scoped, tag = 'scoped memory for tpu_custom_call.1']
    %11 = vsyncpa [#allocation4], 0
    // Predicated region
    $region2: #{tpu_custom_call.1} parent=1 // pred_check
      _
    $region3: #{tpu_custom_call.1} parent=1 // pred_check_branch
      %13 = sbr.rel (0) target = $region5
    $region4: #{tpu_custom_call.1} parent=1 // pred_region
      _
    $region5: #{tpu_custom_call.1} parent=1 // pred_fallthru
      _
    // Predicated region
    $region6: #{tpu_custom_call.1} parent=1 // pred_check
      _
    $region7: #{tpu_custom_call.1} parent=1 // pred_check_branch
      %15 = sbr.rel (0) target = $region9
    $region8: #{tpu_custom_call.1} parent=1 // pred_region
      _
    $region9: #{tpu_custom_call.1} parent=1 // pred_fallthru
      _
    // Predicated region
    $region10: #{tpu_custom_call.1} parent=1 // pred_check
      _
    $region11: #{tpu_custom_call.1} parent=1 // pred_check_branch
      %17 = sbr.rel (0) target = $region13
    $region12: #{tpu_custom_call.1} parent=1 // pred_region
      _
    $region13: #{tpu_custom_call.1} parent=1 // pred_fallthru
      _
    // Predicated region
    $region14: #{tpu_custom_call.1} parent=1 // pred_check
      _
    $region15: #{tpu_custom_call.1} parent=1 // pred_check_branch
      %19 = sbr.rel (0) target = $region17
    $region16: #{tpu_custom_call.1} parent=1 // pred_region
      _
    $region17: #{tpu_custom_call.1} parent=1 // pred_fallthru
      _
    // Predicated region
    $region18: #{tpu_custom_call.1} parent=1 // pred_check
      _
    $region19: #{tpu_custom_call.1} parent=1 // pred_check_branch
      %21 = sbr.rel (0) target = $region21
    $region20: #{tpu_custom_call.1} parent=1 // pred_region
      _
    $region21: #{tpu_custom_call.1} parent=1 // pred_fallthru
      _
    // Predicated region
    $region22: #{tpu_custom_call.1} parent=1 // pred_check
      _
    $region23: #{tpu_custom_call.1} parent=1 // pred_check_branch
      %23 = sbr.rel (0) target = $region25
    $region24: #{tpu_custom_call.1} parent=1 // pred_region
      _
    $region25: #{tpu_custom_call.1} parent=1 // pred_fallthru
      _
    %v25 = vld [vmem:[%s0] sm:$0xff]
    %v26 = vld [vmem:[%s0 + $0x8] sm:$0xff]
    %v27 = vld [vmem:[%s0 + $0x10] sm:$0xff]
    %v28 = vld [vmem:[%s0 + $0x18] sm:$0xff]
    %v29 = vld [vmem:[%s0 + $0x20] sm:$0xff]
    %v30 = vld [vmem:[%s0 + $0x28] sm:$0xff]
    %v31 = vld [vmem:[%s0 + $0x30] sm:$0xff]
    %v32 = vld [vmem:[%s0 + $0x38] sm:$0xff]
    %v33 = vld [vmem:[%s0 + $0x40] sm:$0xff]
    %v34 = vld [vmem:[%s0 + $0x48] sm:$0xff]
    %v35 = vld [vmem:[%s0 + $0x50] sm:$0xff]
    %v36 = vld [vmem:[%s0 + $0x58] sm:$0xff]
    %v37 = vld [vmem:[%s0 + $0x60] sm:$0xff]
    %v38 = vld [vmem:[%s0 + $0x68] sm:$0xff]
    %v39 = vld [vmem:[%s0 + $0x70] sm:$0xff]
    %v40 = vld [vmem:[%s0 + $0x78] sm:$0xff]
    %v41 = vld [vmem:[%s0 + $0x80] sm:$0xff]
    %v42 = vld [vmem:[%s0 + $0x88] sm:$0xff]
    %v43 = vld [vmem:[%s0 + $0x90] sm:$0xff]
    %v44 = vld [vmem:[%s0 + $0x98] sm:$0xff]
    %v45 = vld [vmem:[%s0 + $0xa0] sm:$0xff]
    %v46 = vld [vmem:[%s0 + $0xa8] sm:$0xff]
    %v47 = vld [vmem:[%s0 + $0xb0] sm:$0xff]
    %v48 = vld [vmem:[%s0 + $0xb8] sm:$0xff]
    %v49 = vld [vmem:[%s0 + $0xc0] sm:$0xff]
    %v50 = vld [vmem:[%s0 + $0xc8] sm:$0xff]
    %v51 = vld [vmem:[%s0 + $0xd0] sm:$0xff]
    %v52 = vld [vmem:[%s0 + $0xd8] sm:$0xff]
    %v53 = vpack.c.bf16 %v26, %v25
    %v54 = vpack.c.bf16 %v28, %v27
    %v55 = vpack.c.bf16 %v30, %v29
    %v56 = vpack.c.bf16 %v32, %v31
    %v57 = vpack.c.bf16 %v34, %v33
    %v58 = vpack.c.bf16 %v36, %v35
    %v59 = vpack.c.bf16 %v38, %v37
    %v60 = vpack.c.bf16 %v40, %v39
    %v61 = vpack.c.bf16 %v42, %v41
    %v62 = vpack.c.bf16 %v44, %v43
    %v63 = vpack.c.bf16 %v46, %v45
    %v64 = vpack.c.bf16 %v48, %v47
    %v65 = vpack.c.bf16 %v50, %v49
    %v66 = vpack.c.bf16 %v52, %v51
    %v67 = vld [vmem:[%s1] sm:$0xff]
    %v68 = vld [vmem:[%s1 + $0x8] sm:$0xff]
    %v69 = vld [vmem:[%s1 + $0x10] sm:$0xff]
    %v70 = vld [vmem:[%s1 + $0x18] sm:$0x33]
    %v71 = vld [vmem:[%s3] sm:$0x3]
    %v73 = vperm.slane %v71, 0
    %v74 = vperm.slane %v71, 1
    %v81 = vunpack.c.l.b16 %v67
    %v82 = vunpack.c.h.b16 %v67
    %v83 = vunpack.c.l.b16 %v68
    %v84 = vunpack.c.h.b16 %v68
    %v85 = vunpack.c.l.b16 %v69
    %v86 = vunpack.c.h.b16 %v69
    %v87 = vunpack.c.l.b16 %v70
    %v88 = vunpack.c.h.b16 %v70
    %v89 = vpack.c.b16 %v83, %v81
    %v90 = vpack.c.b16 %v84, %v82
    %v91 = vpack.c.b16 %v87, %v85
    %v92 = vpack.c.b16 %v88, %v86
    %vm95 = vcmask 228352
    %v97 = vsel %vm95, %v53, 0
    %v100 = vsel %vm95, %v54, 0
    %v103 = vsel %vm95, %v55, 0
    %v106 = vsel %vm95, %v56, 0
    %v109 = vsel %vm95, %v57, 0
    %v112 = vsel %vm95, %v58, 0
    %v115 = vsel %vm95, %v59, 0
    %v118 = vsel %vm95, %v60, 0
    %v121 = vsel %vm95, %v61, 0
    %v124 = vsel %vm95, %v62, 0
    %v127 = vsel %vm95, %v63, 0
    %v130 = vsel %vm95, %v64, 0
    %v133 = vsel %vm95, %v65, 0
    %v136 = vsel %vm95, %v66, 0
    %vm138 = vcmask 1045504
    %v140 = vsel %vm138, %v91, 0
    %v143 = vsel %vm138, %v92, 0
    %145 = vmatpush.bf16.msra.mxu0 0
    %146 = vmatpush.bf16.msra.mxu0 0
    %147 = vmatpush.bf16.msra.mxu0 0
    %148 = vmatpush.bf16.msra.mxu0 0
    %149 = vmatpush.bf16.msra.mxu0 0
    %150 = vmatpush.bf16.msra.mxu0 0
    %151 = vmatpush.bf16.msra.mxu0 %v140
    %152 = vmatpush.bf16.msra.mxu0 %v89
    %153 = vmatmul.bf16.gmra.mxu0 %v97
    %v154 = vpop.f32.mrf.mxu0
    %v155 = vadd.f32 %v73, %v154
    %v156 = vpop.f32.mrf.mxu0
    %v157 = vadd.f32 %v73, %v156
    %158 = vmatmul.bf16.gmra.mxu0 %v100
    %v159 = vpop.f32.mrf.mxu0
    %v160 = vadd.f32 %v73, %v159
    %v161 = vpop.f32.mrf.mxu0
    %v162 = vadd.f32 %v73, %v161
    %163 = vmatmul.bf16.gmra.mxu0 %v103
    %v164 = vpop.f32.mrf.mxu0
    %v165 = vadd.f32 %v73, %v164
    %v166 = vpop.f32.mrf.mxu0
    %v167 = vadd.f32 %v73, %v166
    %168 = vmatmul.bf16.gmra.mxu0 %v106
    %v169 = vpop.f32.mrf.mxu0
    %v170 = vadd.f32 %v73, %v169
    %v171 = vpop.f32.mrf.mxu0
    %v172 = vadd.f32 %v73, %v171
    %173 = vmatmul.bf16.gmra.mxu0 %v109
    %v174 = vpop.f32.mrf.mxu0
    %v175 = vadd.f32 %v73, %v174
    %v176 = vpop.f32.mrf.mxu0
    %v177 = vadd.f32 %v73, %v176
    %178 = vmatmul.bf16.gmra.mxu0 %v112
    %v179 = vpop.f32.mrf.mxu0
    %v180 = vadd.f32 %v73, %v179
    %v181 = vpop.f32.mrf.mxu0
    %v182 = vadd.f32 %v73, %v181
    %183 = vmatmul.bf16.gmra.mxu0 %v115
    %v184 = vpop.f32.mrf.mxu0
    %v185 = vadd.f32 %v73, %v184
    %v186 = vpop.f32.mrf.mxu0
    %v187 = vadd.f32 %v73, %v186
    %188 = vmatmul.bf16.gmra.mxu0 %v118
    %v189 = vpop.f32.mrf.mxu0
    %v190 = vadd.f32 %v73, %v189
    %v191 = vpop.f32.mrf.mxu0
    %v192 = vadd.f32 %v73, %v191
    %193 = vmatmul.bf16.gmra.mxu0 %v121
    %v194 = vpop.f32.mrf.mxu0
    %v195 = vadd.f32 %v73, %v194
    %v196 = vpop.f32.mrf.mxu0
    %v197 = vadd.f32 %v73, %v196
    %198 = vmatmul.bf16.gmra.mxu0 %v124
    %v199 = vpop.f32.mrf.mxu0
    %v200 = vadd.f32 %v73, %v199
    %v201 = vpop.f32.mrf.mxu0
    %v202 = vadd.f32 %v73, %v201
    %203 = vmatmul.bf16.gmra.mxu0 %v127
    %v204 = vpop.f32.mrf.mxu0
    %v205 = vadd.f32 %v73, %v204
    %v206 = vpop.f32.mrf.mxu0
    %v207 = vadd.f32 %v73, %v206
    %208 = vmatmul.bf16.gmra.mxu0 %v130
    %v209 = vpop.f32.mrf.mxu0
    %v210 = vadd.f32 %v73, %v209
    %v211 = vpop.f32.mrf.mxu0
    %v212 = vadd.f32 %v73, %v211
    %213 = vmatmul.bf16.gmra.mxu0 %v133
    %v214 = vpop.f32.mrf.mxu0
    %v215 = vadd.f32 %v73, %v214
    %v216 = vpop.f32.mrf.mxu0
    %v217 = vadd.f32 %v73, %v216
    %218 = vmatmul.bf16.gmra.mxu0 %v136
    %v219 = vpop.f32.mrf.mxu0
    %v220 = vadd.f32 %v73, %v219
    %v221 = vpop.f32.mrf.mxu0
    %v222 = vadd.f32 %v73, %v221
    %223 = vdwg.mxu0
    %224 = vmatpush.bf16.msra.mxu0 0
    %225 = vmatpush.bf16.msra.mxu0 0
    %226 = vmatpush.bf16.msra.mxu0 0
    %227 = vmatpush.bf16.msra.mxu0 0
    %228 = vmatpush.bf16.msra.mxu0 0
    %229 = vmatpush.bf16.msra.mxu0 0
    %230 = vmatpush.bf16.msra.mxu0 %v143
    %231 = vmatpush.bf16.msra.mxu0 %v90
    %232 = vmatmul.bf16.gmra.mxu0 %v97
    %v233 = vpop.f32.mrf.mxu0
    %v234 = vadd.f32 %v74, %v233
    %v235 = vpop.f32.mrf.mxu0
    %v236 = vadd.f32 %v74, %v235
    %237 = vmatmul.bf16.gmra.mxu0 %v100
    %v238 = vpop.f32.mrf.mxu0
    %v239 = vadd.f32 %v74, %v238
    %v240 = vpop.f32.mrf.mxu0
    %v241 = vadd.f32 %v74, %v240
    %242 = vmatmul.bf16.gmra.mxu0 %v103
    %v243 = vpop.f32.mrf.mxu0
    %v244 = vadd.f32 %v74, %v243
    %v245 = vpop.f32.mrf.mxu0
    %v246 = vadd.f32 %v74, %v245
    %247 = vmatmul.bf16.gmra.mxu0 %v106
    %v248 = vpop.f32.mrf.mxu0
    %v249 = vadd.f32 %v74, %v248
    %v250 = vpop.f32.mrf.mxu0
    %v251 = vadd.f32 %v74, %v250
    %252 = vmatmul.bf16.gmra.mxu0 %v109
    %v253 = vpop.f32.mrf.mxu0
    %v254 = vadd.f32 %v74, %v253
    %v255 = vpop.f32.mrf.mxu0
    %v256 = vadd.f32 %v74, %v255
    %257 = vmatmul.bf16.gmra.mxu0 %v112
    %v258 = vpop.f32.mrf.mxu0
    %v259 = vadd.f32 %v74, %v258
    %v260 = vpop.f32.mrf.mxu0
    %v261 = vadd.f32 %v74, %v260
    %262 = vmatmul.bf16.gmra.mxu0 %v115
    %v263 = vpop.f32.mrf.mxu0
    %v264 = vadd.f32 %v74, %v263
    %v265 = vpop.f32.mrf.mxu0
    %v266 = vadd.f32 %v74, %v265
    %267 = vmatmul.bf16.gmra.mxu0 %v118
    %v268 = vpop.f32.mrf.mxu0
    %v269 = vadd.f32 %v74, %v268
    %v270 = vpop.f32.mrf.mxu0
    %v271 = vadd.f32 %v74, %v270
    %272 = vmatmul.bf16.gmra.mxu0 %v121
    %v273 = vpop.f32.mrf.mxu0
    %v274 = vadd.f32 %v74, %v273
    %v275 = vpop.f32.mrf.mxu0
    %v276 = vadd.f32 %v74, %v275
    %277 = vmatmul.bf16.gmra.mxu0 %v124
    %v278 = vpop.f32.mrf.mxu0
    %v279 = vadd.f32 %v74, %v278
    %v280 = vpop.f32.mrf.mxu0
    %v281 = vadd.f32 %v74, %v280
    %282 = vmatmul.bf16.gmra.mxu0 %v127
    %v283 = vpop.f32.mrf.mxu0
    %v284 = vadd.f32 %v74, %v283
    %v285 = vpop.f32.mrf.mxu0
    %v286 = vadd.f32 %v74, %v285
    %287 = vmatmul.bf16.gmra.mxu0 %v130
    %v288 = vpop.f32.mrf.mxu0
    %v289 = vadd.f32 %v74, %v288
    %v290 = vpop.f32.mrf.mxu0
    %v291 = vadd.f32 %v74, %v290
    %292 = vmatmul.bf16.gmra.mxu0 %v133
    %v293 = vpop.f32.mrf.mxu0
    %v294 = vadd.f32 %v74, %v293
    %v295 = vpop.f32.mrf.mxu0
    %v296 = vadd.f32 %v74, %v295
    %297 = vmatmul.bf16.gmra.mxu0 %v136
    %v298 = vpop.f32.mrf.mxu0
    %v299 = vadd.f32 %v74, %v298
    %v300 = vpop.f32.mrf.mxu0
    %v301 = vadd.f32 %v74, %v300
    %302 = vdwg.mxu0
    %303 = vst [vmem:[#allocation2] sm:$0xff] %v155
    %304 = vst [vmem:[#allocation2 + $0x8] sm:$0xff] %v234
    %305 = vst [vmem:[#allocation2 + $0x10] sm:$0xff] %v157
    %306 = vst [vmem:[#allocation2 + $0x18] sm:$0xff] %v236
    %307 = vst [vmem:[#allocation2 + $0x20] sm:$0xff] %v160
    %308 = vst [vmem:[#allocation2 + $0x28] sm:$0xff] %v239
    %309 = vst [vmem:[#allocation2 + $0x30] sm:$0xff] %v162
    %310 = vst [vmem:[#allocation2 + $0x38] sm:$0xff] %v241
    %311 = vst [vmem:[#allocation2 + $0x40] sm:$0xff] %v165
    %312 = vst [vmem:[#allocation2 + $0x48] sm:$0xff] %v244
    %313 = vst [vmem:[#allocation2 + $0x50] sm:$0xff] %v167
    %314 = vst [vmem:[#allocation2 + $0x58] sm:$0xff] %v246
    %315 = vst [vmem:[#allocation2 + $0x60] sm:$0xff] %v170
    %316 = vst [vmem:[#allocation2 + $0x68] sm:$0xff] %v249
    %317 = vst [vmem:[#allocation2 + $0x70] sm:$0xff] %v172
    %318 = vst [vmem:[#allocation2 + $0x78] sm:$0xff] %v251
    %319 = vst [vmem:[#allocation2 + $0x80] sm:$0xff] %v175
    %320 = vst [vmem:[#allocation2 + $0x88] sm:$0xff] %v254
    %321 = vst [vmem:[#allocation2 + $0x90] sm:$0xff] %v177
    %322 = vst [vmem:[#allocation2 + $0x98] sm:$0xff] %v256
    %323 = vst [vmem:[#allocation2 + $0xa0] sm:$0xff] %v180
    %324 = vst [vmem:[#allocation2 + $0xa8] sm:$0xff] %v259
    %325 = vst [vmem:[#allocation2 + $0xb0] sm:$0xff] %v182
    %326 = vst [vmem:[#allocation2 + $0xb8] sm:$0xff] %v261
    %327 = vst [vmem:[#allocation2 + $0xc0] sm:$0xff] %v185
    %328 = vst [vmem:[#allocation2 + $0xc8] sm:$0xff] %v264
    %329 = vst [vmem:[#allocation2 + $0xd0] sm:$0xff] %v187
    %330 = vst [vmem:[#allocation2 + $0xd8] sm:$0xff] %v266
    %331 = vst [vmem:[#allocation2 + $0xe0] sm:$0xff] %v190
    %332 = vst [vmem:[#allocation2 + $0xe8] sm:$0xff] %v269
    %333 = vst [vmem:[#allocation2 + $0xf0] sm:$0xff] %v192
    %334 = vst [vmem:[#allocation2 + $0xf8] sm:$0xff] %v271
    %335 = vst [vmem:[#allocation2 + $0x100] sm:$0xff] %v195
    %336 = vst [vmem:[#allocation2 + $0x108] sm:$0xff] %v274
    %337 = vst [vmem:[#allocation2 + $0x110] sm:$0xff] %v197
    %338 = vst [vmem:[#allocation2 + $0x118] sm:$0xff] %v276
    %339 = vst [vmem:[#allocation2 + $0x120] sm:$0xff] %v200
    %340 = vst [vmem:[#allocation2 + $0x128] sm:$0xff] %v279
    %341 = vst [vmem:[#allocation2 + $0x130] sm:$0xff] %v202
    %342 = vst [vmem:[#allocation2 + $0x138] sm:$0xff] %v281
    %343 = vst [vmem:[#allocation2 + $0x140] sm:$0xff] %v205
    %344 = vst [vmem:[#allocation2 + $0x148] sm:$0xff] %v284
    %345 = vst [vmem:[#allocation2 + $0x150] sm:$0xff] %v207
    %346 = vst [vmem:[#allocation2 + $0x158] sm:$0xff] %v286
    %347 = vst [vmem:[#allocation2 + $0x160] sm:$0xff] %v210
    %348 = vst [vmem:[#allocation2 + $0x168] sm:$0xff] %v289
    %349 = vst [vmem:[#allocation2 + $0x170] sm:$0xff] %v212
    %350 = vst [vmem:[#allocation2 + $0x178] sm:$0xff] %v291
    %351 = vst [vmem:[#allocation2 + $0x180] sm:$0xff] %v215
    %352 = vst [vmem:[#allocation2 + $0x188] sm:$0xff] %v294
    %353 = vst [vmem:[#allocation2 + $0x190] sm:$0xff] %v217
    %354 = vst [vmem:[#allocation2 + $0x198] sm:$0xff] %v296
    %355 = vst [vmem:[#allocation2 + $0x1a0] sm:$0xff] %v220
    %356 = vst [vmem:[#allocation2 + $0x1a8] sm:$0xff] %v299
    %357 = vst [vmem:[#allocation2 + $0x1b0] sm:$0xff] %v222
    %358 = vst [vmem:[#allocation2 + $0x1b8] sm:$0xff] %v301
    %v359 = vld [vmem:[%s2] sm:$0xff]
    %v360 = vld [vmem:[%s2 + $0x8] sm:$0xff]
    %v361 = vld [vmem:[%s2 + $0x10] sm:$0xff]
    %v362 = vld [vmem:[%s2 + $0x18] sm:$0xff]
    %v363 = vld [vmem:[%s2 + $0x20] sm:$0xff]
    %v364 = vld [vmem:[%s2 + $0x28] sm:$0xff]
    %v365 = vld [vmem:[%s2 + $0x30] sm:$0xff]
    %v366 = vld [vmem:[%s2 + $0x38] sm:$0xff]
    %v367 = vld [vmem:[#allocation2] sm:$0xff]
    %v368 = vld [vmem:[#allocation2 + $0x8] sm:$0xff]
    %v377 = vunpack.c.l.b16 %v359
    %v378 = vunpack.c.h.b16 %v359
    %v379 = vunpack.c.l.b16 %v360
    %v380 = vunpack.c.h.b16 %v360
    %v381 = vunpack.c.l.b16 %v361
    %v382 = vunpack.c.h.b16 %v361
    %v383 = vunpack.c.l.b16 %v362
    %v384 = vunpack.c.h.b16 %v362
    %v385 = vunpack.c.l.b16 %v363
    %v386 = vunpack.c.h.b16 %v363
    %v387 = vunpack.c.l.b16 %v364
    %v388 = vunpack.c.h.b16 %v364
    %v389 = vunpack.c.l.b16 %v365
    %v390 = vunpack.c.h.b16 %v365
    %v391 = vunpack.c.l.b16 %v366
    %v392 = vunpack.c.h.b16 %v366
    %v393 = vpack.c.b16 %v379, %v377
    %v394 = vpack.c.b16 %v380, %v378
    %v395 = vpack.c.b16 %v383, %v381
    %v396 = vpack.c.b16 %v384, %v382
    %v397 = vpack.c.b16 %v387, %v385
    %v398 = vpack.c.b16 %v388, %v386
    %v399 = vpack.c.b16 %v391, %v389
    %v400 = vpack.c.b16 %v392, %v390
    %vm409 = vcmask 523264
    %v411 = vsel %vm409, 0, 0
    %413 = vmatpush.bf16.msra.mxu0 0
    %414 = vmatpush.bf16.msra.mxu0 0
    %415 = vmatpush.bf16.msra.mxu0 0
    %416 = vmatpush.bf16.msra.mxu0 0
    %417 = vmatpush.bf16.msra.mxu0 %v399
    %418 = vmatpush.bf16.msra.mxu0 %v397
    %419 = vmatpush.bf16.msra.mxu0 %v395
    %420 = vmatpush.bf16.msra.mxu0 %v393
    %421 = vmatmul.bf16.gmra.mxu0 %v411
    %v422 = vpop.f32.mrf.mxu0
    %v423 = vadd.f32 0.0, %v422
    %v424 = vpop.f32.mrf.mxu0
    %425 = vdwg.mxu0
    %426 = vmatpush.bf16.msra.mxu0 0
    %427 = vmatpush.bf16.msra.mxu0 0
    %428 = vmatpush.bf16.msra.mxu0 0
    %429 = vmatpush.bf16.msra.mxu0 0
    %430 = vmatpush.bf16.msra.mxu0 %v400
    %431 = vmatpush.bf16.msra.mxu0 %v398
    %432 = vmatpush.bf16.msra.mxu0 %v396
    %433 = vmatpush.bf16.msra.mxu0 %v394
    %434 = vmatmul.bf16.gmra.mxu0 %v411
    %v435 = vpop.f32.mrf.mxu0
    %v436 = vadd.f32 0.0, %v435
    %v437 = vpop.f32.mrf.mxu0
    %438 = vdwg.mxu0
    %v439 = vadd.f32 %v367, %v423
    %v440 = vadd.f32 %v368, %v436
    %v441 = vxor.u32 %v439, 2147483648
    %v442 = vxor.u32 %v440, 2147483648
    %v443 = vmul.f32 %v441, 1.442695
    %v444 = vpow.pop %v443
    %v445 = vmul.f32 %v442, 1.442695
    %v446 = vpow.pop %v445
    %v447 = vadd.f32 %v444, 1.0
    %v448 = vadd.f32 %v446, 1.0
    %v449 = vrcp.pop %v447
    %v450 = vmul.f32 %v447, %v449
    %v451 = vsub.f32 1.0, %v450
    %v452 = vmul.f32 %v449, %v451
    %v453 = vadd.f32 %v449, %v452
    %vm454 = vweird.f32 %v447
    %vm455 = vweird.f32 %v449
    %vm456 = vmor %vm454, %vm455
    %v457 = vsel %vm456, %v449, %v453
    %v458 = vand.u32 2147483647, %v447
    %vm459 = vcmp.eq.f32.partialorder %v458, 8.507059e+37
    %v460 = vand.u32 %v447, 2147483648
    %v461 = vor.u32 1.1754944e-38, %v460
    %v462 = vsel %vm459, %v461, %v457
    %v463 = vmul.f32 1.0, %v462
    %v464 = vrcp.pop %v448
    %v465 = vmul.f32 %v448, %v464
    %v466 = vsub.f32 1.0, %v465
    %v467 = vmul.f32 %v464, %v466
    %v468 = vadd.f32 %v464, %v467
    %vm469 = vweird.f32 %v448
    %vm470 = vweird.f32 %v464
    %vm471 = vmor %vm469, %vm470
    %v472 = vsel %vm471, %v464, %v468
    %v473 = vand.u32 2147483647, %v448
    %vm474 = vcmp.eq.f32.partialorder %v473, 8.507059e+37
    %v475 = vand.u32 %v448, 2147483648
    %v476 = vor.u32 1.1754944e-38, %v475
    %v477 = vsel %vm474, %v476, %v472
    %v478 = vmul.f32 1.0, %v477
    %v479 = vtanh.pop %v440
    %v480 = vmul.f32 %v463, 0.0
    %v481 = vmul.f32 %v463, %v479
    %483 = vrot.lane.b32.xlu0 %v481, 64
    %v484 = vpop.permute.xlu0 %483
    %v486 = vadd.f32 %v480, %v484
    %v487 = vtanh.pop %v486
    %v488 = vmul.f32 %v478, %v487
    %v489 = vld [vmem:[#allocation2 + $0x10] sm:$0xff]
    %v490 = vld [vmem:[#allocation2 + $0x18] sm:$0xff]
    %v491 = vpack.c.bf16 %v488, %v488
    %493 = vrot.lane.b32.xlu0 %v491, 64
    %v494 = vpop.permute.xlu0 %493
    %v496 = vsel %vm409, %v494, 0
    %498 = vmatpush.bf16.msra.mxu0 0
    %499 = vmatpush.bf16.msra.mxu0 0
    %500 = vmatpush.bf16.msra.mxu0 0
    %501 = vmatpush.bf16.msra.mxu0 0
    %502 = vmatpush.bf16.msra.mxu0 %v399
    %503 = vmatpush.bf16.msra.mxu0 %v397
    %504 = vmatpush.bf16.msra.mxu0 %v395
    %505 = vmatpush.bf16.msra.mxu0 %v393
    %506 = vmatmul.bf16.gmra.mxu0 %v496
    %v507 = vpop.f32.mrf.mxu0
    %v508 = vadd.f32 0.0, %v507
    %v509 = vpop.f32.mrf.mxu0
    %510 = vdwg.mxu0
    %511 = vmatpush.bf16.msra.mxu0 0
    %512 = vmatpush.bf16.msra.mxu0 0
    %513 = vmatpush.bf16.msra.mxu0 0
    %514 = vmatpush.bf16.msra.mxu0 0
    %515 = vmatpush.bf16.msra.mxu0 %v400
    %516 = vmatpush.bf16.msra.mxu0 %v398
    %517 = vmatpush.bf16.msra.mxu0 %v396
    %518 = vmatpush.bf16.msra.mxu0 %v394
    %519 = vmatmul.bf16.gmra.mxu0 %v496
    %v520 = vpop.f32.mrf.mxu0
    %v521 = vadd.f32 0.0, %v520
    %v522 = vpop.f32.mrf.mxu0
    %523 = vdwg.mxu0
    %v524 = vadd.f32 %v489, %v508
    %v525 = vadd.f32 %v490, %v521
    %v526 = vxor.u32 %v524, 2147483648
    %v527 = vxor.u32 %v525, 2147483648
    %v528 = vmul.f32 %v526, 1.442695
    %v529 = vpow.pop %v528
    %v530 = vmul.f32 %v527, 1.442695
    %v531 = vpow.pop %v530
    %v532 = vadd.f32 %v529, 1.0
    %v533 = vadd.f32 %v531, 1.0
    %v534 = vrcp.pop %v532
    %v535 = vmul.f32 %v532, %v534
    %v536 = vsub.f32 1.0, %v535
    %v537 = vmul.f32 %v534, %v536
    %v538 = vadd.f32 %v534, %v537
    %vm539 = vweird.f32 %v532
    %vm540 = vweird.f32 %v534
    %vm541 = vmor %vm539, %vm540
    %v542 = vsel %vm541, %v534, %v538
    %v543 = vand.u32 2147483647, %v532
    %vm544 = vcmp.eq.f32.partialorder %v543, 8.507059e+37
    %v545 = vand.u32 %v532, 2147483648
    %v546 = vor.u32 1.1754944e-38, %v545
    %v547 = vsel %vm544, %v546, %v542
    %v548 = vmul.f32 1.0, %v547
    %v549 = vrcp.pop %v533
    %v550 = vmul.f32 %v533, %v549
    %v551 = vsub.f32 1.0, %v550
    %v552 = vmul.f32 %v549, %v551
    %v553 = vadd.f32 %v549, %v552
    %vm554 = vweird.f32 %v533
    %vm555 = vweird.f32 %v549
    %vm556 = vmor %vm554, %vm555
    %v557 = vsel %vm556, %v549, %v553
    %v558 = vand.u32 2147483647, %v533
    %vm559 = vcmp.eq.f32.partialorder %v558, 8.507059e+37
    %v560 = vand.u32 %v533, 2147483648
    %v561 = vor.u32 1.1754944e-38, %v560
    %v562 = vsel %vm559, %v561, %v557
    %v563 = vmul.f32 1.0, %v562
    %v564 = vtanh.pop %v525
    %v565 = vmul.f32 %v548, %v486
    %v566 = vmul.f32 %v548, %v564
    %568 = vrot.lane.b32.xlu0 %v566, 64
    %v569 = vpop.permute.xlu0 %568
    %v571 = vadd.f32 %v565, %v569
    %v572 = vtanh.pop %v571
    %v573 = vmul.f32 %v563, %v572
    %v574 = vld [vmem:[#allocation2 + $0x20] sm:$0xff]
    %v575 = vld [vmem:[#allocation2 + $0x28] sm:$0xff]
    %v576 = vpack.c.bf16 %v573, %v573
    %578 = vrot.lane.b32.xlu0 %v576, 64
    %v579 = vpop.permute.xlu0 %578
    %v581 = vsel %vm409, %v579, 0
    %583 = vmatpush.bf16.msra.mxu0 0
    %584 = vmatpush.bf16.msra.mxu0 0
    %585 = vmatpush.bf16.msra.mxu0 0
    %586 = vmatpush.bf16.msra.mxu0 0
    %587 = vmatpush.bf16.msra.mxu0 %v399
    %588 = vmatpush.bf16.msra.mxu0 %v397
    %589 = vmatpush.bf16.msra.mxu0 %v395
    %590 = vmatpush.bf16.msra.mxu0 %v393
    %591 = vmatmul.bf16.gmra.mxu0 %v581
    %v592 = vpop.f32.mrf.mxu0
    %v593 = vadd.f32 0.0, %v592
    %v594 = vpop.f32.mrf.mxu0
    %595 = vdwg.mxu0
    %596 = vmatpush.bf16.msra.mxu0 0
    %597 = vmatpush.bf16.msra.mxu0 0
    %598 = vmatpush.bf16.msra.mxu0 0
    %599 = vmatpush.bf16.msra.mxu0 0
    %600 = vmatpush.bf16.msra.mxu0 %v400
    %601 = vmatpush.bf16.msra.mxu0 %v398
    %602 = vmatpush.bf16.msra.mxu0 %v396
    %603 = vmatpush.bf16.msra.mxu0 %v394
    %604 = vmatmul.bf16.gmra.mxu0 %v581
    %v605 = vpop.f32.mrf.mxu0
    %v606 = vadd.f32 0.0, %v605
    %v607 = vpop.f32.mrf.mxu0
    %608 = vdwg.mxu0
    %v609 = vadd.f32 %v574, %v593
    %v610 = vadd.f32 %v575, %v606
    %v611 = vxor.u32 %v609, 2147483648
    %v612 = vxor.u32 %v610, 2147483648
    %v613 = vmul.f32 %v611, 1.442695
    %v614 = vpow.pop %v613
    %v615 = vmul.f32 %v612, 1.442695
    %v616 = vpow.pop %v615
    %v617 = vadd.f32 %v614, 1.0
    %v618 = vadd.f32 %v616, 1.0
    %v619 = vrcp.pop %v617
    %v620 = vmul.f32 %v617, %v619
    %v621 = vsub.f32 1.0, %v620
    %v622 = vmul.f32 %v619, %v621
    %v623 = vadd.f32 %v619, %v622
    %vm624 = vweird.f32 %v617
    %vm625 = vweird.f32 %v619
    %vm626 = vmor %vm624, %vm625
    %v627 = vsel %vm626, %v619, %v623
    %v628 = vand.u32 2147483647, %v617
    %vm629 = vcmp.eq.f32.partialorder %v628, 8.507059e+37
    %v630 = vand.u32 %v617, 2147483648
    %v631 = vor.u32 1.1754944e-38, %v630
    %v632 = vsel %vm629, %v631, %v627
    %v633 = vmul.f32 1.0, %v632
    %v634 = vrcp.pop %v618
    %v635 = vmul.f32 %v618, %v634
    %v636 = vsub.f32 1.0, %v635
    %v637 = vmul.f32 %v634, %v636
    %v638 = vadd.f32 %v634, %v637
    %vm639 = vweird.f32 %v618
    %vm640 = vweird.f32 %v634
    %vm641 = vmor %vm639, %vm640
    %v642 = vsel %vm641, %v634, %v638
    %v643 = vand.u32 2147483647, %v618
    %vm644 = vcmp.eq.f32.partialorder %v643, 8.507059e+37
    %v645 = vand.u32 %v618, 2147483648
    %v646 = vor.u32 1.1754944e-38, %v645
    %v647 = vsel %vm644, %v646, %v642
    %v648 = vmul.f32 1.0, %v647
    %v649 = vtanh.pop %v610
    %v650 = vmul.f32 %v633, %v571
    %v651 = vmul.f32 %v633, %v649
    %653 = vrot.lane.b32.xlu0 %v651, 64
    %v654 = vpop.permute.xlu0 %653
    %v656 = vadd.f32 %v650, %v654
    %v657 = vtanh.pop %v656
    %v658 = vmul.f32 %v648, %v657
    %v659 = vld [vmem:[#allocation2 + $0x30] sm:$0xff]
    %v660 = vld [vmem:[#allocation2 + $0x38] sm:$0xff]
    %v661 = vpack.c.bf16 %v658, %v658
    %663 = vrot.lane.b32.xlu0 %v661, 64
    %v664 = vpop.permute.xlu0 %663
    %v666 = vsel %vm409, %v664, 0
    %668 = vmatpush.bf16.msra.mxu0 0
    %669 = vmatpush.bf16.msra.mxu0 0
    %670 = vmatpush.bf16.msra.mxu0 0
    %671 = vmatpush.bf16.msra.mxu0 0
    %672 = vmatpush.bf16.msra.mxu0 %v399
    %673 = vmatpush.bf16.msra.mxu0 %v397
    %674 = vmatpush.bf16.msra.mxu0 %v395
    %675 = vmatpush.bf16.msra.mxu0 %v393
    %676 = vmatmul.bf16.gmra.mxu0 %v666
    %v677 = vpop.f32.mrf.mxu0
    %v678 = vadd.f32 0.0, %v677
    %v679 = vpop.f32.mrf.mxu0
    %680 = vdwg.mxu0
    %681 = vmatpush.bf16.msra.mxu0 0
    %682 = vmatpush.bf16.msra.mxu0 0
    %683 = vmatpush.bf16.msra.mxu0 0
    %684 = vmatpush.bf16.msra.mxu0 0
    %685 = vmatpush.bf16.msra.mxu0 %v400
    %686 = vmatpush.bf16.msra.mxu0 %v398
    %687 = vmatpush.bf16.msra.mxu0 %v396
    %688 = vmatpush.bf16.msra.mxu0 %v394
    %689 = vmatmul.bf16.gmra.mxu0 %v666
    %v690 = vpop.f32.mrf.mxu0
    %v691 = vadd.f32 0.0, %v690
    %v692 = vpop.f32.mrf.mxu0
    %693 = vdwg.mxu0
    %v694 = vadd.f32 %v659, %v678
    %v695 = vadd.f32 %v660, %v691
    %v696 = vxor.u32 %v694, 2147483648
    %v697 = vxor.u32 %v695, 2147483648
    %v698 = vmul.f32 %v696, 1.442695
    %v699 = vpow.pop %v698
    %v700 = vmul.f32 %v697, 1.442695
    %v701 = vpow.pop %v700
    %v702 = vadd.f32 %v699, 1.0
    %v703 = vadd.f32 %v701, 1.0
    %v704 = vrcp.pop %v702
    %v705 = vmul.f32 %v702, %v704
    %v706 = vsub.f32 1.0, %v705
    %v707 = vmul.f32 %v704, %v706
    %v708 = vadd.f32 %v704, %v707
    %vm709 = vweird.f32 %v702
    %vm710 = vweird.f32 %v704
    %vm711 = vmor %vm709, %vm710
    %v712 = vsel %vm711, %v704, %v708
    %v713 = vand.u32 2147483647, %v702
    %vm714 = vcmp.eq.f32.partialorder %v713, 8.507059e+37
    %v715 = vand.u32 %v702, 2147483648
    %v716 = vor.u32 1.1754944e-38, %v715
    %v717 = vsel %vm714, %v716, %v712
    %v718 = vmul.f32 1.0, %v717
    %v719 = vrcp.pop %v703
    %v720 = vmul.f32 %v703, %v719
    %v721 = vsub.f32 1.0, %v720
    %v722 = vmul.f32 %v719, %v721
    %v723 = vadd.f32 %v719, %v722
    %vm724 = vweird.f32 %v703
    %vm725 = vweird.f32 %v719
    %vm726 = vmor %vm724, %vm725
    %v727 = vsel %vm726, %v719, %v723
    %v728 = vand.u32 2147483647, %v703
    %vm729 = vcmp.eq.f32.partialorder %v728, 8.507059e+37
    %v730 = vand.u32 %v703, 2147483648
    %v731 = vor.u32 1.1754944e-38, %v730
    %v732 = vsel %vm729, %v731, %v727
    %v733 = vmul.f32 1.0, %v732
    %v734 = vtanh.pop %v695
    %v735 = vmul.f32 %v718, %v656
    %v736 = vmul.f32 %v718, %v734
    %738 = vrot.lane.b32.xlu0 %v736, 64
    %v739 = vpop.permute.xlu0 %738
    %v741 = vadd.f32 %v735, %v739
    %v742 = vtanh.pop %v741
    %v743 = vmul.f32 %v733, %v742
    %v744 = vld [vmem:[#allocation2 + $0x40] sm:$0xff]
    %v745 = vld [vmem:[#allocation2 + $0x48] sm:$0xff]
    %v746 = vpack.c.bf16 %v743, %v743
    %748 = vrot.lane.b32.xlu0 %v746, 64
    %v749 = vpop.permute.xlu0 %748
    %v751 = vsel %vm409, %v749, 0
    %753 = vmatpush.bf16.msra.mxu0 0
    %754 = vmatpush.bf16.msra.mxu0 0
    %755 = vmatpush.bf16.msra.mxu0 0
    %756 = vmatpush.bf16.msra.mxu0 0
    %757 = vmatpush.bf16.msra.mxu0 %v399
    %758 = vmatpush.bf16.msra.mxu0 %v397
    %759 = vmatpush.bf16.msra.mxu0 %v395
    %760 = vmatpush.bf16.msra.mxu0 %v393
    %761 = vmatmul.bf16.gmra.mxu0 %v751
    %v762 = vpop.f32.mrf.mxu0
    %v763 = vadd.f32 0.0, %v762
    %v764 = vpop.f32.mrf.mxu0
    %765 = vdwg.mxu0
    %766 = vmatpush.bf16.msra.mxu0 0
    %767 = vmatpush.bf16.msra.mxu0 0
    %768 = vmatpush.bf16.msra.mxu0 0
    %769 = vmatpush.bf16.msra.mxu0 0
    %770 = vmatpush.bf16.msra.mxu0 %v400
    %771 = vmatpush.bf16.msra.mxu0 %v398
    %772 = vmatpush.bf16.msra.mxu0 %v396
    %773 = vmatpush.bf16.msra.mxu0 %v394
    %774 = vmatmul.bf16.gmra.mxu0 %v751
    %v775 = vpop.f32.mrf.mxu0
    %v776 = vadd.f32 0.0, %v775
    %v777 = vpop.f32.mrf.mxu0
    %778 = vdwg.mxu0
    %v779 = vadd.f32 %v744, %v763
    %v780 = vadd.f32 %v745, %v776
    %v781 = vxor.u32 %v779, 2147483648
    %v782 = vxor.u32 %v780, 2147483648
    %v783 = vmul.f32 %v781, 1.442695
    %v784 = vpow.pop %v783
    %v785 = vmul.f32 %v782, 1.442695
    %v786 = vpow.pop %v785
    %v787 = vadd.f32 %v784, 1.0
    %v788 = vadd.f32 %v786, 1.0
    %v789 = vrcp.pop %v787
    %v790 = vmul.f32 %v787, %v789
    %v791 = vsub.f32 1.0, %v790
    %v792 = vmul.f32 %v789, %v791
    %v793 = vadd.f32 %v789, %v792
    %vm794 = vweird.f32 %v787
    %vm795 = vweird.f32 %v789
    %vm796 = vmor %vm794, %vm795
    %v797 = vsel %vm796, %v789, %v793
    %v798 = vand.u32 2147483647, %v787
    %vm799 = vcmp.eq.f32.partialorder %v798, 8.507059e+37
    %v800 = vand.u32 %v787, 2147483648
    %v801 = vor.u32 1.1754944e-38, %v800
    %v802 = vsel %vm799, %v801, %v797
    %v803 = vmul.f32 1.0, %v802
    %v804 = vrcp.pop %v788
    %v805 = vmul.f32 %v788, %v804
    %v806 = vsub.f32 1.0, %v805
    %v807 = vmul.f32 %v804, %v806
    %v808 = vadd.f32 %v804, %v807
    %vm809 = vweird.f32 %v788
    %vm810 = vweird.f32 %v804
    %vm811 = vmor %vm809, %vm810
    %v812 = vsel %vm811, %v804, %v808
    %v813 = vand.u32 2147483647, %v788
    %vm814 = vcmp.eq.f32.partialorder %v813, 8.507059e+37
    %v815 = vand.u32 %v788, 2147483648
    %v816 = vor.u32 1.1754944e-38, %v815
    %v817 = vsel %vm814, %v816, %v812
    %v818 = vmul.f32 1.0, %v817
    %v819 = vtanh.pop %v780
    %v820 = vmul.f32 %v803, %v741
    %v821 = vmul.f32 %v803, %v819
    %823 = vrot.lane.b32.xlu0 %v821, 64
    %v824 = vpop.permute.xlu0 %823
    %v826 = vadd.f32 %v820, %v824
    %v827 = vtanh.pop %v826
    %v828 = vmul.f32 %v818, %v827
    %v829 = vld [vmem:[#allocation2 + $0x50] sm:$0xff]
    %v830 = vld [vmem:[#allocation2 + $0x58] sm:$0xff]
    %v831 = vpack.c.bf16 %v828, %v828
    %833 = vrot.lane.b32.xlu0 %v831, 64
    %v834 = vpop.permute.xlu0 %833
    %v836 = vsel %vm409, %v834, 0
    %838 = vmatpush.bf16.msra.mxu0 0
    %839 = vmatpush.bf16.msra.mxu0 0
    %840 = vmatpush.bf16.msra.mxu0 0
    %841 = vmatpush.bf16.msra.mxu0 0
    %842 = vmatpush.bf16.msra.mxu0 %v399
    %843 = vmatpush.bf16.msra.mxu0 %v397
    %844 = vmatpush.bf16.msra.mxu0 %v395
    %845 = vmatpush.bf16.msra.mxu0 %v393
    %846 = vmatmul.bf16.gmra.mxu0 %v836
    %v847 = vpop.f32.mrf.mxu0
    %v848 = vadd.f32 0.0, %v847
    %v849 = vpop.f32.mrf.mxu0
    %850 = vdwg.mxu0
    %851 = vmatpush.bf16.msra.mxu0 0
    %852 = vmatpush.bf16.msra.mxu0 0
    %853 = vmatpush.bf16.msra.mxu0 0
    %854 = vmatpush.bf16.msra.mxu0 0
    %855 = vmatpush.bf16.msra.mxu0 %v400
    %856 = vmatpush.bf16.msra.mxu0 %v398
    %857 = vmatpush.bf16.msra.mxu0 %v396
    %858 = vmatpush.bf16.msra.mxu0 %v394
    %859 = vmatmul.bf16.gmra.mxu0 %v836
    %v860 = vpop.f32.mrf.mxu0
    %v861 = vadd.f32 0.0, %v860
    %v862 = vpop.f32.mrf.mxu0
    %863 = vdwg.mxu0
    %v864 = vadd.f32 %v829, %v848
    %v865 = vadd.f32 %v830, %v861
    %v866 = vxor.u32 %v864, 2147483648
    %v867 = vxor.u32 %v865, 2147483648
    %v868 = vmul.f32 %v866, 1.442695
    %v869 = vpow.pop %v868
    %v870 = vmul.f32 %v867, 1.442695
    %v871 = vpow.pop %v870
    %v872 = vadd.f32 %v869, 1.0
    %v873 = vadd.f32 %v871, 1.0
    %v874 = vrcp.pop %v872
    %v875 = vmul.f32 %v872, %v874
    %v876 = vsub.f32 1.0, %v875
    %v877 = vmul.f32 %v874, %v876
    %v878 = vadd.f32 %v874, %v877
    %vm879 = vweird.f32 %v872
    %vm880 = vweird.f32 %v874
    %vm881 = vmor %vm879, %vm880
    %v882 = vsel %vm881, %v874, %v878
    %v883 = vand.u32 2147483647, %v872
    %vm884 = vcmp.eq.f32.partialorder %v883, 8.507059e+37
    %v885 = vand.u32 %v872, 2147483648
    %v886 = vor.u32 1.1754944e-38, %v885
    %v887 = vsel %vm884, %v886, %v882
    %v888 = vmul.f32 1.0, %v887
    %v889 = vrcp.pop %v873
    %v890 = vmul.f32 %v873, %v889
    %v891 = vsub.f32 1.0, %v890
    %v892 = vmul.f32 %v889, %v891
    %v893 = vadd.f32 %v889, %v892
    %vm894 = vweird.f32 %v873
    %vm895 = vweird.f32 %v889
    %vm896 = vmor %vm894, %vm895
    %v897 = vsel %vm896, %v889, %v893
    %v898 = vand.u32 2147483647, %v873
    %vm899 = vcmp.eq.f32.partialorder %v898, 8.507059e+37
    %v900 = vand.u32 %v873, 2147483648
    %v901 = vor.u32 1.1754944e-38, %v900
    %v902 = vsel %vm899, %v901, %v897
    %v903 = vmul.f32 1.0, %v902
    %v904 = vtanh.pop %v865
    %v905 = vmul.f32 %v888, %v826
    %v906 = vmul.f32 %v888, %v904
    %908 = vrot.lane.b32.xlu0 %v906, 64
    %v909 = vpop.permute.xlu0 %908
    %v911 = vadd.f32 %v905, %v909
    %v912 = vtanh.pop %v911
    %v913 = vmul.f32 %v903, %v912
    %v914 = vld [vmem:[#allocation2 + $0x60] sm:$0xff]
    %v915 = vld [vmem:[#allocation2 + $0x68] sm:$0xff]
    %v916 = vpack.c.bf16 %v913, %v913
    %918 = vrot.lane.b32.xlu0 %v916, 64
    %v919 = vpop.permute.xlu0 %918
    %v921 = vsel %vm409, %v919, 0
    %923 = vmatpush.bf16.msra.mxu0 0
    %924 = vmatpush.bf16.msra.mxu0 0
    %925 = vmatpush.bf16.msra.mxu0 0
    %926 = vmatpush.bf16.msra.mxu0 0
    %927 = vmatpush.bf16.msra.mxu0 %v399
    %928 = vmatpush.bf16.msra.mxu0 %v397
    %929 = vmatpush.bf16.msra.mxu0 %v395
    %930 = vmatpush.bf16.msra.mxu0 %v393
    %931 = vmatmul.bf16.gmra.mxu0 %v921
    %v932 = vpop.f32.mrf.mxu0
    %v933 = vadd.f32 0.0, %v932
    %v934 = vpop.f32.mrf.mxu0
    %935 = vdwg.mxu0
    %936 = vmatpush.bf16.msra.mxu0 0
    %937 = vmatpush.bf16.msra.mxu0 0
    %938 = vmatpush.bf16.msra.mxu0 0
    %939 = vmatpush.bf16.msra.mxu0 0
    %940 = vmatpush.bf16.msra.mxu0 %v400
    %941 = vmatpush.bf16.msra.mxu0 %v398
    %942 = vmatpush.bf16.msra.mxu0 %v396
    %943 = vmatpush.bf16.msra.mxu0 %v394
    %944 = vmatmul.bf16.gmra.mxu0 %v921
    %v945 = vpop.f32.mrf.mxu0
    %v946 = vadd.f32 0.0, %v945
    %v947 = vpop.f32.mrf.mxu0
    %948 = vdwg.mxu0
    %v949 = vadd.f32 %v914, %v933
    %v950 = vadd.f32 %v915, %v946
    %v951 = vxor.u32 %v949, 2147483648
    %v952 = vxor.u32 %v950, 2147483648
    %v953 = vmul.f32 %v951, 1.442695
    %v954 = vpow.pop %v953
    %v955 = vmul.f32 %v952, 1.442695
    %v956 = vpow.pop %v955
    %v957 = vadd.f32 %v954, 1.0
    %v958 = vadd.f32 %v956, 1.0
    %v959 = vrcp.pop %v957
    %v960 = vmul.f32 %v957, %v959
    %v961 = vsub.f32 1.0, %v960
    %v962 = vmul.f32 %v959, %v961
    %v963 = vadd.f32 %v959, %v962
    %vm964 = vweird.f32 %v957
    %vm965 = vweird.f32 %v959
    %vm966 = vmor %vm964, %vm965
    %v967 = vsel %vm966, %v959, %v963
    %v968 = vand.u32 2147483647, %v957
    %vm969 = vcmp.eq.f32.partialorder %v968, 8.507059e+37
    %v970 = vand.u32 %v957, 2147483648
    %v971 = vor.u32 1.1754944e-38, %v970
    %v972 = vsel %vm969, %v971, %v967
    %v973 = vmul.f32 1.0, %v972
    %v974 = vrcp.pop %v958
    %v975 = vmul.f32 %v958, %v974
    %v976 = vsub.f32 1.0, %v975
    %v977 = vmul.f32 %v974, %v976
    %v978 = vadd.f32 %v974, %v977
    %vm979 = vweird.f32 %v958
    %vm980 = vweird.f32 %v974
    %vm981 = vmor %vm979, %vm980
    %v982 = vsel %vm981, %v974, %v978
    %v983 = vand.u32 2147483647, %v958
    %vm984 = vcmp.eq.f32.partialorder %v983, 8.507059e+37
    %v985 = vand.u32 %v958, 2147483648
    %v986 = vor.u32 1.1754944e-38, %v985
    %v987 = vsel %vm984, %v986, %v982
    %v988 = vmul.f32 1.0, %v987
    %v989 = vtanh.pop %v950
    %v990 = vmul.f32 %v973, %v911
    %v991 = vmul.f32 %v973, %v989
    %993 = vrot.lane.b32.xlu0 %v991, 64
    %v994 = vpop.permute.xlu0 %993
    %v996 = vadd.f32 %v990, %v994
    %v997 = vtanh.pop %v996
    %v998 = vmul.f32 %v988, %v997
    %v999 = vld [vmem:[#allocation2 + $0x70] sm:$0xff]
    %v1000 = vld [vmem:[#allocation2 + $0x78] sm:$0xff]
    %v1001 = vpack.c.bf16 %v998, %v998
    %1003 = vrot.lane.b32.xlu0 %v1001, 64
    %v1004 = vpop.permute.xlu0 %1003
    %v1006 = vsel %vm409, %v1004, 0
    %1008 = vmatpush.bf16.msra.mxu0 0
    %1009 = vmatpush.bf16.msra.mxu0 0
    %1010 = vmatpush.bf16.msra.mxu0 0
    %1011 = vmatpush.bf16.msra.mxu0 0
    %1012 = vmatpush.bf16.msra.mxu0 %v399
    %1013 = vmatpush.bf16.msra.mxu0 %v397
    %1014 = vmatpush.bf16.msra.mxu0 %v395
    %1015 = vmatpush.bf16.msra.mxu0 %v393
    %1016 = vmatmul.bf16.gmra.mxu0 %v1006
    %v1017 = vpop.f32.mrf.mxu0
    %v1018 = vadd.f32 0.0, %v1017
    %v1019 = vpop.f32.mrf.mxu0
    %1020 = vdwg.mxu0
    %1021 = vmatpush.bf16.msra.mxu0 0
    %1022 = vmatpush.bf16.msra.mxu0 0
    %1023 = vmatpush.bf16.msra.mxu0 0
    %1024 = vmatpush.bf16.msra.mxu0 0
    %1025 = vmatpush.bf16.msra.mxu0 %v400
    %1026 = vmatpush.bf16.msra.mxu0 %v398
    %1027 = vmatpush.bf16.msra.mxu0 %v396
    %1028 = vmatpush.bf16.msra.mxu0 %v394
    %1029 = vmatmul.bf16.gmra.mxu0 %v1006
    %v1030 = vpop.f32.mrf.mxu0
    %v1031 = vadd.f32 0.0, %v1030
    %v1032 = vpop.f32.mrf.mxu0
    %1033 = vdwg.mxu0
    %v1034 = vadd.f32 %v999, %v1018
    %v1035 = vadd.f32 %v1000, %v1031
    %v1036 = vxor.u32 %v1034, 2147483648
    %v1037 = vxor.u32 %v1035, 2147483648
    %v1038 = vmul.f32 %v1036, 1.442695
    %v1039 = vpow.pop %v1038
    %v1040 = vmul.f32 %v1037, 1.442695
    %v1041 = vpow.pop %v1040
    %v1042 = vadd.f32 %v1039, 1.0
    %v1043 = vadd.f32 %v1041, 1.0
    %v1044 = vrcp.pop %v1042
    %v1045 = vmul.f32 %v1042, %v1044
    %v1046 = vsub.f32 1.0, %v1045
    %v1047 = vmul.f32 %v1044, %v1046
    %v1048 = vadd.f32 %v1044, %v1047
    %vm1049 = vweird.f32 %v1042
    %vm1050 = vweird.f32 %v1044
    %vm1051 = vmor %vm1049, %vm1050
    %v1052 = vsel %vm1051, %v1044, %v1048
    %v1053 = vand.u32 2147483647, %v1042
    %vm1054 = vcmp.eq.f32.partialorder %v1053, 8.507059e+37
    %v1055 = vand.u32 %v1042, 2147483648
    %v1056 = vor.u32 1.1754944e-38, %v1055
    %v1057 = vsel %vm1054, %v1056, %v1052
    %v1058 = vmul.f32 1.0, %v1057
    %v1059 = vrcp.pop %v1043
    %v1060 = vmul.f32 %v1043, %v1059
    %v1061 = vsub.f32 1.0, %v1060
    %v1062 = vmul.f32 %v1059, %v1061
    %v1063 = vadd.f32 %v1059, %v1062
    %vm1064 = vweird.f32 %v1043
    %vm1065 = vweird.f32 %v1059
    %vm1066 = vmor %vm1064, %vm1065
    %v1067 = vsel %vm1066, %v1059, %v1063
    %v1068 = vand.u32 2147483647, %v1043
    %vm1069 = vcmp.eq.f32.partialorder %v1068, 8.507059e+37
    %v1070 = vand.u32 %v1043, 2147483648
    %v1071 = vor.u32 1.1754944e-38, %v1070
    %v1072 = vsel %vm1069, %v1071, %v1067
    %v1073 = vmul.f32 1.0, %v1072
    %v1074 = vtanh.pop %v1035
    %v1075 = vmul.f32 %v1058, %v996
    %v1076 = vmul.f32 %v1058, %v1074
    %1078 = vrot.lane.b32.xlu0 %v1076, 64
    %v1079 = vpop.permute.xlu0 %1078
    %v1081 = vadd.f32 %v1075, %v1079
    %v1082 = vtanh.pop %v1081
    %v1083 = vmul.f32 %v1073, %v1082
    %v1084 = vld [vmem:[#allocation2 + $0x80] sm:$0xff]
    %v1085 = vld [vmem:[#allocation2 + $0x88] sm:$0xff]
    %v1086 = vpack.c.bf16 %v1083, %v1083
    %1088 = vrot.lane.b32.xlu0 %v1086, 64
    %v1089 = vpop.permute.xlu0 %1088
    %v1091 = vsel %vm409, %v1089, 0
    %1093 = vmatpush.bf16.msra.mxu0 0
    %1094 = vmatpush.bf16.msra.mxu0 0
    %1095 = vmatpush.bf16.msra.mxu0 0
    %1096 = vmatpush.bf16.msra.mxu0 0
    %1097 = vmatpush.bf16.msra.mxu0 %v399
    %1098 = vmatpush.bf16.msra.mxu0 %v397
    %1099 = vmatpush.bf16.msra.mxu0 %v395
    %1100 = vmatpush.bf16.msra.mxu0 %v393
    %1101 = vmatmul.bf16.gmra.mxu0 %v1091
    %v1102 = vpop.f32.mrf.mxu0
    %v1103 = vadd.f32 0.0, %v1102
    %v1104 = vpop.f32.mrf.mxu0
    %1105 = vdwg.mxu0
    %1106 = vmatpush.bf16.msra.mxu0 0
    %1107 = vmatpush.bf16.msra.mxu0 0
    %1108 = vmatpush.bf16.msra.mxu0 0
    %1109 = vmatpush.bf16.msra.mxu0 0
    %1110 = vmatpush.bf16.msra.mxu0 %v400
    %1111 = vmatpush.bf16.msra.mxu0 %v398
    %1112 = vmatpush.bf16.msra.mxu0 %v396
    %1113 = vmatpush.bf16.msra.mxu0 %v394
    %1114 = vmatmul.bf16.gmra.mxu0 %v1091
    %v1115 = vpop.f32.mrf.mxu0
    %v1116 = vadd.f32 0.0, %v1115
    %v1117 = vpop.f32.mrf.mxu0
    %1118 = vdwg.mxu0
    %v1119 = vadd.f32 %v1084, %v1103
    %v1120 = vadd.f32 %v1085, %v1116
    %v1121 = vxor.u32 %v1119, 2147483648
    %v1122 = vxor.u32 %v1120, 2147483648
    %v1123 = vmul.f32 %v1121, 1.442695
    %v1124 = vpow.pop %v1123
    %v1125 = vmul.f32 %v1122, 1.442695
    %v1126 = vpow.pop %v1125
    %v1127 = vadd.f32 %v1124, 1.0
    %v1128 = vadd.f32 %v1126, 1.0
    %v1129 = vrcp.pop %v1127
    %v1130 = vmul.f32 %v1127, %v1129
    %v1131 = vsub.f32 1.0, %v1130
    %v1132 = vmul.f32 %v1129, %v1131
    %v1133 = vadd.f32 %v1129, %v1132
    %vm1134 = vweird.f32 %v1127
    %vm1135 = vweird.f32 %v1129
    %vm1136 = vmor %vm1134, %vm1135
    %v1137 = vsel %vm1136, %v1129, %v1133
    %v1138 = vand.u32 2147483647, %v1127
    %vm1139 = vcmp.eq.f32.partialorder %v1138, 8.507059e+37
    %v1140 = vand.u32 %v1127, 2147483648
    %v1141 = vor.u32 1.1754944e-38, %v1140
    %v1142 = vsel %vm1139, %v1141, %v1137
    %v1143 = vmul.f32 1.0, %v1142
    %v1144 = vrcp.pop %v1128
    %v1145 = vmul.f32 %v1128, %v1144
    %v1146 = vsub.f32 1.0, %v1145
    %v1147 = vmul.f32 %v1144, %v1146
    %v1148 = vadd.f32 %v1144, %v1147
    %vm1149 = vweird.f32 %v1128
    %vm1150 = vweird.f32 %v1144
    %vm1151 = vmor %vm1149, %vm1150
    %v1152 = vsel %vm1151, %v1144, %v1148
    %v1153 = vand.u32 2147483647, %v1128
    %vm1154 = vcmp.eq.f32.partialorder %v1153, 8.507059e+37
    %v1155 = vand.u32 %v1128, 2147483648
    %v1156 = vor.u32 1.1754944e-38, %v1155
    %v1157 = vsel %vm1154, %v1156, %v1152
    %v1158 = vmul.f32 1.0, %v1157
    %v1159 = vtanh.pop %v1120
    %v1160 = vmul.f32 %v1143, %v1081
    %v1161 = vmul.f32 %v1143, %v1159
    %1163 = vrot.lane.b32.xlu0 %v1161, 64
    %v1164 = vpop.permute.xlu0 %1163
    %v1166 = vadd.f32 %v1160, %v1164
    %v1167 = vtanh.pop %v1166
    %v1168 = vmul.f32 %v1158, %v1167
    %v1169 = vld [vmem:[#allocation2 + $0x90] sm:$0xff]
    %v1170 = vld [vmem:[#allocation2 + $0x98] sm:$0xff]
    %v1171 = vpack.c.bf16 %v1168, %v1168
    %1173 = vrot.lane.b32.xlu0 %v1171, 64
    %v1174 = vpop.permute.xlu0 %1173
    %v1176 = vsel %vm409, %v1174, 0
    %1178 = vmatpush.bf16.msra.mxu0 0
    %1179 = vmatpush.bf16.msra.mxu0 0
    %1180 = vmatpush.bf16.msra.mxu0 0
    %1181 = vmatpush.bf16.msra.mxu0 0
    %1182 = vmatpush.bf16.msra.mxu0 %v399
    %1183 = vmatpush.bf16.msra.mxu0 %v397
    %1184 = vmatpush.bf16.msra.mxu0 %v395
    %1185 = vmatpush.bf16.msra.mxu0 %v393
    %1186 = vmatmul.bf16.gmra.mxu0 %v1176
    %v1187 = vpop.f32.mrf.mxu0
    %v1188 = vadd.f32 0.0, %v1187
    %v1189 = vpop.f32.mrf.mxu0
    %1190 = vdwg.mxu0
    %1191 = vmatpush.bf16.msra.mxu0 0
    %1192 = vmatpush.bf16.msra.mxu0 0
    %1193 = vmatpush.bf16.msra.mxu0 0
    %1194 = vmatpush.bf16.msra.mxu0 0
    %1195 = vmatpush.bf16.msra.mxu0 %v400
    %1196 = vmatpush.bf16.msra.mxu0 %v398
    %1197 = vmatpush.bf16.msra.mxu0 %v396
    %1198 = vmatpush.bf16.msra.mxu0 %v394
    %1199 = vmatmul.bf16.gmra.mxu0 %v1176
    %v1200 = vpop.f32.mrf.mxu0
    %v1201 = vadd.f32 0.0, %v1200
    %v1202 = vpop.f32.mrf.mxu0
    %1203 = vdwg.mxu0
    %v1204 = vadd.f32 %v1169, %v1188
    %v1205 = vadd.f32 %v1170, %v1201
    %v1206 = vxor.u32 %v1204, 2147483648
    %v1207 = vxor.u32 %v1205, 2147483648
    %v1208 = vmul.f32 %v1206, 1.442695
    %v1209 = vpow.pop %v1208
    %v1210 = vmul.f32 %v1207, 1.442695
    %v1211 = vpow.pop %v1210
    %v1212 = vadd.f32 %v1209, 1.0
    %v1213 = vadd.f32 %v1211, 1.0
    %v1214 = vrcp.pop %v1212
    %v1215 = vmul.f32 %v1212, %v1214
    %v1216 = vsub.f32 1.0, %v1215
    %v1217 = vmul.f32 %v1214, %v1216
    %v1218 = vadd.f32 %v1214, %v1217
    %vm1219 = vweird.f32 %v1212
    %vm1220 = vweird.f32 %v1214
    %vm1221 = vmor %vm1219, %vm1220
    %v1222 = vsel %vm1221, %v1214, %v1218
    %v1223 = vand.u32 2147483647, %v1212
    %vm1224 = vcmp.eq.f32.partialorder %v1223, 8.507059e+37
    %v1225 = vand.u32 %v1212, 2147483648
    %v1226 = vor.u32 1.1754944e-38, %v1225
    %v1227 = vsel %vm1224, %v1226, %v1222
    %v1228 = vmul.f32 1.0, %v1227
    %v1229 = vrcp.pop %v1213
    %v1230 = vmul.f32 %v1213, %v1229
    %v1231 = vsub.f32 1.0, %v1230
    %v1232 = vmul.f32 %v1229, %v1231
    %v1233 = vadd.f32 %v1229, %v1232
    %vm1234 = vweird.f32 %v1213
    %vm1235 = vweird.f32 %v1229
    %vm1236 = vmor %vm1234, %vm1235
    %v1237 = vsel %vm1236, %v1229, %v1233
    %v1238 = vand.u32 2147483647, %v1213
    %vm1239 = vcmp.eq.f32.partialorder %v1238, 8.507059e+37
    %v1240 = vand.u32 %v1213, 2147483648
    %v1241 = vor.u32 1.1754944e-38, %v1240
    %v1242 = vsel %vm1239, %v1241, %v1237
    %v1243 = vmul.f32 1.0, %v1242
    %v1244 = vtanh.pop %v1205
    %v1245 = vmul.f32 %v1228, %v1166
    %v1246 = vmul.f32 %v1228, %v1244
    %1248 = vrot.lane.b32.xlu0 %v1246, 64
    %v1249 = vpop.permute.xlu0 %1248
    %v1251 = vadd.f32 %v1245, %v1249
    %v1252 = vtanh.pop %v1251
    %v1253 = vmul.f32 %v1243, %v1252
    %v1254 = vld [vmem:[#allocation2 + $0xa0] sm:$0xff]
    %v1255 = vld [vmem:[#allocation2 + $0xa8] sm:$0xff]
    %v1256 = vpack.c.bf16 %v1253, %v1253
    %1258 = vrot.lane.b32.xlu0 %v1256, 64
    %v1259 = vpop.permute.xlu0 %1258
    %v1261 = vsel %vm409, %v1259, 0
    %1263 = vmatpush.bf16.msra.mxu0 0
    %1264 = vmatpush.bf16.msra.mxu0 0
    %1265 = vmatpush.bf16.msra.mxu0 0
    %1266 = vmatpush.bf16.msra.mxu0 0
    %1267 = vmatpush.bf16.msra.mxu0 %v399
    %1268 = vmatpush.bf16.msra.mxu0 %v397
    %1269 = vmatpush.bf16.msra.mxu0 %v395
    %1270 = vmatpush.bf16.msra.mxu0 %v393
    %1271 = vmatmul.bf16.gmra.mxu0 %v1261
    %v1272 = vpop.f32.mrf.mxu0
    %v1273 = vadd.f32 0.0, %v1272
    %v1274 = vpop.f32.mrf.mxu0
    %1275 = vdwg.mxu0
    %1276 = vmatpush.bf16.msra.mxu0 0
    %1277 = vmatpush.bf16.msra.mxu0 0
    %1278 = vmatpush.bf16.msra.mxu0 0
    %1279 = vmatpush.bf16.msra.mxu0 0
    %1280 = vmatpush.bf16.msra.mxu0 %v400
    %1281 = vmatpush.bf16.msra.mxu0 %v398
    %1282 = vmatpush.bf16.msra.mxu0 %v396
    %1283 = vmatpush.bf16.msra.mxu0 %v394
    %1284 = vmatmul.bf16.gmra.mxu0 %v1261
    %v1285 = vpop.f32.mrf.mxu0
    %v1286 = vadd.f32 0.0, %v1285
    %v1287 = vpop.f32.mrf.mxu0
    %1288 = vdwg.mxu0
    %v1289 = vadd.f32 %v1254, %v1273
    %v1290 = vadd.f32 %v1255, %v1286
    %v1291 = vxor.u32 %v1289, 2147483648
    %v1292 = vxor.u32 %v1290, 2147483648
    %v1293 = vmul.f32 %v1291, 1.442695
    %v1294 = vpow.pop %v1293
    %v1295 = vmul.f32 %v1292, 1.442695
    %v1296 = vpow.pop %v1295
    %v1297 = vadd.f32 %v1294, 1.0
    %v1298 = vadd.f32 %v1296, 1.0
    %v1299 = vrcp.pop %v1297
    %v1300 = vmul.f32 %v1297, %v1299
    %v1301 = vsub.f32 1.0, %v1300
    %v1302 = vmul.f32 %v1299, %v1301
    %v1303 = vadd.f32 %v1299, %v1302
    %vm1304 = vweird.f32 %v1297
    %vm1305 = vweird.f32 %v1299
    %vm1306 = vmor %vm1304, %vm1305
    %v1307 = vsel %vm1306, %v1299, %v1303
    %v1308 = vand.u32 2147483647, %v1297
    %vm1309 = vcmp.eq.f32.partialorder %v1308, 8.507059e+37
    %v1310 = vand.u32 %v1297, 2147483648
    %v1311 = vor.u32 1.1754944e-38, %v1310
    %v1312 = vsel %vm1309, %v1311, %v1307
    %v1313 = vmul.f32 1.0, %v1312
    %v1314 = vrcp.pop %v1298
    %v1315 = vmul.f32 %v1298, %v1314
    %v1316 = vsub.f32 1.0, %v1315
    %v1317 = vmul.f32 %v1314, %v1316
    %v1318 = vadd.f32 %v1314, %v1317
    %vm1319 = vweird.f32 %v1298
    %vm1320 = vweird.f32 %v1314
    %vm1321 = vmor %vm1319, %vm1320
    %v1322 = vsel %vm1321, %v1314, %v1318
    %v1323 = vand.u32 2147483647, %v1298
    %vm1324 = vcmp.eq.f32.partialorder %v1323, 8.507059e+37
    %v1325 = vand.u32 %v1298, 2147483648
    %v1326 = vor.u32 1.1754944e-38, %v1325
    %v1327 = vsel %vm1324, %v1326, %v1322
    %v1328 = vmul.f32 1.0, %v1327
    %v1329 = vtanh.pop %v1290
    %v1330 = vmul.f32 %v1313, %v1251
    %v1331 = vmul.f32 %v1313, %v1329
    %1333 = vrot.lane.b32.xlu0 %v1331, 64
    %v1334 = vpop.permute.xlu0 %1333
    %v1336 = vadd.f32 %v1330, %v1334
    %v1337 = vtanh.pop %v1336
    %v1338 = vmul.f32 %v1328, %v1337
    %v1339 = vld [vmem:[#allocation2 + $0xb0] sm:$0xff]
    %v1340 = vld [vmem:[#allocation2 + $0xb8] sm:$0xff]
    %v1341 = vpack.c.bf16 %v1338, %v1338
    %1343 = vrot.lane.b32.xlu0 %v1341, 64
    %v1344 = vpop.permute.xlu0 %1343
    %v1346 = vsel %vm409, %v1344, 0
    %1348 = vmatpush.bf16.msra.mxu0 0
    %1349 = vmatpush.bf16.msra.mxu0 0
    %1350 = vmatpush.bf16.msra.mxu0 0
    %1351 = vmatpush.bf16.msra.mxu0 0
    %1352 = vmatpush.bf16.msra.mxu0 %v399
    %1353 = vmatpush.bf16.msra.mxu0 %v397
    %1354 = vmatpush.bf16.msra.mxu0 %v395
    %1355 = vmatpush.bf16.msra.mxu0 %v393
    %1356 = vmatmul.bf16.gmra.mxu0 %v1346
    %v1357 = vpop.f32.mrf.mxu0
    %v1358 = vadd.f32 0.0, %v1357
    %v1359 = vpop.f32.mrf.mxu0
    %1360 = vdwg.mxu0
    %1361 = vmatpush.bf16.msra.mxu0 0
    %1362 = vmatpush.bf16.msra.mxu0 0
    %1363 = vmatpush.bf16.msra.mxu0 0
    %1364 = vmatpush.bf16.msra.mxu0 0
    %1365 = vmatpush.bf16.msra.mxu0 %v400
    %1366 = vmatpush.bf16.msra.mxu0 %v398
    %1367 = vmatpush.bf16.msra.mxu0 %v396
    %1368 = vmatpush.bf16.msra.mxu0 %v394
    %1369 = vmatmul.bf16.gmra.mxu0 %v1346
    %v1370 = vpop.f32.mrf.mxu0
    %v1371 = vadd.f32 0.0, %v1370
    %v1372 = vpop.f32.mrf.mxu0
    %1373 = vdwg.mxu0
    %v1374 = vadd.f32 %v1339, %v1358
    %v1375 = vadd.f32 %v1340, %v1371
    %v1376 = vxor.u32 %v1374, 2147483648
    %v1377 = vxor.u32 %v1375, 2147483648
    %v1378 = vmul.f32 %v1376, 1.442695
    %v1379 = vpow.pop %v1378
    %v1380 = vmul.f32 %v1377, 1.442695
    %v1381 = vpow.pop %v1380
    %v1382 = vadd.f32 %v1379, 1.0
    %v1383 = vadd.f32 %v1381, 1.0
    %v1384 = vrcp.pop %v1382
    %v1385 = vmul.f32 %v1382, %v1384
    %v1386 = vsub.f32 1.0, %v1385
    %v1387 = vmul.f32 %v1384, %v1386
    %v1388 = vadd.f32 %v1384, %v1387
    %vm1389 = vweird.f32 %v1382
    %vm1390 = vweird.f32 %v1384
    %vm1391 = vmor %vm1389, %vm1390
    %v1392 = vsel %vm1391, %v1384, %v1388
    %v1393 = vand.u32 2147483647, %v1382
    %vm1394 = vcmp.eq.f32.partialorder %v1393, 8.507059e+37
    %v1395 = vand.u32 %v1382, 2147483648
    %v1396 = vor.u32 1.1754944e-38, %v1395
    %v1397 = vsel %vm1394, %v1396, %v1392
    %v1398 = vmul.f32 1.0, %v1397
    %v1399 = vrcp.pop %v1383
    %v1400 = vmul.f32 %v1383, %v1399
    %v1401 = vsub.f32 1.0, %v1400
    %v1402 = vmul.f32 %v1399, %v1401
    %v1403 = vadd.f32 %v1399, %v1402
    %vm1404 = vweird.f32 %v1383
    %vm1405 = vweird.f32 %v1399
    %vm1406 = vmor %vm1404, %vm1405
    %v1407 = vsel %vm1406, %v1399, %v1403
    %v1408 = vand.u32 2147483647, %v1383
    %vm1409 = vcmp.eq.f32.partialorder %v1408, 8.507059e+37
    %v1410 = vand.u32 %v1383, 2147483648
    %v1411 = vor.u32 1.1754944e-38, %v1410
    %v1412 = vsel %vm1409, %v1411, %v1407
    %v1413 = vmul.f32 1.0, %v1412
    %v1414 = vtanh.pop %v1375
    %v1415 = vmul.f32 %v1398, %v1336
    %v1416 = vmul.f32 %v1398, %v1414
    %1418 = vrot.lane.b32.xlu0 %v1416, 64
    %v1419 = vpop.permute.xlu0 %1418
    %v1421 = vadd.f32 %v1415, %v1419
    %v1422 = vtanh.pop %v1421
    %v1423 = vmul.f32 %v1413, %v1422
    %v1424 = vld [vmem:[#allocation2 + $0xc0] sm:$0xff]
    %v1425 = vld [vmem:[#allocation2 + $0xc8] sm:$0xff]
    %v1426 = vpack.c.bf16 %v1423, %v1423
    %1428 = vrot.lane.b32.xlu0 %v1426, 64
    %v1429 = vpop.permute.xlu0 %1428
    %v1431 = vsel %vm409, %v1429, 0
    %1433 = vmatpush.bf16.msra.mxu0 0
    %1434 = vmatpush.bf16.msra.mxu0 0
    %1435 = vmatpush.bf16.msra.mxu0 0
    %1436 = vmatpush.bf16.msra.mxu0 0
    %1437 = vmatpush.bf16.msra.mxu0 %v399
    %1438 = vmatpush.bf16.msra.mxu0 %v397
    %1439 = vmatpush.bf16.msra.mxu0 %v395
    %1440 = vmatpush.bf16.msra.mxu0 %v393
    %1441 = vmatmul.bf16.gmra.mxu0 %v1431
    %v1442 = vpop.f32.mrf.mxu0
    %v1443 = vadd.f32 0.0, %v1442
    %v1444 = vpop.f32.mrf.mxu0
    %1445 = vdwg.mxu0
    %1446 = vmatpush.bf16.msra.mxu0 0
    %1447 = vmatpush.bf16.msra.mxu0 0
    %1448 = vmatpush.bf16.msra.mxu0 0
    %1449 = vmatpush.bf16.msra.mxu0 0
    %1450 = vmatpush.bf16.msra.mxu0 %v400
    %1451 = vmatpush.bf16.msra.mxu0 %v398
    %1452 = vmatpush.bf16.msra.mxu0 %v396
    %1453 = vmatpush.bf16.msra.mxu0 %v394
    %1454 = vmatmul.bf16.gmra.mxu0 %v1431
    %v1455 = vpop.f32.mrf.mxu0
    %v1456 = vadd.f32 0.0, %v1455
    %v1457 = vpop.f32.mrf.mxu0
    %1458 = vdwg.mxu0
    %v1459 = vadd.f32 %v1424, %v1443
    %v1460 = vadd.f32 %v1425, %v1456
    %v1461 = vxor.u32 %v1459, 2147483648
    %v1462 = vxor.u32 %v1460, 2147483648
    %v1463 = vmul.f32 %v1461, 1.442695
    %v1464 = vpow.pop %v1463
    %v1465 = vmul.f32 %v1462, 1.442695
    %v1466 = vpow.pop %v1465
    %v1467 = vadd.f32 %v1464, 1.0
    %v1468 = vadd.f32 %v1466, 1.0
    %v1469 = vrcp.pop %v1467
    %v1470 = vmul.f32 %v1467, %v1469
    %v1471 = vsub.f32 1.0, %v1470
    %v1472 = vmul.f32 %v1469, %v1471
    %v1473 = vadd.f32 %v1469, %v1472
    %vm1474 = vweird.f32 %v1467
    %vm1475 = vweird.f32 %v1469
    %vm1476 = vmor %vm1474, %vm1475
    %v1477 = vsel %vm1476, %v1469, %v1473
    %v1478 = vand.u32 2147483647, %v1467
    %vm1479 = vcmp.eq.f32.partialorder %v1478, 8.507059e+37
    %v1480 = vand.u32 %v1467, 2147483648
    %v1481 = vor.u32 1.1754944e-38, %v1480
    %v1482 = vsel %vm1479, %v1481, %v1477
    %v1483 = vmul.f32 1.0, %v1482
    %v1484 = vrcp.pop %v1468
    %v1485 = vmul.f32 %v1468, %v1484
    %v1486 = vsub.f32 1.0, %v1485
    %v1487 = vmul.f32 %v1484, %v1486
    %v1488 = vadd.f32 %v1484, %v1487
    %vm1489 = vweird.f32 %v1468
    %vm1490 = vweird.f32 %v1484
    %vm1491 = vmor %vm1489, %vm1490
    %v1492 = vsel %vm1491, %v1484, %v1488
    %v1493 = vand.u32 2147483647, %v1468
    %vm1494 = vcmp.eq.f32.partialorder %v1493, 8.507059e+37
    %v1495 = vand.u32 %v1468, 2147483648
    %v1496 = vor.u32 1.1754944e-38, %v1495
    %v1497 = vsel %vm1494, %v1496, %v1492
    %v1498 = vmul.f32 1.0, %v1497
    %v1499 = vtanh.pop %v1460
    %v1500 = vmul.f32 %v1483, %v1421
    %v1501 = vmul.f32 %v1483, %v1499
    %1503 = vrot.lane.b32.xlu0 %v1501, 64
    %v1504 = vpop.permute.xlu0 %1503
    %v1506 = vadd.f32 %v1500, %v1504
    %v1507 = vtanh.pop %v1506
    %v1508 = vmul.f32 %v1498, %v1507
    %v1509 = vld [vmem:[#allocation2 + $0xd0] sm:$0xff]
    %v1510 = vld [vmem:[#allocation2 + $0xd8] sm:$0xff]
    %v1511 = vpack.c.bf16 %v1508, %v1508
    %1513 = vrot.lane.b32.xlu0 %v1511, 64
    %v1514 = vpop.permute.xlu0 %1513
    %v1516 = vsel %vm409, %v1514, 0
    %1518 = vmatpush.bf16.msra.mxu0 0
    %1519 = vmatpush.bf16.msra.mxu0 0
    %1520 = vmatpush.bf16.msra.mxu0 0
    %1521 = vmatpush.bf16.msra.mxu0 0
    %1522 = vmatpush.bf16.msra.mxu0 %v399
    %1523 = vmatpush.bf16.msra.mxu0 %v397
    %1524 = vmatpush.bf16.msra.mxu0 %v395
    %1525 = vmatpush.bf16.msra.mxu0 %v393
    %1526 = vmatmul.bf16.gmra.mxu0 %v1516
    %v1527 = vpop.f32.mrf.mxu0
    %v1528 = vadd.f32 0.0, %v1527
    %v1529 = vpop.f32.mrf.mxu0
    %1530 = vdwg.mxu0
    %1531 = vmatpush.bf16.msra.mxu0 0
    %1532 = vmatpush.bf16.msra.mxu0 0
    %1533 = vmatpush.bf16.msra.mxu0 0
    %1534 = vmatpush.bf16.msra.mxu0 0
    %1535 = vmatpush.bf16.msra.mxu0 %v400
    %1536 = vmatpush.bf16.msra.mxu0 %v398
    %1537 = vmatpush.bf16.msra.mxu0 %v396
    %1538 = vmatpush.bf16.msra.mxu0 %v394
    %1539 = vmatmul.bf16.gmra.mxu0 %v1516
    %v1540 = vpop.f32.mrf.mxu0
    %v1541 = vadd.f32 0.0, %v1540
    %v1542 = vpop.f32.mrf.mxu0
    %1543 = vdwg.mxu0
    %v1544 = vadd.f32 %v1509, %v1528
    %v1545 = vadd.f32 %v1510, %v1541
    %v1546 = vxor.u32 %v1544, 2147483648
    %v1547 = vxor.u32 %v1545, 2147483648
    %v1548 = vmul.f32 %v1546, 1.442695
    %v1549 = vpow.pop %v1548
    %v1550 = vmul.f32 %v1547, 1.442695
    %v1551 = vpow.pop %v1550
    %v1552 = vadd.f32 %v1549, 1.0
    %v1553 = vadd.f32 %v1551, 1.0
    %v1554 = vrcp.pop %v1552
    %v1555 = vmul.f32 %v1552, %v1554
    %v1556 = vsub.f32 1.0, %v1555
    %v1557 = vmul.f32 %v1554, %v1556
    %v1558 = vadd.f32 %v1554, %v1557
    %vm1559 = vweird.f32 %v1552
    %vm1560 = vweird.f32 %v1554
    %vm1561 = vmor %vm1559, %vm1560
    %v1562 = vsel %vm1561, %v1554, %v1558
    %v1563 = vand.u32 2147483647, %v1552
    %vm1564 = vcmp.eq.f32.partialorder %v1563, 8.507059e+37
    %v1565 = vand.u32 %v1552, 2147483648
    %v1566 = vor.u32 1.1754944e-38, %v1565
    %v1567 = vsel %vm1564, %v1566, %v1562
    %v1568 = vmul.f32 1.0, %v1567
    %v1569 = vrcp.pop %v1553
    %v1570 = vmul.f32 %v1553, %v1569
    %v1571 = vsub.f32 1.0, %v1570
    %v1572 = vmul.f32 %v1569, %v1571
    %v1573 = vadd.f32 %v1569, %v1572
    %vm1574 = vweird.f32 %v1553
    %vm1575 = vweird.f32 %v1569
    %vm1576 = vmor %vm1574, %vm1575
    %v1577 = vsel %vm1576, %v1569, %v1573
    %v1578 = vand.u32 2147483647, %v1553
    %vm1579 = vcmp.eq.f32.partialorder %v1578, 8.507059e+37
    %v1580 = vand.u32 %v1553, 2147483648
    %v1581 = vor.u32 1.1754944e-38, %v1580
    %v1582 = vsel %vm1579, %v1581, %v1577
    %v1583 = vmul.f32 1.0, %v1582
    %v1584 = vtanh.pop %v1545
    %v1585 = vmul.f32 %v1568, %v1506
    %v1586 = vmul.f32 %v1568, %v1584
    %1588 = vrot.lane.b32.xlu0 %v1586, 64
    %v1589 = vpop.permute.xlu0 %1588
    %v1591 = vadd.f32 %v1585, %v1589
    %v1592 = vtanh.pop %v1591
    %v1593 = vmul.f32 %v1583, %v1592
    %v1594 = vld [vmem:[#allocation2 + $0xe0] sm:$0xff]
    %v1595 = vld [vmem:[#allocation2 + $0xe8] sm:$0xff]
    %v1596 = vpack.c.bf16 %v1593, %v1593
    %1598 = vrot.lane.b32.xlu0 %v1596, 64
    %v1599 = vpop.permute.xlu0 %1598
    %v1601 = vsel %vm409, %v1599, 0
    %1603 = vmatpush.bf16.msra.mxu0 0
    %1604 = vmatpush.bf16.msra.mxu0 0
    %1605 = vmatpush.bf16.msra.mxu0 0
    %1606 = vmatpush.bf16.msra.mxu0 0
    %1607 = vmatpush.bf16.msra.mxu0 %v399
    %1608 = vmatpush.bf16.msra.mxu0 %v397
    %1609 = vmatpush.bf16.msra.mxu0 %v395
    %1610 = vmatpush.bf16.msra.mxu0 %v393
    %1611 = vmatmul.bf16.gmra.mxu0 %v1601
    %v1612 = vpop.f32.mrf.mxu0
    %v1613 = vadd.f32 0.0, %v1612
    %v1614 = vpop.f32.mrf.mxu0
    %1615 = vdwg.mxu0
    %1616 = vmatpush.bf16.msra.mxu0 0
    %1617 = vmatpush.bf16.msra.mxu0 0
    %1618 = vmatpush.bf16.msra.mxu0 0
    %1619 = vmatpush.bf16.msra.mxu0 0
    %1620 = vmatpush.bf16.msra.mxu0 %v400
    %1621 = vmatpush.bf16.msra.mxu0 %v398
    %1622 = vmatpush.bf16.msra.mxu0 %v396
    %1623 = vmatpush.bf16.msra.mxu0 %v394
    %1624 = vmatmul.bf16.gmra.mxu0 %v1601
    %v1625 = vpop.f32.mrf.mxu0
    %v1626 = vadd.f32 0.0, %v1625
    %v1627 = vpop.f32.mrf.mxu0
    %1628 = vdwg.mxu0
    %v1629 = vadd.f32 %v1594, %v1613
    %v1630 = vadd.f32 %v1595, %v1626
    %v1631 = vxor.u32 %v1629, 2147483648
    %v1632 = vxor.u32 %v1630, 2147483648
    %v1633 = vmul.f32 %v1631, 1.442695
    %v1634 = vpow.pop %v1633
    %v1635 = vmul.f32 %v1632, 1.442695
    %v1636 = vpow.pop %v1635
    %v1637 = vadd.f32 %v1634, 1.0
    %v1638 = vadd.f32 %v1636, 1.0
    %v1639 = vrcp.pop %v1637
    %v1640 = vmul.f32 %v1637, %v1639
    %v1641 = vsub.f32 1.0, %v1640
    %v1642 = vmul.f32 %v1639, %v1641
    %v1643 = vadd.f32 %v1639, %v1642
    %vm1644 = vweird.f32 %v1637
    %vm1645 = vweird.f32 %v1639
    %vm1646 = vmor %vm1644, %vm1645
    %v1647 = vsel %vm1646, %v1639, %v1643
    %v1648 = vand.u32 2147483647, %v1637
    %vm1649 = vcmp.eq.f32.partialorder %v1648, 8.507059e+37
    %v1650 = vand.u32 %v1637, 2147483648
    %v1651 = vor.u32 1.1754944e-38, %v1650
    %v1652 = vsel %vm1649, %v1651, %v1647
    %v1653 = vmul.f32 1.0, %v1652
    %v1654 = vrcp.pop %v1638
    %v1655 = vmul.f32 %v1638, %v1654
    %v1656 = vsub.f32 1.0, %v1655
    %v1657 = vmul.f32 %v1654, %v1656
    %v1658 = vadd.f32 %v1654, %v1657
    %vm1659 = vweird.f32 %v1638
    %vm1660 = vweird.f32 %v1654
    %vm1661 = vmor %vm1659, %vm1660
    %v1662 = vsel %vm1661, %v1654, %v1658
    %v1663 = vand.u32 2147483647, %v1638
    %vm1664 = vcmp.eq.f32.partialorder %v1663, 8.507059e+37
    %v1665 = vand.u32 %v1638, 2147483648
    %v1666 = vor.u32 1.1754944e-38, %v1665
    %v1667 = vsel %vm1664, %v1666, %v1662
    %v1668 = vmul.f32 1.0, %v1667
    %v1669 = vtanh.pop %v1630
    %v1670 = vmul.f32 %v1653, %v1591
    %v1671 = vmul.f32 %v1653, %v1669
    %1673 = vrot.lane.b32.xlu0 %v1671, 64
    %v1674 = vpop.permute.xlu0 %1673
    %v1676 = vadd.f32 %v1670, %v1674
    %v1677 = vtanh.pop %v1676
    %v1678 = vmul.f32 %v1668, %v1677
    %v1679 = vld [vmem:[#allocation2 + $0xf0] sm:$0xff]
    %v1680 = vld [vmem:[#allocation2 + $0xf8] sm:$0xff]
    %v1681 = vpack.c.bf16 %v1678, %v1678
    %1683 = vrot.lane.b32.xlu0 %v1681, 64
    %v1684 = vpop.permute.xlu0 %1683
    %v1686 = vsel %vm409, %v1684, 0
    %1688 = vmatpush.bf16.msra.mxu0 0
    %1689 = vmatpush.bf16.msra.mxu0 0
    %1690 = vmatpush.bf16.msra.mxu0 0
    %1691 = vmatpush.bf16.msra.mxu0 0
    %1692 = vmatpush.bf16.msra.mxu0 %v399
    %1693 = vmatpush.bf16.msra.mxu0 %v397
    %1694 = vmatpush.bf16.msra.mxu0 %v395
    %1695 = vmatpush.bf16.msra.mxu0 %v393
    %1696 = vmatmul.bf16.gmra.mxu0 %v1686
    %v1697 = vpop.f32.mrf.mxu0
    %v1698 = vadd.f32 0.0, %v1697
    %v1699 = vpop.f32.mrf.mxu0
    %1700 = vdwg.mxu0
    %1701 = vmatpush.bf16.msra.mxu0 0
    %1702 = vmatpush.bf16.msra.mxu0 0
    %1703 = vmatpush.bf16.msra.mxu0 0
    %1704 = vmatpush.bf16.msra.mxu0 0
    %1705 = vmatpush.bf16.msra.mxu0 %v400
    %1706 = vmatpush.bf16.msra.mxu0 %v398
    %1707 = vmatpush.bf16.msra.mxu0 %v396
    %1708 = vmatpush.bf16.msra.mxu0 %v394
    %1709 = vmatmul.bf16.gmra.mxu0 %v1686
    %v1710 = vpop.f32.mrf.mxu0
    %v1711 = vadd.f32 0.0, %v1710
    %v1712 = vpop.f32.mrf.mxu0
    %1713 = vdwg.mxu0
    %v1714 = vadd.f32 %v1679, %v1698
    %v1715 = vadd.f32 %v1680, %v1711
    %v1716 = vxor.u32 %v1714, 2147483648
    %v1717 = vxor.u32 %v1715, 2147483648
    %v1718 = vmul.f32 %v1716, 1.442695
    %v1719 = vpow.pop %v1718
    %v1720 = vmul.f32 %v1717, 1.442695
    %v1721 = vpow.pop %v1720
    %v1722 = vadd.f32 %v1719, 1.0
    %v1723 = vadd.f32 %v1721, 1.0
    %v1724 = vrcp.pop %v1722
    %v1725 = vmul.f32 %v1722, %v1724
    %v1726 = vsub.f32 1.0, %v1725
    %v1727 = vmul.f32 %v1724, %v1726
    %v1728 = vadd.f32 %v1724, %v1727
    %vm1729 = vweird.f32 %v1722
    %vm1730 = vweird.f32 %v1724
    %vm1731 = vmor %vm1729, %vm1730
    %v1732 = vsel %vm1731, %v1724, %v1728
    %v1733 = vand.u32 2147483647, %v1722
    %vm1734 = vcmp.eq.f32.partialorder %v1733, 8.507059e+37
    %v1735 = vand.u32 %v1722, 2147483648
    %v1736 = vor.u32 1.1754944e-38, %v1735
    %v1737 = vsel %vm1734, %v1736, %v1732
    %v1738 = vmul.f32 1.0, %v1737
    %v1739 = vrcp.pop %v1723
    %v1740 = vmul.f32 %v1723, %v1739
    %v1741 = vsub.f32 1.0, %v1740
    %v1742 = vmul.f32 %v1739, %v1741
    %v1743 = vadd.f32 %v1739, %v1742
    %vm1744 = vweird.f32 %v1723
    %vm1745 = vweird.f32 %v1739
    %vm1746 = vmor %vm1744, %vm1745
    %v1747 = vsel %vm1746, %v1739, %v1743
    %v1748 = vand.u32 2147483647, %v1723
    %vm1749 = vcmp.eq.f32.partialorder %v1748, 8.507059e+37
    %v1750 = vand.u32 %v1723, 2147483648
    %v1751 = vor.u32 1.1754944e-38, %v1750
    %v1752 = vsel %vm1749, %v1751, %v1747
    %v1753 = vmul.f32 1.0, %v1752
    %v1754 = vtanh.pop %v1715
    %v1755 = vmul.f32 %v1738, %v1676
    %v1756 = vmul.f32 %v1738, %v1754
    %1758 = vrot.lane.b32.xlu0 %v1756, 64
    %v1759 = vpop.permute.xlu0 %1758
    %v1761 = vadd.f32 %v1755, %v1759
    %v1762 = vtanh.pop %v1761
    %v1763 = vmul.f32 %v1753, %v1762
    %v1764 = vld [vmem:[#allocation2 + $0x100] sm:$0xff]
    %v1765 = vld [vmem:[#allocation2 + $0x108] sm:$0xff]
    %v1766 = vpack.c.bf16 %v1763, %v1763
    %1768 = vrot.lane.b32.xlu0 %v1766, 64
    %v1769 = vpop.permute.xlu0 %1768
    %v1771 = vsel %vm409, %v1769, 0
    %1773 = vmatpush.bf16.msra.mxu0 0
    %1774 = vmatpush.bf16.msra.mxu0 0
    %1775 = vmatpush.bf16.msra.mxu0 0
    %1776 = vmatpush.bf16.msra.mxu0 0
    %1777 = vmatpush.bf16.msra.mxu0 %v399
    %1778 = vmatpush.bf16.msra.mxu0 %v397
    %1779 = vmatpush.bf16.msra.mxu0 %v395
    %1780 = vmatpush.bf16.msra.mxu0 %v393
    %1781 = vmatmul.bf16.gmra.mxu0 %v1771
    %v1782 = vpop.f32.mrf.mxu0
    %v1783 = vadd.f32 0.0, %v1782
    %v1784 = vpop.f32.mrf.mxu0
    %1785 = vdwg.mxu0
    %1786 = vmatpush.bf16.msra.mxu0 0
    %1787 = vmatpush.bf16.msra.mxu0 0
    %1788 = vmatpush.bf16.msra.mxu0 0
    %1789 = vmatpush.bf16.msra.mxu0 0
    %1790 = vmatpush.bf16.msra.mxu0 %v400
    %1791 = vmatpush.bf16.msra.mxu0 %v398
    %1792 = vmatpush.bf16.msra.mxu0 %v396
    %1793 = vmatpush.bf16.msra.mxu0 %v394
    %1794 = vmatmul.bf16.gmra.mxu0 %v1771
    %v1795 = vpop.f32.mrf.mxu0
    %v1796 = vadd.f32 0.0, %v1795
    %v1797 = vpop.f32.mrf.mxu0
    %1798 = vdwg.mxu0
    %v1799 = vadd.f32 %v1764, %v1783
    %v1800 = vadd.f32 %v1765, %v1796
    %v1801 = vxor.u32 %v1799, 2147483648
    %v1802 = vxor.u32 %v1800, 2147483648
    %v1803 = vmul.f32 %v1801, 1.442695
    %v1804 = vpow.pop %v1803
    %v1805 = vmul.f32 %v1802, 1.442695
    %v1806 = vpow.pop %v1805
    %v1807 = vadd.f32 %v1804, 1.0
    %v1808 = vadd.f32 %v1806, 1.0
    %v1809 = vrcp.pop %v1807
    %v1810 = vmul.f32 %v1807, %v1809
    %v1811 = vsub.f32 1.0, %v1810
    %v1812 = vmul.f32 %v1809, %v1811
    %v1813 = vadd.f32 %v1809, %v1812
    %vm1814 = vweird.f32 %v1807
    %vm1815 = vweird.f32 %v1809
    %vm1816 = vmor %vm1814, %vm1815
    %v1817 = vsel %vm1816, %v1809, %v1813
    %v1818 = vand.u32 2147483647, %v1807
    %vm1819 = vcmp.eq.f32.partialorder %v1818, 8.507059e+37
    %v1820 = vand.u32 %v1807, 2147483648
    %v1821 = vor.u32 1.1754944e-38, %v1820
    %v1822 = vsel %vm1819, %v1821, %v1817
    %v1823 = vmul.f32 1.0, %v1822
    %v1824 = vrcp.pop %v1808
    %v1825 = vmul.f32 %v1808, %v1824
    %v1826 = vsub.f32 1.0, %v1825
    %v1827 = vmul.f32 %v1824, %v1826
    %v1828 = vadd.f32 %v1824, %v1827
    %vm1829 = vweird.f32 %v1808
    %vm1830 = vweird.f32 %v1824
    %vm1831 = vmor %vm1829, %vm1830
    %v1832 = vsel %vm1831, %v1824, %v1828
    %v1833 = vand.u32 2147483647, %v1808
    %vm1834 = vcmp.eq.f32.partialorder %v1833, 8.507059e+37
    %v1835 = vand.u32 %v1808, 2147483648
    %v1836 = vor.u32 1.1754944e-38, %v1835
    %v1837 = vsel %vm1834, %v1836, %v1832
    %v1838 = vmul.f32 1.0, %v1837
    %v1839 = vtanh.pop %v1800
    %v1840 = vmul.f32 %v1823, %v1761
    %v1841 = vmul.f32 %v1823, %v1839
    %1843 = vrot.lane.b32.xlu0 %v1841, 64
    %v1844 = vpop.permute.xlu0 %1843
    %v1846 = vadd.f32 %v1840, %v1844
    %v1847 = vtanh.pop %v1846
    %v1848 = vmul.f32 %v1838, %v1847
    %v1849 = vld [vmem:[#allocation2 + $0x110] sm:$0xff]
    %v1850 = vld [vmem:[#allocation2 + $0x118] sm:$0xff]
    %v1851 = vpack.c.bf16 %v1848, %v1848
    %1853 = vrot.lane.b32.xlu0 %v1851, 64
    %v1854 = vpop.permute.xlu0 %1853
    %v1856 = vsel %vm409, %v1854, 0
    %1858 = vmatpush.bf16.msra.mxu0 0
    %1859 = vmatpush.bf16.msra.mxu0 0
    %1860 = vmatpush.bf16.msra.mxu0 0
    %1861 = vmatpush.bf16.msra.mxu0 0
    %1862 = vmatpush.bf16.msra.mxu0 %v399
    %1863 = vmatpush.bf16.msra.mxu0 %v397
    %1864 = vmatpush.bf16.msra.mxu0 %v395
    %1865 = vmatpush.bf16.msra.mxu0 %v393
    %1866 = vmatmul.bf16.gmra.mxu0 %v1856
    %v1867 = vpop.f32.mrf.mxu0
    %v1868 = vadd.f32 0.0, %v1867
    %v1869 = vpop.f32.mrf.mxu0
    %1870 = vdwg.mxu0
    %1871 = vmatpush.bf16.msra.mxu0 0
    %1872 = vmatpush.bf16.msra.mxu0 0
    %1873 = vmatpush.bf16.msra.mxu0 0
    %1874 = vmatpush.bf16.msra.mxu0 0
    %1875 = vmatpush.bf16.msra.mxu0 %v400
    %1876 = vmatpush.bf16.msra.mxu0 %v398
    %1877 = vmatpush.bf16.msra.mxu0 %v396
    %1878 = vmatpush.bf16.msra.mxu0 %v394
    %1879 = vmatmul.bf16.gmra.mxu0 %v1856
    %v1880 = vpop.f32.mrf.mxu0
    %v1881 = vadd.f32 0.0, %v1880
    %v1882 = vpop.f32.mrf.mxu0
    %1883 = vdwg.mxu0
    %v1884 = vadd.f32 %v1849, %v1868
    %v1885 = vadd.f32 %v1850, %v1881
    %v1886 = vxor.u32 %v1884, 2147483648
    %v1887 = vxor.u32 %v1885, 2147483648
    %v1888 = vmul.f32 %v1886, 1.442695
    %v1889 = vpow.pop %v1888
    %v1890 = vmul.f32 %v1887, 1.442695
    %v1891 = vpow.pop %v1890
    %v1892 = vadd.f32 %v1889, 1.0
    %v1893 = vadd.f32 %v1891, 1.0
    %v1894 = vrcp.pop %v1892
    %v1895 = vmul.f32 %v1892, %v1894
    %v1896 = vsub.f32 1.0, %v1895
    %v1897 = vmul.f32 %v1894, %v1896
    %v1898 = vadd.f32 %v1894, %v1897
    %vm1899 = vweird.f32 %v1892
    %vm1900 = vweird.f32 %v1894
    %vm1901 = vmor %vm1899, %vm1900
    %v1902 = vsel %vm1901, %v1894, %v1898
    %v1903 = vand.u32 2147483647, %v1892
    %vm1904 = vcmp.eq.f32.partialorder %v1903, 8.507059e+37
    %v1905 = vand.u32 %v1892, 2147483648
    %v1906 = vor.u32 1.1754944e-38, %v1905
    %v1907 = vsel %vm1904, %v1906, %v1902
    %v1908 = vmul.f32 1.0, %v1907
    %v1909 = vrcp.pop %v1893
    %v1910 = vmul.f32 %v1893, %v1909
    %v1911 = vsub.f32 1.0, %v1910
    %v1912 = vmul.f32 %v1909, %v1911
    %v1913 = vadd.f32 %v1909, %v1912
    %vm1914 = vweird.f32 %v1893
    %vm1915 = vweird.f32 %v1909
    %vm1916 = vmor %vm1914, %vm1915
    %v1917 = vsel %vm1916, %v1909, %v1913
    %v1918 = vand.u32 2147483647, %v1893
    %vm1919 = vcmp.eq.f32.partialorder %v1918, 8.507059e+37
    %v1920 = vand.u32 %v1893, 2147483648
    %v1921 = vor.u32 1.1754944e-38, %v1920
    %v1922 = vsel %vm1919, %v1921, %v1917
    %v1923 = vmul.f32 1.0, %v1922
    %v1924 = vtanh.pop %v1885
    %v1925 = vmul.f32 %v1908, %v1846
    %v1926 = vmul.f32 %v1908, %v1924
    %1928 = vrot.lane.b32.xlu0 %v1926, 64
    %v1929 = vpop.permute.xlu0 %1928
    %v1931 = vadd.f32 %v1925, %v1929
    %v1932 = vtanh.pop %v1931
    %v1933 = vmul.f32 %v1923, %v1932
    %v1934 = vld [vmem:[#allocation2 + $0x120] sm:$0xff]
    %v1935 = vld [vmem:[#allocation2 + $0x128] sm:$0xff]
    %v1936 = vpack.c.bf16 %v1933, %v1933
    %1938 = vrot.lane.b32.xlu0 %v1936, 64
    %v1939 = vpop.permute.xlu0 %1938
    %v1941 = vsel %vm409, %v1939, 0
    %1943 = vmatpush.bf16.msra.mxu0 0
    %1944 = vmatpush.bf16.msra.mxu0 0
    %1945 = vmatpush.bf16.msra.mxu0 0
    %1946 = vmatpush.bf16.msra.mxu0 0
    %1947 = vmatpush.bf16.msra.mxu0 %v399
    %1948 = vmatpush.bf16.msra.mxu0 %v397
    %1949 = vmatpush.bf16.msra.mxu0 %v395
    %1950 = vmatpush.bf16.msra.mxu0 %v393
    %1951 = vmatmul.bf16.gmra.mxu0 %v1941
    %v1952 = vpop.f32.mrf.mxu0
    %v1953 = vadd.f32 0.0, %v1952
    %v1954 = vpop.f32.mrf.mxu0
    %1955 = vdwg.mxu0
    %1956 = vmatpush.bf16.msra.mxu0 0
    %1957 = vmatpush.bf16.msra.mxu0 0
    %1958 = vmatpush.bf16.msra.mxu0 0
    %1959 = vmatpush.bf16.msra.mxu0 0
    %1960 = vmatpush.bf16.msra.mxu0 %v400
    %1961 = vmatpush.bf16.msra.mxu0 %v398
    %1962 = vmatpush.bf16.msra.mxu0 %v396
    %1963 = vmatpush.bf16.msra.mxu0 %v394
    %1964 = vmatmul.bf16.gmra.mxu0 %v1941
    %v1965 = vpop.f32.mrf.mxu0
    %v1966 = vadd.f32 0.0, %v1965
    %v1967 = vpop.f32.mrf.mxu0
    %1968 = vdwg.mxu0
    %v1969 = vadd.f32 %v1934, %v1953
    %v1970 = vadd.f32 %v1935, %v1966
    %v1971 = vxor.u32 %v1969, 2147483648
    %v1972 = vxor.u32 %v1970, 2147483648
    %v1973 = vmul.f32 %v1971, 1.442695
    %v1974 = vpow.pop %v1973
    %v1975 = vmul.f32 %v1972, 1.442695
    %v1976 = vpow.pop %v1975
    %v1977 = vadd.f32 %v1974, 1.0
    %v1978 = vadd.f32 %v1976, 1.0
    %v1979 = vrcp.pop %v1977
    %v1980 = vmul.f32 %v1977, %v1979
    %v1981 = vsub.f32 1.0, %v1980
    %v1982 = vmul.f32 %v1979, %v1981
    %v1983 = vadd.f32 %v1979, %v1982
    %vm1984 = vweird.f32 %v1977
    %vm1985 = vweird.f32 %v1979
    %vm1986 = vmor %vm1984, %vm1985
    %v1987 = vsel %vm1986, %v1979, %v1983
    %v1988 = vand.u32 2147483647, %v1977
    %vm1989 = vcmp.eq.f32.partialorder %v1988, 8.507059e+37
    %v1990 = vand.u32 %v1977, 2147483648
    %v1991 = vor.u32 1.1754944e-38, %v1990
    %v1992 = vsel %vm1989, %v1991, %v1987
    %v1993 = vmul.f32 1.0, %v1992
    %v1994 = vrcp.pop %v1978
    %v1995 = vmul.f32 %v1978, %v1994
    %v1996 = vsub.f32 1.0, %v1995
    %v1997 = vmul.f32 %v1994, %v1996
    %v1998 = vadd.f32 %v1994, %v1997
    %vm1999 = vweird.f32 %v1978
    %vm2000 = vweird.f32 %v1994
    %vm2001 = vmor %vm1999, %vm2000
    %v2002 = vsel %vm2001, %v1994, %v1998
    %v2003 = vand.u32 2147483647, %v1978
    %vm2004 = vcmp.eq.f32.partialorder %v2003, 8.507059e+37
    %v2005 = vand.u32 %v1978, 2147483648
    %v2006 = vor.u32 1.1754944e-38, %v2005
    %v2007 = vsel %vm2004, %v2006, %v2002
    %v2008 = vmul.f32 1.0, %v2007
    %v2009 = vtanh.pop %v1970
    %v2010 = vmul.f32 %v1993, %v1931
    %v2011 = vmul.f32 %v1993, %v2009
    %2013 = vrot.lane.b32.xlu0 %v2011, 64
    %v2014 = vpop.permute.xlu0 %2013
    %v2016 = vadd.f32 %v2010, %v2014
    %v2017 = vtanh.pop %v2016
    %v2018 = vmul.f32 %v2008, %v2017
    %v2019 = vld [vmem:[#allocation2 + $0x130] sm:$0xff]
    %v2020 = vld [vmem:[#allocation2 + $0x138] sm:$0xff]
    %v2021 = vpack.c.bf16 %v2018, %v2018
    %2023 = vrot.lane.b32.xlu0 %v2021, 64
    %v2024 = vpop.permute.xlu0 %2023
    %v2026 = vsel %vm409, %v2024, 0
    %2028 = vmatpush.bf16.msra.mxu0 0
    %2029 = vmatpush.bf16.msra.mxu0 0
    %2030 = vmatpush.bf16.msra.mxu0 0
    %2031 = vmatpush.bf16.msra.mxu0 0
    %2032 = vmatpush.bf16.msra.mxu0 %v399
    %2033 = vmatpush.bf16.msra.mxu0 %v397
    %2034 = vmatpush.bf16.msra.mxu0 %v395
    %2035 = vmatpush.bf16.msra.mxu0 %v393
    %2036 = vmatmul.bf16.gmra.mxu0 %v2026
    %v2037 = vpop.f32.mrf.mxu0
    %v2038 = vadd.f32 0.0, %v2037
    %v2039 = vpop.f32.mrf.mxu0
    %2040 = vdwg.mxu0
    %2041 = vmatpush.bf16.msra.mxu0 0
    %2042 = vmatpush.bf16.msra.mxu0 0
    %2043 = vmatpush.bf16.msra.mxu0 0
    %2044 = vmatpush.bf16.msra.mxu0 0
    %2045 = vmatpush.bf16.msra.mxu0 %v400
    %2046 = vmatpush.bf16.msra.mxu0 %v398
    %2047 = vmatpush.bf16.msra.mxu0 %v396
    %2048 = vmatpush.bf16.msra.mxu0 %v394
    %2049 = vmatmul.bf16.gmra.mxu0 %v2026
    %v2050 = vpop.f32.mrf.mxu0
    %v2051 = vadd.f32 0.0, %v2050
    %v2052 = vpop.f32.mrf.mxu0
    %2053 = vdwg.mxu0
    %v2054 = vadd.f32 %v2019, %v2038
    %v2055 = vadd.f32 %v2020, %v2051
    %v2056 = vxor.u32 %v2054, 2147483648
    %v2057 = vxor.u32 %v2055, 2147483648
    %v2058 = vmul.f32 %v2056, 1.442695
    %v2059 = vpow.pop %v2058
    %v2060 = vmul.f32 %v2057, 1.442695
    %v2061 = vpow.pop %v2060
    %v2062 = vadd.f32 %v2059, 1.0
    %v2063 = vadd.f32 %v2061, 1.0
    %v2064 = vrcp.pop %v2062
    %v2065 = vmul.f32 %v2062, %v2064
    %v2066 = vsub.f32 1.0, %v2065
    %v2067 = vmul.f32 %v2064, %v2066
    %v2068 = vadd.f32 %v2064, %v2067
    %vm2069 = vweird.f32 %v2062
    %vm2070 = vweird.f32 %v2064
    %vm2071 = vmor %vm2069, %vm2070
    %v2072 = vsel %vm2071, %v2064, %v2068
    %v2073 = vand.u32 2147483647, %v2062
    %vm2074 = vcmp.eq.f32.partialorder %v2073, 8.507059e+37
    %v2075 = vand.u32 %v2062, 2147483648
    %v2076 = vor.u32 1.1754944e-38, %v2075
    %v2077 = vsel %vm2074, %v2076, %v2072
    %v2078 = vmul.f32 1.0, %v2077
    %v2079 = vrcp.pop %v2063
    %v2080 = vmul.f32 %v2063, %v2079
    %v2081 = vsub.f32 1.0, %v2080
    %v2082 = vmul.f32 %v2079, %v2081
    %v2083 = vadd.f32 %v2079, %v2082
    %vm2084 = vweird.f32 %v2063
    %vm2085 = vweird.f32 %v2079
    %vm2086 = vmor %vm2084, %vm2085
    %v2087 = vsel %vm2086, %v2079, %v2083
    %v2088 = vand.u32 2147483647, %v2063
    %vm2089 = vcmp.eq.f32.partialorder %v2088, 8.507059e+37
    %v2090 = vand.u32 %v2063, 2147483648
    %v2091 = vor.u32 1.1754944e-38, %v2090
    %v2092 = vsel %vm2089, %v2091, %v2087
    %v2093 = vmul.f32 1.0, %v2092
    %v2094 = vtanh.pop %v2055
    %v2095 = vmul.f32 %v2078, %v2016
    %v2096 = vmul.f32 %v2078, %v2094
    %2098 = vrot.lane.b32.xlu0 %v2096, 64
    %v2099 = vpop.permute.xlu0 %2098
    %v2101 = vadd.f32 %v2095, %v2099
    %v2102 = vtanh.pop %v2101
    %v2103 = vmul.f32 %v2093, %v2102
    %v2104 = vld [vmem:[#allocation2 + $0x140] sm:$0xff]
    %v2105 = vld [vmem:[#allocation2 + $0x148] sm:$0xff]
    %v2106 = vpack.c.bf16 %v2103, %v2103
    %2108 = vrot.lane.b32.xlu0 %v2106, 64
    %v2109 = vpop.permute.xlu0 %2108
    %v2111 = vsel %vm409, %v2109, 0
    %2113 = vmatpush.bf16.msra.mxu0 0
    %2114 = vmatpush.bf16.msra.mxu0 0
    %2115 = vmatpush.bf16.msra.mxu0 0
    %2116 = vmatpush.bf16.msra.mxu0 0
    %2117 = vmatpush.bf16.msra.mxu0 %v399
    %2118 = vmatpush.bf16.msra.mxu0 %v397
    %2119 = vmatpush.bf16.msra.mxu0 %v395
    %2120 = vmatpush.bf16.msra.mxu0 %v393
    %2121 = vmatmul.bf16.gmra.mxu0 %v2111
    %v2122 = vpop.f32.mrf.mxu0
    %v2123 = vadd.f32 0.0, %v2122
    %v2124 = vpop.f32.mrf.mxu0
    %2125 = vdwg.mxu0
    %2126 = vmatpush.bf16.msra.mxu0 0
    %2127 = vmatpush.bf16.msra.mxu0 0
    %2128 = vmatpush.bf16.msra.mxu0 0
    %2129 = vmatpush.bf16.msra.mxu0 0
    %2130 = vmatpush.bf16.msra.mxu0 %v400
    %2131 = vmatpush.bf16.msra.mxu0 %v398
    %2132 = vmatpush.bf16.msra.mxu0 %v396
    %2133 = vmatpush.bf16.msra.mxu0 %v394
    %2134 = vmatmul.bf16.gmra.mxu0 %v2111
    %v2135 = vpop.f32.mrf.mxu0
    %v2136 = vadd.f32 0.0, %v2135
    %v2137 = vpop.f32.mrf.mxu0
    %2138 = vdwg.mxu0
    %v2139 = vadd.f32 %v2104, %v2123
    %v2140 = vadd.f32 %v2105, %v2136
    %v2141 = vxor.u32 %v2139, 2147483648
    %v2142 = vxor.u32 %v2140, 2147483648
    %v2143 = vmul.f32 %v2141, 1.442695
    %v2144 = vpow.pop %v2143
    %v2145 = vmul.f32 %v2142, 1.442695
    %v2146 = vpow.pop %v2145
    %v2147 = vadd.f32 %v2144, 1.0
    %v2148 = vadd.f32 %v2146, 1.0
    %v2149 = vrcp.pop %v2147
    %v2150 = vmul.f32 %v2147, %v2149
    %v2151 = vsub.f32 1.0, %v2150
    %v2152 = vmul.f32 %v2149, %v2151
    %v2153 = vadd.f32 %v2149, %v2152
    %vm2154 = vweird.f32 %v2147
    %vm2155 = vweird.f32 %v2149
    %vm2156 = vmor %vm2154, %vm2155
    %v2157 = vsel %vm2156, %v2149, %v2153
    %v2158 = vand.u32 2147483647, %v2147
    %vm2159 = vcmp.eq.f32.partialorder %v2158, 8.507059e+37
    %v2160 = vand.u32 %v2147, 2147483648
    %v2161 = vor.u32 1.1754944e-38, %v2160
    %v2162 = vsel %vm2159, %v2161, %v2157
    %v2163 = vmul.f32 1.0, %v2162
    %v2164 = vrcp.pop %v2148
    %v2165 = vmul.f32 %v2148, %v2164
    %v2166 = vsub.f32 1.0, %v2165
    %v2167 = vmul.f32 %v2164, %v2166
    %v2168 = vadd.f32 %v2164, %v2167
    %vm2169 = vweird.f32 %v2148
    %vm2170 = vweird.f32 %v2164
    %vm2171 = vmor %vm2169, %vm2170
    %v2172 = vsel %vm2171, %v2164, %v2168
    %v2173 = vand.u32 2147483647, %v2148
    %vm2174 = vcmp.eq.f32.partialorder %v2173, 8.507059e+37
    %v2175 = vand.u32 %v2148, 2147483648
    %v2176 = vor.u32 1.1754944e-38, %v2175
    %v2177 = vsel %vm2174, %v2176, %v2172
    %v2178 = vmul.f32 1.0, %v2177
    %v2179 = vtanh.pop %v2140
    %v2180 = vmul.f32 %v2163, %v2101
    %v2181 = vmul.f32 %v2163, %v2179
    %2183 = vrot.lane.b32.xlu0 %v2181, 64
    %v2184 = vpop.permute.xlu0 %2183
    %v2186 = vadd.f32 %v2180, %v2184
    %v2187 = vtanh.pop %v2186
    %v2188 = vmul.f32 %v2178, %v2187
    %v2189 = vld [vmem:[#allocation2 + $0x150] sm:$0xff]
    %v2190 = vld [vmem:[#allocation2 + $0x158] sm:$0xff]
    %v2191 = vpack.c.bf16 %v2188, %v2188
    %2193 = vrot.lane.b32.xlu0 %v2191, 64
    %v2194 = vpop.permute.xlu0 %2193
    %v2196 = vsel %vm409, %v2194, 0
    %2198 = vmatpush.bf16.msra.mxu0 0
    %2199 = vmatpush.bf16.msra.mxu0 0
    %2200 = vmatpush.bf16.msra.mxu0 0
    %2201 = vmatpush.bf16.msra.mxu0 0
    %2202 = vmatpush.bf16.msra.mxu0 %v399
    %2203 = vmatpush.bf16.msra.mxu0 %v397
    %2204 = vmatpush.bf16.msra.mxu0 %v395
    %2205 = vmatpush.bf16.msra.mxu0 %v393
    %2206 = vmatmul.bf16.gmra.mxu0 %v2196
    %v2207 = vpop.f32.mrf.mxu0
    %v2208 = vadd.f32 0.0, %v2207
    %v2209 = vpop.f32.mrf.mxu0
    %2210 = vdwg.mxu0
    %2211 = vmatpush.bf16.msra.mxu0 0
    %2212 = vmatpush.bf16.msra.mxu0 0
    %2213 = vmatpush.bf16.msra.mxu0 0
    %2214 = vmatpush.bf16.msra.mxu0 0
    %2215 = vmatpush.bf16.msra.mxu0 %v400
    %2216 = vmatpush.bf16.msra.mxu0 %v398
    %2217 = vmatpush.bf16.msra.mxu0 %v396
    %2218 = vmatpush.bf16.msra.mxu0 %v394
    %2219 = vmatmul.bf16.gmra.mxu0 %v2196
    %v2220 = vpop.f32.mrf.mxu0
    %v2221 = vadd.f32 0.0, %v2220
    %v2222 = vpop.f32.mrf.mxu0
    %2223 = vdwg.mxu0
    %v2224 = vadd.f32 %v2189, %v2208
    %v2225 = vadd.f32 %v2190, %v2221
    %v2226 = vxor.u32 %v2224, 2147483648
    %v2227 = vxor.u32 %v2225, 2147483648
    %v2228 = vmul.f32 %v2226, 1.442695
    %v2229 = vpow.pop %v2228
    %v2230 = vmul.f32 %v2227, 1.442695
    %v2231 = vpow.pop %v2230
    %v2232 = vadd.f32 %v2229, 1.0
    %v2233 = vadd.f32 %v2231, 1.0
    %v2234 = vrcp.pop %v2232
    %v2235 = vmul.f32 %v2232, %v2234
    %v2236 = vsub.f32 1.0, %v2235
    %v2237 = vmul.f32 %v2234, %v2236
    %v2238 = vadd.f32 %v2234, %v2237
    %vm2239 = vweird.f32 %v2232
    %vm2240 = vweird.f32 %v2234
    %vm2241 = vmor %vm2239, %vm2240
    %v2242 = vsel %vm2241, %v2234, %v2238
    %v2243 = vand.u32 2147483647, %v2232
    %vm2244 = vcmp.eq.f32.partialorder %v2243, 8.507059e+37
    %v2245 = vand.u32 %v2232, 2147483648
    %v2246 = vor.u32 1.1754944e-38, %v2245
    %v2247 = vsel %vm2244, %v2246, %v2242
    %v2248 = vmul.f32 1.0, %v2247
    %v2249 = vrcp.pop %v2233
    %v2250 = vmul.f32 %v2233, %v2249
    %v2251 = vsub.f32 1.0, %v2250
    %v2252 = vmul.f32 %v2249, %v2251
    %v2253 = vadd.f32 %v2249, %v2252
    %vm2254 = vweird.f32 %v2233
    %vm2255 = vweird.f32 %v2249
    %vm2256 = vmor %vm2254, %vm2255
    %v2257 = vsel %vm2256, %v2249, %v2253
    %v2258 = vand.u32 2147483647, %v2233
    %vm2259 = vcmp.eq.f32.partialorder %v2258, 8.507059e+37
    %v2260 = vand.u32 %v2233, 2147483648
    %v2261 = vor.u32 1.1754944e-38, %v2260
    %v2262 = vsel %vm2259, %v2261, %v2257
    %v2263 = vmul.f32 1.0, %v2262
    %v2264 = vtanh.pop %v2225
    %v2265 = vmul.f32 %v2248, %v2186
    %v2266 = vmul.f32 %v2248, %v2264
    %2268 = vrot.lane.b32.xlu0 %v2266, 64
    %v2269 = vpop.permute.xlu0 %2268
    %v2271 = vadd.f32 %v2265, %v2269
    %v2272 = vtanh.pop %v2271
    %v2273 = vmul.f32 %v2263, %v2272
    %v2274 = vld [vmem:[#allocation2 + $0x160] sm:$0xff]
    %v2275 = vld [vmem:[#allocation2 + $0x168] sm:$0xff]
    %v2276 = vpack.c.bf16 %v2273, %v2273
    %2278 = vrot.lane.b32.xlu0 %v2276, 64
    %v2279 = vpop.permute.xlu0 %2278
    %v2281 = vsel %vm409, %v2279, 0
    %2283 = vmatpush.bf16.msra.mxu0 0
    %2284 = vmatpush.bf16.msra.mxu0 0
    %2285 = vmatpush.bf16.msra.mxu0 0
    %2286 = vmatpush.bf16.msra.mxu0 0
    %2287 = vmatpush.bf16.msra.mxu0 %v399
    %2288 = vmatpush.bf16.msra.mxu0 %v397
    %2289 = vmatpush.bf16.msra.mxu0 %v395
    %2290 = vmatpush.bf16.msra.mxu0 %v393
    %2291 = vmatmul.bf16.gmra.mxu0 %v2281
    %v2292 = vpop.f32.mrf.mxu0
    %v2293 = vadd.f32 0.0, %v2292
    %v2294 = vpop.f32.mrf.mxu0
    %2295 = vdwg.mxu0
    %2296 = vmatpush.bf16.msra.mxu0 0
    %2297 = vmatpush.bf16.msra.mxu0 0
    %2298 = vmatpush.bf16.msra.mxu0 0
    %2299 = vmatpush.bf16.msra.mxu0 0
    %2300 = vmatpush.bf16.msra.mxu0 %v400
    %2301 = vmatpush.bf16.msra.mxu0 %v398
    %2302 = vmatpush.bf16.msra.mxu0 %v396
    %2303 = vmatpush.bf16.msra.mxu0 %v394
    %2304 = vmatmul.bf16.gmra.mxu0 %v2281
    %v2305 = vpop.f32.mrf.mxu0
    %v2306 = vadd.f32 0.0, %v2305
    %v2307 = vpop.f32.mrf.mxu0
    %2308 = vdwg.mxu0
    %v2309 = vadd.f32 %v2274, %v2293
    %v2310 = vadd.f32 %v2275, %v2306
    %v2311 = vxor.u32 %v2309, 2147483648
    %v2312 = vxor.u32 %v2310, 2147483648
    %v2313 = vmul.f32 %v2311, 1.442695
    %v2314 = vpow.pop %v2313
    %v2315 = vmul.f32 %v2312, 1.442695
    %v2316 = vpow.pop %v2315
    %v2317 = vadd.f32 %v2314, 1.0
    %v2318 = vadd.f32 %v2316, 1.0
    %v2319 = vrcp.pop %v2317
    %v2320 = vmul.f32 %v2317, %v2319
    %v2321 = vsub.f32 1.0, %v2320
    %v2322 = vmul.f32 %v2319, %v2321
    %v2323 = vadd.f32 %v2319, %v2322
    %vm2324 = vweird.f32 %v2317
    %vm2325 = vweird.f32 %v2319
    %vm2326 = vmor %vm2324, %vm2325
    %v2327 = vsel %vm2326, %v2319, %v2323
    %v2328 = vand.u32 2147483647, %v2317
    %vm2329 = vcmp.eq.f32.partialorder %v2328, 8.507059e+37
    %v2330 = vand.u32 %v2317, 2147483648
    %v2331 = vor.u32 1.1754944e-38, %v2330
    %v2332 = vsel %vm2329, %v2331, %v2327
    %v2333 = vmul.f32 1.0, %v2332
    %v2334 = vrcp.pop %v2318
    %v2335 = vmul.f32 %v2318, %v2334
    %v2336 = vsub.f32 1.0, %v2335
    %v2337 = vmul.f32 %v2334, %v2336
    %v2338 = vadd.f32 %v2334, %v2337
    %vm2339 = vweird.f32 %v2318
    %vm2340 = vweird.f32 %v2334
    %vm2341 = vmor %vm2339, %vm2340
    %v2342 = vsel %vm2341, %v2334, %v2338
    %v2343 = vand.u32 2147483647, %v2318
    %vm2344 = vcmp.eq.f32.partialorder %v2343, 8.507059e+37
    %v2345 = vand.u32 %v2318, 2147483648
    %v2346 = vor.u32 1.1754944e-38, %v2345
    %v2347 = vsel %vm2344, %v2346, %v2342
    %v2348 = vmul.f32 1.0, %v2347
    %v2349 = vtanh.pop %v2310
    %v2350 = vmul.f32 %v2333, %v2271
    %v2351 = vmul.f32 %v2333, %v2349
    %2353 = vrot.lane.b32.xlu0 %v2351, 64
    %v2354 = vpop.permute.xlu0 %2353
    %v2356 = vadd.f32 %v2350, %v2354
    %v2357 = vtanh.pop %v2356
    %v2358 = vmul.f32 %v2348, %v2357
    %v2359 = vld [vmem:[#allocation2 + $0x170] sm:$0xff]
    %v2360 = vld [vmem:[#allocation2 + $0x178] sm:$0xff]
    %v2361 = vpack.c.bf16 %v2358, %v2358
    %2363 = vrot.lane.b32.xlu0 %v2361, 64
    %v2364 = vpop.permute.xlu0 %2363
    %v2366 = vsel %vm409, %v2364, 0
    %2368 = vmatpush.bf16.msra.mxu0 0
    %2369 = vmatpush.bf16.msra.mxu0 0
    %2370 = vmatpush.bf16.msra.mxu0 0
    %2371 = vmatpush.bf16.msra.mxu0 0
    %2372 = vmatpush.bf16.msra.mxu0 %v399
    %2373 = vmatpush.bf16.msra.mxu0 %v397
    %2374 = vmatpush.bf16.msra.mxu0 %v395
    %2375 = vmatpush.bf16.msra.mxu0 %v393
    %2376 = vmatmul.bf16.gmra.mxu0 %v2366
    %v2377 = vpop.f32.mrf.mxu0
    %v2378 = vadd.f32 0.0, %v2377
    %v2379 = vpop.f32.mrf.mxu0
    %2380 = vdwg.mxu0
    %2381 = vmatpush.bf16.msra.mxu0 0
    %2382 = vmatpush.bf16.msra.mxu0 0
    %2383 = vmatpush.bf16.msra.mxu0 0
    %2384 = vmatpush.bf16.msra.mxu0 0
    %2385 = vmatpush.bf16.msra.mxu0 %v400
    %2386 = vmatpush.bf16.msra.mxu0 %v398
    %2387 = vmatpush.bf16.msra.mxu0 %v396
    %2388 = vmatpush.bf16.msra.mxu0 %v394
    %2389 = vmatmul.bf16.gmra.mxu0 %v2366
    %v2390 = vpop.f32.mrf.mxu0
    %v2391 = vadd.f32 0.0, %v2390
    %v2392 = vpop.f32.mrf.mxu0
    %2393 = vdwg.mxu0
    %v2394 = vadd.f32 %v2359, %v2378
    %v2395 = vadd.f32 %v2360, %v2391
    %v2396 = vxor.u32 %v2394, 2147483648
    %v2397 = vxor.u32 %v2395, 2147483648
    %v2398 = vmul.f32 %v2396, 1.442695
    %v2399 = vpow.pop %v2398
    %v2400 = vmul.f32 %v2397, 1.442695
    %v2401 = vpow.pop %v2400
    %v2402 = vadd.f32 %v2399, 1.0
    %v2403 = vadd.f32 %v2401, 1.0
    %v2404 = vrcp.pop %v2402
    %v2405 = vmul.f32 %v2402, %v2404
    %v2406 = vsub.f32 1.0, %v2405
    %v2407 = vmul.f32 %v2404, %v2406
    %v2408 = vadd.f32 %v2404, %v2407
    %vm2409 = vweird.f32 %v2402
    %vm2410 = vweird.f32 %v2404
    %vm2411 = vmor %vm2409, %vm2410
    %v2412 = vsel %vm2411, %v2404, %v2408
    %v2413 = vand.u32 2147483647, %v2402
    %vm2414 = vcmp.eq.f32.partialorder %v2413, 8.507059e+37
    %v2415 = vand.u32 %v2402, 2147483648
    %v2416 = vor.u32 1.1754944e-38, %v2415
    %v2417 = vsel %vm2414, %v2416, %v2412
    %v2418 = vmul.f32 1.0, %v2417
    %v2419 = vrcp.pop %v2403
    %v2420 = vmul.f32 %v2403, %v2419
    %v2421 = vsub.f32 1.0, %v2420
    %v2422 = vmul.f32 %v2419, %v2421
    %v2423 = vadd.f32 %v2419, %v2422
    %vm2424 = vweird.f32 %v2403
    %vm2425 = vweird.f32 %v2419
    %vm2426 = vmor %vm2424, %vm2425
    %v2427 = vsel %vm2426, %v2419, %v2423
    %v2428 = vand.u32 2147483647, %v2403
    %vm2429 = vcmp.eq.f32.partialorder %v2428, 8.507059e+37
    %v2430 = vand.u32 %v2403, 2147483648
    %v2431 = vor.u32 1.1754944e-38, %v2430
    %v2432 = vsel %vm2429, %v2431, %v2427
    %v2433 = vmul.f32 1.0, %v2432
    %v2434 = vtanh.pop %v2395
    %v2435 = vmul.f32 %v2418, %v2356
    %v2436 = vmul.f32 %v2418, %v2434
    %2438 = vrot.lane.b32.xlu0 %v2436, 64
    %v2439 = vpop.permute.xlu0 %2438
    %v2441 = vadd.f32 %v2435, %v2439
    %v2442 = vtanh.pop %v2441
    %v2443 = vmul.f32 %v2433, %v2442
    %v2444 = vld [vmem:[#allocation2 + $0x180] sm:$0xff]
    %v2445 = vld [vmem:[#allocation2 + $0x188] sm:$0xff]
    %v2446 = vpack.c.bf16 %v2443, %v2443
    %2448 = vrot.lane.b32.xlu0 %v2446, 64
    %v2449 = vpop.permute.xlu0 %2448
    %v2451 = vsel %vm409, %v2449, 0
    %2453 = vmatpush.bf16.msra.mxu0 0
    %2454 = vmatpush.bf16.msra.mxu0 0
    %2455 = vmatpush.bf16.msra.mxu0 0
    %2456 = vmatpush.bf16.msra.mxu0 0
    %2457 = vmatpush.bf16.msra.mxu0 %v399
    %2458 = vmatpush.bf16.msra.mxu0 %v397
    %2459 = vmatpush.bf16.msra.mxu0 %v395
    %2460 = vmatpush.bf16.msra.mxu0 %v393
    %2461 = vmatmul.bf16.gmra.mxu0 %v2451
    %v2462 = vpop.f32.mrf.mxu0
    %v2463 = vadd.f32 0.0, %v2462
    %v2464 = vpop.f32.mrf.mxu0
    %2465 = vdwg.mxu0
    %2466 = vmatpush.bf16.msra.mxu0 0
    %2467 = vmatpush.bf16.msra.mxu0 0
    %2468 = vmatpush.bf16.msra.mxu0 0
    %2469 = vmatpush.bf16.msra.mxu0 0
    %2470 = vmatpush.bf16.msra.mxu0 %v400
    %2471 = vmatpush.bf16.msra.mxu0 %v398
    %2472 = vmatpush.bf16.msra.mxu0 %v396
    %2473 = vmatpush.bf16.msra.mxu0 %v394
    %2474 = vmatmul.bf16.gmra.mxu0 %v2451
    %v2475 = vpop.f32.mrf.mxu0
    %v2476 = vadd.f32 0.0, %v2475
    %v2477 = vpop.f32.mrf.mxu0
    %2478 = vdwg.mxu0
    %v2479 = vadd.f32 %v2444, %v2463
    %v2480 = vadd.f32 %v2445, %v2476
    %v2481 = vxor.u32 %v2479, 2147483648
    %v2482 = vxor.u32 %v2480, 2147483648
    %v2483 = vmul.f32 %v2481, 1.442695
    %v2484 = vpow.pop %v2483
    %v2485 = vmul.f32 %v2482, 1.442695
    %v2486 = vpow.pop %v2485
    %v2487 = vadd.f32 %v2484, 1.0
    %v2488 = vadd.f32 %v2486, 1.0
    %v2489 = vrcp.pop %v2487
    %v2490 = vmul.f32 %v2487, %v2489
    %v2491 = vsub.f32 1.0, %v2490
    %v2492 = vmul.f32 %v2489, %v2491
    %v2493 = vadd.f32 %v2489, %v2492
    %vm2494 = vweird.f32 %v2487
    %vm2495 = vweird.f32 %v2489
    %vm2496 = vmor %vm2494, %vm2495
    %v2497 = vsel %vm2496, %v2489, %v2493
    %v2498 = vand.u32 2147483647, %v2487
    %vm2499 = vcmp.eq.f32.partialorder %v2498, 8.507059e+37
    %v2500 = vand.u32 %v2487, 2147483648
    %v2501 = vor.u32 1.1754944e-38, %v2500
    %v2502 = vsel %vm2499, %v2501, %v2497
    %v2503 = vmul.f32 1.0, %v2502
    %v2504 = vrcp.pop %v2488
    %v2505 = vmul.f32 %v2488, %v2504
    %v2506 = vsub.f32 1.0, %v2505
    %v2507 = vmul.f32 %v2504, %v2506
    %v2508 = vadd.f32 %v2504, %v2507
    %vm2509 = vweird.f32 %v2488
    %vm2510 = vweird.f32 %v2504
    %vm2511 = vmor %vm2509, %vm2510
    %v2512 = vsel %vm2511, %v2504, %v2508
    %v2513 = vand.u32 2147483647, %v2488
    %vm2514 = vcmp.eq.f32.partialorder %v2513, 8.507059e+37
    %v2515 = vand.u32 %v2488, 2147483648
    %v2516 = vor.u32 1.1754944e-38, %v2515
    %v2517 = vsel %vm2514, %v2516, %v2512
    %v2518 = vmul.f32 1.0, %v2517
    %v2519 = vtanh.pop %v2480
    %v2520 = vmul.f32 %v2503, %v2441
    %v2521 = vmul.f32 %v2503, %v2519
    %2523 = vrot.lane.b32.xlu0 %v2521, 64
    %v2524 = vpop.permute.xlu0 %2523
    %v2526 = vadd.f32 %v2520, %v2524
    %v2527 = vtanh.pop %v2526
    %v2528 = vmul.f32 %v2518, %v2527
    %v2529 = vld [vmem:[#allocation2 + $0x190] sm:$0xff]
    %v2530 = vld [vmem:[#allocation2 + $0x198] sm:$0xff]
    %v2531 = vpack.c.bf16 %v2528, %v2528
    %2533 = vrot.lane.b32.xlu0 %v2531, 64
    %v2534 = vpop.permute.xlu0 %2533
    %v2536 = vsel %vm409, %v2534, 0
    %2538 = vmatpush.bf16.msra.mxu0 0
    %2539 = vmatpush.bf16.msra.mxu0 0
    %2540 = vmatpush.bf16.msra.mxu0 0
    %2541 = vmatpush.bf16.msra.mxu0 0
    %2542 = vmatpush.bf16.msra.mxu0 %v399
    %2543 = vmatpush.bf16.msra.mxu0 %v397
    %2544 = vmatpush.bf16.msra.mxu0 %v395
    %2545 = vmatpush.bf16.msra.mxu0 %v393
    %2546 = vmatmul.bf16.gmra.mxu0 %v2536
    %v2547 = vpop.f32.mrf.mxu0
    %v2548 = vadd.f32 0.0, %v2547
    %v2549 = vpop.f32.mrf.mxu0
    %2550 = vdwg.mxu0
    %2551 = vmatpush.bf16.msra.mxu0 0
    %2552 = vmatpush.bf16.msra.mxu0 0
    %2553 = vmatpush.bf16.msra.mxu0 0
    %2554 = vmatpush.bf16.msra.mxu0 0
    %2555 = vmatpush.bf16.msra.mxu0 %v400
    %2556 = vmatpush.bf16.msra.mxu0 %v398
    %2557 = vmatpush.bf16.msra.mxu0 %v396
    %2558 = vmatpush.bf16.msra.mxu0 %v394
    %2559 = vmatmul.bf16.gmra.mxu0 %v2536
    %v2560 = vpop.f32.mrf.mxu0
    %v2561 = vadd.f32 0.0, %v2560
    %v2562 = vpop.f32.mrf.mxu0
    %2563 = vdwg.mxu0
    %v2564 = vadd.f32 %v2529, %v2548
    %v2565 = vadd.f32 %v2530, %v2561
    %v2566 = vxor.u32 %v2564, 2147483648
    %v2567 = vxor.u32 %v2565, 2147483648
    %v2568 = vmul.f32 %v2566, 1.442695
    %v2569 = vpow.pop %v2568
    %v2570 = vmul.f32 %v2567, 1.442695
    %v2571 = vpow.pop %v2570
    %v2572 = vadd.f32 %v2569, 1.0
    %v2573 = vadd.f32 %v2571, 1.0
    %v2574 = vrcp.pop %v2572
    %v2575 = vmul.f32 %v2572, %v2574
    %v2576 = vsub.f32 1.0, %v2575
    %v2577 = vmul.f32 %v2574, %v2576
    %v2578 = vadd.f32 %v2574, %v2577
    %vm2579 = vweird.f32 %v2572
    %vm2580 = vweird.f32 %v2574
    %vm2581 = vmor %vm2579, %vm2580
    %v2582 = vsel %vm2581, %v2574, %v2578
    %v2583 = vand.u32 2147483647, %v2572
    %vm2584 = vcmp.eq.f32.partialorder %v2583, 8.507059e+37
    %v2585 = vand.u32 %v2572, 2147483648
    %v2586 = vor.u32 1.1754944e-38, %v2585
    %v2587 = vsel %vm2584, %v2586, %v2582
    %v2588 = vmul.f32 1.0, %v2587
    %v2589 = vrcp.pop %v2573
    %v2590 = vmul.f32 %v2573, %v2589
    %v2591 = vsub.f32 1.0, %v2590
    %v2592 = vmul.f32 %v2589, %v2591
    %v2593 = vadd.f32 %v2589, %v2592
    %vm2594 = vweird.f32 %v2573
    %vm2595 = vweird.f32 %v2589
    %vm2596 = vmor %vm2594, %vm2595
    %v2597 = vsel %vm2596, %v2589, %v2593
    %v2598 = vand.u32 2147483647, %v2573
    %vm2599 = vcmp.eq.f32.partialorder %v2598, 8.507059e+37
    %v2600 = vand.u32 %v2573, 2147483648
    %v2601 = vor.u32 1.1754944e-38, %v2600
    %v2602 = vsel %vm2599, %v2601, %v2597
    %v2603 = vmul.f32 1.0, %v2602
    %v2604 = vtanh.pop %v2565
    %v2605 = vmul.f32 %v2588, %v2526
    %v2606 = vmul.f32 %v2588, %v2604
    %2608 = vrot.lane.b32.xlu0 %v2606, 64
    %v2609 = vpop.permute.xlu0 %2608
    %v2611 = vadd.f32 %v2605, %v2609
    %v2612 = vtanh.pop %v2611
    %v2613 = vmul.f32 %v2603, %v2612
    %v2614 = vld [vmem:[#allocation2 + $0x1a0] sm:$0xff]
    %v2615 = vld [vmem:[#allocation2 + $0x1a8] sm:$0xff]
    %v2616 = vpack.c.bf16 %v2613, %v2613
    %2618 = vrot.lane.b32.xlu0 %v2616, 64
    %v2619 = vpop.permute.xlu0 %2618
    %v2621 = vsel %vm409, %v2619, 0
    %2623 = vmatpush.bf16.msra.mxu0 0
    %2624 = vmatpush.bf16.msra.mxu0 0
    %2625 = vmatpush.bf16.msra.mxu0 0
    %2626 = vmatpush.bf16.msra.mxu0 0
    %2627 = vmatpush.bf16.msra.mxu0 %v399
    %2628 = vmatpush.bf16.msra.mxu0 %v397
    %2629 = vmatpush.bf16.msra.mxu0 %v395
    %2630 = vmatpush.bf16.msra.mxu0 %v393
    %2631 = vmatmul.bf16.gmra.mxu0 %v2621
    %v2632 = vpop.f32.mrf.mxu0
    %v2633 = vadd.f32 0.0, %v2632
    %v2634 = vpop.f32.mrf.mxu0
    %2635 = vdwg.mxu0
    %2636 = vmatpush.bf16.msra.mxu0 0
    %2637 = vmatpush.bf16.msra.mxu0 0
    %2638 = vmatpush.bf16.msra.mxu0 0
    %2639 = vmatpush.bf16.msra.mxu0 0
    %2640 = vmatpush.bf16.msra.mxu0 %v400
    %2641 = vmatpush.bf16.msra.mxu0 %v398
    %2642 = vmatpush.bf16.msra.mxu0 %v396
    %2643 = vmatpush.bf16.msra.mxu0 %v394
    %2644 = vmatmul.bf16.gmra.mxu0 %v2621
    %v2645 = vpop.f32.mrf.mxu0
    %v2646 = vadd.f32 0.0, %v2645
    %v2647 = vpop.f32.mrf.mxu0
    %2648 = vdwg.mxu0
    %v2649 = vadd.f32 %v2614, %v2633
    %v2650 = vadd.f32 %v2615, %v2646
    %v2651 = vxor.u32 %v2649, 2147483648
    %v2652 = vxor.u32 %v2650, 2147483648
    %v2653 = vmul.f32 %v2651, 1.442695
    %v2654 = vpow.pop %v2653
    %v2655 = vmul.f32 %v2652, 1.442695
    %v2656 = vpow.pop %v2655
    %v2657 = vadd.f32 %v2654, 1.0
    %v2658 = vadd.f32 %v2656, 1.0
    %v2659 = vrcp.pop %v2657
    %v2660 = vmul.f32 %v2657, %v2659
    %v2661 = vsub.f32 1.0, %v2660
    %v2662 = vmul.f32 %v2659, %v2661
    %v2663 = vadd.f32 %v2659, %v2662
    %vm2664 = vweird.f32 %v2657
    %vm2665 = vweird.f32 %v2659
    %vm2666 = vmor %vm2664, %vm2665
    %v2667 = vsel %vm2666, %v2659, %v2663
    %v2668 = vand.u32 2147483647, %v2657
    %vm2669 = vcmp.eq.f32.partialorder %v2668, 8.507059e+37
    %v2670 = vand.u32 %v2657, 2147483648
    %v2671 = vor.u32 1.1754944e-38, %v2670
    %v2672 = vsel %vm2669, %v2671, %v2667
    %v2673 = vmul.f32 1.0, %v2672
    %v2674 = vrcp.pop %v2658
    %v2675 = vmul.f32 %v2658, %v2674
    %v2676 = vsub.f32 1.0, %v2675
    %v2677 = vmul.f32 %v2674, %v2676
    %v2678 = vadd.f32 %v2674, %v2677
    %vm2679 = vweird.f32 %v2658
    %vm2680 = vweird.f32 %v2674
    %vm2681 = vmor %vm2679, %vm2680
    %v2682 = vsel %vm2681, %v2674, %v2678
    %v2683 = vand.u32 2147483647, %v2658
    %vm2684 = vcmp.eq.f32.partialorder %v2683, 8.507059e+37
    %v2685 = vand.u32 %v2658, 2147483648
    %v2686 = vor.u32 1.1754944e-38, %v2685
    %v2687 = vsel %vm2684, %v2686, %v2682
    %v2688 = vmul.f32 1.0, %v2687
    %v2689 = vtanh.pop %v2650
    %v2690 = vmul.f32 %v2673, %v2611
    %v2691 = vmul.f32 %v2673, %v2689
    %2693 = vrot.lane.b32.xlu0 %v2691, 64
    %v2694 = vpop.permute.xlu0 %2693
    %v2696 = vadd.f32 %v2690, %v2694
    %v2697 = vtanh.pop %v2696
    %v2698 = vmul.f32 %v2688, %v2697
    %v2699 = vld [vmem:[#allocation2 + $0x1b0] sm:$0xff]
    %v2700 = vld [vmem:[#allocation2 + $0x1b8] sm:$0xff]
    %v2701 = vpack.c.bf16 %v2698, %v2698
    %2703 = vrot.lane.b32.xlu0 %v2701, 64
    %v2704 = vpop.permute.xlu0 %2703
    %v2706 = vsel %vm409, %v2704, 0
    %2708 = vmatpush.bf16.msra.mxu0 0
    %2709 = vmatpush.bf16.msra.mxu0 0
    %2710 = vmatpush.bf16.msra.mxu0 0
    %2711 = vmatpush.bf16.msra.mxu0 0
    %2712 = vmatpush.bf16.msra.mxu0 %v399
    %2713 = vmatpush.bf16.msra.mxu0 %v397
    %2714 = vmatpush.bf16.msra.mxu0 %v395
    %2715 = vmatpush.bf16.msra.mxu0 %v393
    %2716 = vmatmul.bf16.gmra.mxu0 %v2706
    %v2717 = vpop.f32.mrf.mxu0
    %v2718 = vadd.f32 0.0, %v2717
    %v2719 = vpop.f32.mrf.mxu0
    %2720 = vdwg.mxu0
    %2721 = vmatpush.bf16.msra.mxu0 0
    %2722 = vmatpush.bf16.msra.mxu0 0
    %2723 = vmatpush.bf16.msra.mxu0 0
    %2724 = vmatpush.bf16.msra.mxu0 0
    %2725 = vmatpush.bf16.msra.mxu0 %v400
    %2726 = vmatpush.bf16.msra.mxu0 %v398
    %2727 = vmatpush.bf16.msra.mxu0 %v396
    %2728 = vmatpush.bf16.msra.mxu0 %v394
    %2729 = vmatmul.bf16.gmra.mxu0 %v2706
    %v2730 = vpop.f32.mrf.mxu0
    %v2731 = vadd.f32 0.0, %v2730
    %v2732 = vpop.f32.mrf.mxu0
    %2733 = vdwg.mxu0
    %v2734 = vadd.f32 %v2699, %v2718
    %v2735 = vadd.f32 %v2700, %v2731
    %v2736 = vxor.u32 %v2734, 2147483648
    %v2737 = vxor.u32 %v2735, 2147483648
    %v2738 = vmul.f32 %v2736, 1.442695
    %v2739 = vpow.pop %v2738
    %v2740 = vmul.f32 %v2737, 1.442695
    %v2741 = vpow.pop %v2740
    %v2742 = vadd.f32 %v2739, 1.0
    %v2743 = vadd.f32 %v2741, 1.0
    %v2744 = vrcp.pop %v2742
    %v2745 = vmul.f32 %v2742, %v2744
    %v2746 = vsub.f32 1.0, %v2745
    %v2747 = vmul.f32 %v2744, %v2746
    %v2748 = vadd.f32 %v2744, %v2747
    %vm2749 = vweird.f32 %v2742
    %vm2750 = vweird.f32 %v2744
    %vm2751 = vmor %vm2749, %vm2750
    %v2752 = vsel %vm2751, %v2744, %v2748
    %v2753 = vand.u32 2147483647, %v2742
    %vm2754 = vcmp.eq.f32.partialorder %v2753, 8.507059e+37
    %v2755 = vand.u32 %v2742, 2147483648
    %v2756 = vor.u32 1.1754944e-38, %v2755
    %v2757 = vsel %vm2754, %v2756, %v2752
    %v2758 = vmul.f32 1.0, %v2757
    %v2759 = vrcp.pop %v2743
    %v2760 = vmul.f32 %v2743, %v2759
    %v2761 = vsub.f32 1.0, %v2760
    %v2762 = vmul.f32 %v2759, %v2761
    %v2763 = vadd.f32 %v2759, %v2762
    %vm2764 = vweird.f32 %v2743
    %vm2765 = vweird.f32 %v2759
    %vm2766 = vmor %vm2764, %vm2765
    %v2767 = vsel %vm2766, %v2759, %v2763
    %v2768 = vand.u32 2147483647, %v2743
    %vm2769 = vcmp.eq.f32.partialorder %v2768, 8.507059e+37
    %v2770 = vand.u32 %v2743, 2147483648
    %v2771 = vor.u32 1.1754944e-38, %v2770
    %v2772 = vsel %vm2769, %v2771, %v2767
    %v2773 = vmul.f32 1.0, %v2772
    %v2774 = vtanh.pop %v2735
    %v2775 = vmul.f32 %v2758, %v2696
    %v2776 = vmul.f32 %v2758, %v2774
    %2778 = vrot.lane.b32.xlu0 %v2776, 64
    %v2779 = vpop.permute.xlu0 %2778
    %v2781 = vadd.f32 %v2775, %v2779
    %v2782 = vtanh.pop %v2781
    %v2783 = vmul.f32 %v2773, %v2782
    %v2784 = vld [vmem:[%s4] sm:$0xff]
    %v2785 = vld [vmem:[%s4 + $0x8] sm:$0xff]
    %v2786 = vld [vmem:[%s4 + $0x10] sm:$0xff]
    %v2787 = vld [vmem:[%s4 + $0x18] sm:$0xff]
    %v2788 = vld [vmem:[%s4 + $0x20] sm:$0xff]
    %v2789 = vld [vmem:[%s4 + $0x28] sm:$0xff]
    %v2790 = vld [vmem:[%s4 + $0x30] sm:$0xff]
    %v2791 = vld [vmem:[%s4 + $0x38] sm:$0xff]
    %v2792 = vld [vmem:[%s5] sm:$0x1]
    %v2794 = vperm.slane %v2792, 0
    %2797 = vrot.lane.b32.xlu0 %v2783, 64
    %v2798 = vpop.permute.xlu0 %2797
    %v2799 = vsel %vm409, %v2798, 0
    %2801 = vmatpush.msra.mxu0 0.0
    %2802 = vmatpush.msra.mxu0 0.0
    %2803 = vmatpush.msra.mxu0 0.0
    %2804 = vmatpush.msra.mxu0 0.0
    %2805 = vmatpush.msra.mxu0 0.0
    %2806 = vmatpush.msra.mxu0 0.0
    %2807 = vmatpush.msra.mxu0 0.0
    %2808 = vmatpush.msra.mxu0 0.0
    %2809 = vmatpush.msra.mxu0 %v2791
    %2810 = vmatpush.msra.mxu0 %v2790
    %2811 = vmatpush.msra.mxu0 %v2789
    %2812 = vmatpush.msra.mxu0 %v2788
    %2813 = vmatpush.msra.mxu0 %v2787
    %2814 = vmatpush.msra.mxu0 %v2786
    %2815 = vmatpush.msra.mxu0 %v2785
    %2816 = vmatpush.msra.mxu0 %v2784
    %2817 = vmatmul.f32.gmra.mxu0 %v2799
    %v2818 = vpop.f32.mrf.mxu0
    %v2819 = vadd.f32 %v2794, %v2818
    %2820 = vdwg.mxu0
    %vm2821 = vcmask 80896
    %2822 = vst.msk [vmem:[#allocation3] sm:$0xff] %vm2821, %v2819
    // Predicated region
    $region26: #{tpu_custom_call.1} parent=1 // pred_check
      _
    $region27: #{tpu_custom_call.1} parent=1 // pred_check_branch
      %2824 = sbr.rel (0) target = $region29
    $region28: #{tpu_custom_call.1} parent=1 // pred_region
      %2826 = vsyncadd [#allocation4], 0
      %s2828 = sshll.u32 [#allocation3], 4
      %s2829 = int_to_ptr.vmem [resolvable:$true] %s2828
      %s2830 = sshll.u32 %s6, 4
      %s2831 = int_to_ptr.hbm [resolvable:$true] %s2830
      %2833 = dma.vmem_to_hbm [thread:$0]  %s2829, 128, %s2831, [#allocation4]
    $region29: #{tpu_custom_call.1} parent=1 // pred_fallthru
      _
    // Predicated region
    $region30: #{tpu_custom_call.1} parent=1 // pred_check
      _
    $region31: #{tpu_custom_call.1} parent=1 // pred_check_branch
      %2835 = sbr.rel (0) target = $region33
    $region32: #{tpu_custom_call.1} parent=1 // pred_region
      %2837 = dma.done [#allocation4], 128
    $region33: #{tpu_custom_call.1} parent=1 // pred_fallthru
      _
    %2838 = vsyncpa [#allocation4], 1

</llo_original>
